<compile_context>
chip_gen: v6e
topology: v6e:2x2x1
jax: 0.10.0
libtpu: 0.0.40
codegen_flags: <defaults>
</compile_context>

<pallas_src>
import math
import numpy as np
import jax
import jax.numpy as jnp
from jax.experimental import pallas as pl
from jax.experimental.pallas import tpu as pltpu


def tpconv_kernel(src_ref, dst_ref, sh_ref, ea_ref, node_ref,
                  w1_ref, b1_ref, w2_ref, b2_ref,
                  tsel_ref, sred_ref, gamma_ref, beta_ref,
                  out_ref):
    f32 = jnp.float32
    bf16 = jnp.bfloat16
    t = pl.program_id(0)
    nt = pl.num_programs(0)

    TE, S = sh_ref.shape            # edges per tile, sh width
    N, Opad = node_ref.shape        # nodes, lane-padded output width
    SOp = tsel_ref.shape[1]         # 128-aligned per-input-channel block width
    C = w2_ref.shape[1] // SOp      # input channels
    alpha = 1.0 / math.sqrt(C * S)  # e3nn path normalization (f32 scalar, exact)

    # ---- init the resident output block (sums in lanes [0:O], edge counts in last lane) ----
    @pl.when(t == 0)
    def _init():
        out_ref[...] = jnp.zeros_like(out_ref)

    # ---- fc MLP -> per-edge TP weights (bf16 operands on the MXU, f32 accumulation) ----
    h = jnp.maximum(
        jnp.dot(ea_ref[...], w1_ref[...], preferred_element_type=f32) + b1_ref[...], 0.0)
    w = jnp.dot(h.astype(bf16), w2_ref[...], preferred_element_type=f32) + b2_ref[...]  # (TE, C*SOp)

    # ---- gather node_attr[edge_dst] with a per-tile one-hot (bf16 MXU; exact 0/1) ----
    # TODO(synk): swap for a scalar-prefetch/DMA row gather when N is large.
    iota_n = jax.lax.broadcasted_iota(jnp.int32, (TE, N), 1)
    oh_dst = (iota_n == dst_ref[...]).astype(bf16)                        # (TE, N)
    x1 = jnp.dot(oh_dst, node_ref[...], preferred_element_type=f32)       # (TE, Opad) f32

    # ---- scalar-irreps tensor product: lane-aligned w blocks, pairwise-tree reduction ----
    blocks = [w[:, i * SOp:(i + 1) * SOp] * x1[:, i:i + 1] for i in range(C)]
    while len(blocks) > 1:
        nxt = [blocks[k] + blocks[k + 1] for k in range(0, len(blocks) - 1, 2)]
        if len(blocks) % 2:
            nxt.append(blocks[-1])
        blocks = nxt
    acc_so = blocks[0]                                                    # (TE, SOp) f32

    sh_rep = jnp.dot(sh_ref[...], tsel_ref[...], preferred_element_type=f32)   # (TE, SOp)
    q = acc_so * sh_rep                                                   # f32 on the VPU
    tp = jnp.dot(q.astype(bf16), sred_ref[...],
                 preferred_element_type=f32) * alpha                      # (TE, Opad)

    # fused edge-count lane (last lane) for the 'mean' reduction; exact 1.0 in bf16
    lane = jax.lax.broadcasted_iota(jnp.int32, tp.shape, 1)
    tp = jnp.where(lane == Opad - 1, 1.0, tp)

    # ---- scatter-add over edge_src directly into the resident output block ----
    oh_src = (iota_n == src_ref[...]).astype(bf16)                        # (TE, N)
    out_ref[...] += jax.lax.dot_general(
        oh_src, tp.astype(bf16), (((0,), (0,)), ((), ())),
        preferred_element_type=f32)                                       # (N, Opad)

    # ---- finalize: mean, residual (pre-padded node), e3nn BatchNorm (batch stats) ----
    @pl.when(t == nt - 1)
    def _finalize():
        acc = out_ref[...]
        counts = acc[:, Opad - 1:Opad]                                    # (N, 1)
        inv = pl.reciprocal(jnp.maximum(counts, 1.0), approx=False)
        out = acc * inv + node_ref[...].astype(f32)                       # (N, Opad)
        mu = jnp.mean(out, axis=0, keepdims=True)
        cen = out - mu
        var = jnp.mean(cen * cen, axis=0, keepdims=True)
        out_ref[...] = cen * jax.lax.rsqrt(var + 1e-5) * gamma_ref[...] + beta_ref[...]


def tensor_product_conv(node_attr, edge_index, edge_attr, edge_sh, params, *,
                        edge_tile=256, vmem_limit_bytes=48 * 1024 * 1024):
    N, C = node_attr.shape
    E, S = edge_sh.shape
    Fe = edge_attr.shape[1]
    O = params["gamma"].shape[-1]
    SO = S * O
    SOp = ((SO + 127) // 128) * 128                  # lane-aligned per-input-channel block
    Opad = ((O + 127) // 128) * 128                  # lane-dense output width
    if Opad == O:                                    # need one spare lane for the counts
        Opad += 128   # TODO(synk): use a separate count stripe instead of widening here.

    edge_tile = max(16, ((edge_tile + 15) // 16) * 16)

    # --- pad edges to a multiple of the edge tile; padded edges use src/dst = -1 so their
    #     one-hot rows are all zero and they contribute nothing to sums or counts ---
    Ep = ((E + edge_tile - 1) // edge_tile) * edge_tile
    pe = Ep - E
    src = edge_index[0].astype(jnp.int32).reshape(E, 1)
    dst = edge_index[1].astype(jnp.int32).reshape(E, 1)
    if pe:
        edge_attr = jnp.pad(edge_attr, ((0, pe), (0, 0)))
        edge_sh = jnp.pad(edge_sh, ((0, pe), (0, 0)))
        src = jnp.pad(src, ((0, pe), (0, 0)), constant_values=-1)
        dst = jnp.pad(dst, ((0, pe), (0, 0)), constant_values=-1)

    # resident node table in bf16 (gather operand + residual; error well inside BN tolerance)
    node_pad = jnp.pad(node_attr, ((0, 0), (0, Opad - C))).astype(jnp.bfloat16)
    gamma = jnp.pad(params["gamma"].reshape(1, O).astype(jnp.float32), ((0, 0), (0, Opad - O)))
    beta = jnp.pad(params["beta"].reshape(1, O).astype(jnp.float32), ((0, 0), (0, Opad - O)))

    # fc weights: re-lay W2/b2 so each of the C per-input-channel blocks has width SOp
    # (128-aligned -> every in-kernel slice is a lane-tile view, no relayout copies)
    W1 = params["W1"].astype(jnp.bfloat16)
    b1 = params["b1"].astype(jnp.float32)
    W2 = jnp.pad(params["W2"].reshape(-1, C, SO),
                 ((0, 0), (0, 0), (0, SOp - SO))).reshape(-1, C * SOp).astype(jnp.bfloat16)
    b2 = jnp.pad(params["b2"].reshape(1, C, SO),
                 ((0, 0), (0, 0), (0, SOp - SO))).reshape(1, C * SOp).astype(jnp.float32)

    edge_attr = edge_attr.astype(jnp.bfloat16)
    edge_sh = edge_sh.astype(jnp.bfloat16)

    # --- tiny structural constants (exact 0/1 -> exact in bf16; alpha applied in-kernel) ---
    TselS = np.zeros((S, SOp), np.float32)          # sh replication: TselS[j, j*O+o] = 1
    SredS = np.zeros((SOp, Opad), np.float32)       # o-grouped reduction over j
    for j in range(S):
        TselS[j, j * O:(j + 1) * O] = 1.0
        SredS[j * O:(j + 1) * O, 0:O] = np.eye(O, dtype=np.float32)
    TselS = jnp.asarray(TselS, jnp.bfloat16)
    SredS = jnp.asarray(SredS, jnp.bfloat16)

    num_tiles = Ep // edge_tile

    out = pl.pallas_call(
        tpconv_kernel,
        out_shape=jax.ShapeDtypeStruct((N, Opad), jnp.float32),
        grid=(num_tiles,),
        in_specs=[
            pl.BlockSpec((edge_tile, 1), lambda t: (t, 0)),    # src
            pl.BlockSpec((edge_tile, 1), lambda t: (t, 0)),    # dst
            pl.BlockSpec((edge_tile, S), lambda t: (t, 0)),    # edge_sh
            pl.BlockSpec((edge_tile, Fe), lambda t: (t, 0)),   # edge_attr
            pl.BlockSpec((N, Opad), lambda t: (0, 0)),         # node_pad (resident, bf16)
            pl.BlockSpec(W1.shape, lambda t: (0, 0)),
            pl.BlockSpec(b1.shape, lambda t: (0, 0)),
            pl.BlockSpec(W2.shape, lambda t: (0, 0)),
            pl.BlockSpec(b2.shape, lambda t: (0, 0)),
            pl.BlockSpec(TselS.shape, lambda t: (0, 0)),
            pl.BlockSpec(SredS.shape, lambda t: (0, 0)),
            pl.BlockSpec((1, Opad), lambda t: (0, 0)),         # gamma
            pl.BlockSpec((1, Opad), lambda t: (0, 0)),         # beta
        ],
        out_specs=pl.BlockSpec((N, Opad), lambda t: (0, 0)),   # resident accumulator + output
        compiler_params=pltpu.CompilerParams(
            dimension_semantics=("arbitrary",),
            vmem_limit_bytes=vmem_limit_bytes),                # ~48 MiB: safe on v7x; raise on v5e/v6e
    )(src, dst, edge_sh, edge_attr, node_pad,
      W1, b1, W2, b2, TselS, SredS, gamma, beta)
    return out[:, :O]


def init_params(key, C, S, O, nef, hid):
    Wnum = C * S * O                                 # tp.weight_numel
    k1, k2, k3, k4 = jax.random.split(key, 4)
    lim1 = 1.0 / math.sqrt(nef)
    lim2 = 1.0 / math.sqrt(hid)
    W1 = jax.random.uniform(k1, (nef, hid), jnp.float32, -lim1, lim1)
    b1 = jax.random.uniform(k2, (1, hid), jnp.float32, -lim1, lim1)
    W2 = jax.random.uniform(k3, (hid, Wnum), jnp.float32, -lim2, lim2)
    b2 = jax.random.uniform(k4, (1, Wnum), jnp.float32, -lim2, lim2)
    gamma = jnp.ones((1, O), jnp.float32)            # e3nn BatchNorm affine init
    beta = jnp.zeros((1, O), jnp.float32)
    return dict(W1=W1, b1=b1, W2=W2, b2=b2, gamma=gamma, beta=beta)


def reference(node_attr, edge_index, edge_attr, edge_sh, params, C, S, O):
    # Pure-JAX reference mirroring the PyTorch forward (scalar irreps).
    src, dst = edge_index[0], edge_index[1]
    E = edge_sh.shape[0]
    N = node_attr.shape[0]
    h = jnp.maximum(edge_attr @ params["W1"] + params["b1"], 0.0)
    w = (h @ params["W2"] + params["b2"]).reshape(E, C, S, O)
    alpha = 1.0 / math.sqrt(C * S)
    x1 = node_attr[dst]
    tp = alpha * jnp.einsum("eijo,ei,ej->eo", w, x1, edge_sh)
    sums = jnp.zeros((N, O), jnp.float32).at[src].add(tp)
    counts = jnp.zeros((N,), jnp.float32).at[src].add(1.0)
    out = sums / jnp.maximum(counts, 1.0)[:, None]
    out = out + jnp.pad(node_attr, ((0, 0), (0, O - C)))
    mu = out.mean(0, keepdims=True)
    cen = out - mu
    var = (cen ** 2).mean(0, keepdims=True)
    return cen * jax.lax.rsqrt(var + 1e-5) * params["gamma"] + params["beta"]


if __name__ == "__main__":
    # Small, forward-consistent shapes:
    C, S, O = 16, 4, 32          # in_irreps "16x0e", sh_irreps "4x0e", out_irreps "32x0e"
    NEF, HID = 16, 16            # n_edge_features, hidden_features (default = n_edge_features)
    N, E = 8, 300                # nodes, edges (edge_tile=128 -> 3 grid steps exercise accumulation)

    key = jax.random.PRNGKey(0)
    kp, kn, ke, ks, ki = jax.random.split(key, 5)
    params = init_params(kp, C, S, O, NEF, HID)
    node_attr = jax.random.normal(kn, (N, C), jnp.float32)
    edge_attr = jax.random.normal(ke, (E, NEF), jnp.float32)
    edge_sh = jax.random.normal(ks, (E, S), jnp.float32)
    edge_index = jax.random.randint(ki, (2, E), 0, N, dtype=jnp.int32)

    out = jax.block_until_ready(
        tensor_product_conv(node_attr, edge_index, edge_attr, edge_sh, params, edge_tile=128))
    ref = jax.block_until_ready(
        reference(node_attr, edge_index, edge_attr, edge_sh, params, C, S, O))
    np.testing.assert_allclose(np.asarray(out), np.asarray(ref), rtol=2e-2, atol=2e-2)
    print("KERNEL_OK")
</pallas_src>

<mosaic_0001>
module attributes {stable_mosaic.version = 11 : i64} {
  func.func @tpconv_kernel(%arg0: i32, %arg1: memref<128x1xi32, #tpu.memory_space<vmem>>, %arg2: memref<128x1xi32, #tpu.memory_space<vmem>>, %arg3: memref<128x4xbf16, #tpu.memory_space<vmem>>, %arg4: memref<128x16xbf16, #tpu.memory_space<vmem>>, %arg5: memref<8x128xbf16, #tpu.memory_space<vmem>>, %arg6: memref<16x16xbf16, #tpu.memory_space<vmem>>, %arg7: memref<1x16xf32, #tpu.memory_space<vmem>>, %arg8: memref<16x2048xbf16, #tpu.memory_space<vmem>>, %arg9: memref<1x2048xf32, #tpu.memory_space<vmem>>, %arg10: memref<4x128xbf16, #tpu.memory_space<vmem>>, %arg11: memref<128x128xbf16, #tpu.memory_space<vmem>>, %arg12: memref<1x128xf32, #tpu.memory_space<vmem>>, %arg13: memref<1x128xf32, #tpu.memory_space<vmem>>, %arg14: memref<8x128xf32, #tpu.memory_space<vmem>>) attributes {dimension_semantics = [#tpu.dimension_semantics<arbitrary>], iteration_bounds = array<i64: 3>, scalar_prefetch = 0 : i64, scratch_operands = 0 : i64, tpu.core_type = #tpu.core_type<tc>, window_params = [{transform_indices = @transform_0, window_bounds = array<i64: 128, 1>}, {transform_indices = @transform_1, window_bounds = array<i64: 128, 1>}, {transform_indices = @transform_2, window_bounds = array<i64: 128, 4>}, {transform_indices = @transform_3, window_bounds = array<i64: 128, 16>}, {pipeline_mode = #tpu.pipeline_mode<synchronous>, transform_indices = @transform_4, window_bounds = array<i64: 8, 128>}, {pipeline_mode = #tpu.pipeline_mode<synchronous>, transform_indices = @transform_5, window_bounds = array<i64: 16, 16>}, {pipeline_mode = #tpu.pipeline_mode<synchronous>, transform_indices = @transform_6, window_bounds = array<i64: 1, 16>}, {pipeline_mode = #tpu.pipeline_mode<synchronous>, transform_indices = @transform_7, window_bounds = array<i64: 16, 2048>}, {pipeline_mode = #tpu.pipeline_mode<synchronous>, transform_indices = @transform_8, window_bounds = array<i64: 1, 2048>}, {pipeline_mode = #tpu.pipeline_mode<synchronous>, transform_indices = @transform_9, window_bounds = array<i64: 4, 128>}, {pipeline_mode = #tpu.pipeline_mode<synchronous>, transform_indices = @transform_10, window_bounds = array<i64: 128, 128>}, {pipeline_mode = #tpu.pipeline_mode<synchronous>, transform_indices = @transform_11, window_bounds = array<i64: 1, 128>}, {pipeline_mode = #tpu.pipeline_mode<synchronous>, transform_indices = @transform_12, window_bounds = array<i64: 1, 128>}, {pipeline_mode = #tpu.pipeline_mode<synchronous>, transform_indices = @transform_13, window_bounds = array<i64: 8, 128>}]} {
    %c0_i32 = arith.constant 0 : i32
    %0 = arith.cmpi eq, %arg0, %c0_i32 : i32
    %1 = arith.extui %0 : i1 to i32
    %c0_i32_0 = arith.constant 0 : i32
    %2 = arith.cmpi ne, %1, %c0_i32_0 : i32
    scf.if %2 {
      %cst_35 = arith.constant 0.000000e+00 : f32
      %133 = vector.broadcast %cst_35 : f32 to vector<8x128xf32>
      %c0_36 = arith.constant 0 : index
      %c0_37 = arith.constant 0 : index
      %134 = vector.load %arg14[%c0_36, %c0_37] : memref<8x128xf32, #tpu.memory_space<vmem>>, vector<8x128xf32>
      tpu.vector_store %arg14[%c0_36, %c0_37], %133 {strides = array<i32>} : memref<8x128xf32, #tpu.memory_space<vmem>>, vector<8x128xf32>,
    } else {
    }
    %c0 = arith.constant 0 : index
    %c0_1 = arith.constant 0 : index
    %3 = vector.load %arg4[%c0, %c0_1] : memref<128x16xbf16, #tpu.memory_space<vmem>>, vector<128x16xbf16>
    %c0_2 = arith.constant 0 : index
    %c0_3 = arith.constant 0 : index
    %4 = vector.load %arg6[%c0_2, %c0_3] : memref<16x16xbf16, #tpu.memory_space<vmem>>, vector<16x16xbf16>
    %cst = arith.constant dense<0.000000e+00> : vector<128x16xf32>
    %5 = tpu.matmul %3, %4, %cst {dimension_numbers = #tpu.dot_dimension_numbers<[1], [0], [0], [1], [0, 0, 1, 1], [], []>} : vector<128x16xbf16>, vector<16x16xbf16>, vector<128x16xf32> -> vector<128x16xf32>
    %c0_4 = arith.constant 0 : index
    %c0_5 = arith.constant 0 : index
    %6 = vector.load %arg7[%c0_4, %c0_5] : memref<1x16xf32, #tpu.memory_space<vmem>>, vector<1x16xf32>
    %7 = vector.broadcast %6 : vector<1x16xf32> to vector<128x16xf32>
    %8 = arith.addf %5, %7 : vector<128x16xf32>
    %cst_6 = arith.constant 0.000000e+00 : f32
    %9 = vector.broadcast %cst_6 : f32 to vector<128x16xf32>
    %10 = arith.maximumf %8, %9 : vector<128x16xf32>
    %11 = arith.truncf %10 : vector<128x16xf32> to vector<128x16xbf16>
    %c0_7 = arith.constant 0 : index
    %c0_8 = arith.constant 0 : index
    %12 = vector.load %arg8[%c0_7, %c0_8] : memref<16x2048xbf16, #tpu.memory_space<vmem>>, vector<16x2048xbf16>
    %cst_9 = arith.constant dense<0.000000e+00> : vector<128x2048xf32>
    %13 = tpu.matmul %11, %12, %cst_9 {dimension_numbers = #tpu.dot_dimension_numbers<[1], [0], [0], [1], [0, 0, 1, 1], [], []>} : vector<128x16xbf16>, vector<16x2048xbf16>, vector<128x2048xf32> -> vector<128x2048xf32>
    %c0_10 = arith.constant 0 : index
    %c0_11 = arith.constant 0 : index
    %14 = vector.load %arg9[%c0_10, %c0_11] : memref<1x2048xf32, #tpu.memory_space<vmem>>, vector<1x2048xf32>
    %15 = vector.broadcast %14 : vector<1x2048xf32> to vector<128x2048xf32>
    %16 = arith.addf %13, %15 : vector<128x2048xf32>
    %17 = tpu.iota {dimensions = array<i32: 1>} : vector<128x8xi32>
    %c0_12 = arith.constant 0 : index
    %c0_13 = arith.constant 0 : index
    %18 = vector.load %arg2[%c0_12, %c0_13] : memref<128x1xi32, #tpu.memory_space<vmem>>, vector<128x1xi32>
    %19 = vector.broadcast %18 : vector<128x1xi32> to vector<128x8xi32>
    %20 = arith.cmpi eq, %17, %19 : vector<128x8xi32>
    %21 = arith.extui %20 : vector<128x8xi1> to vector<128x8xi32>
    %22 = arith.sitofp %21 : vector<128x8xi32> to vector<128x8xf32>
    %23 = arith.truncf %22 : vector<128x8xf32> to vector<128x8xbf16>
    %c0_14 = arith.constant 0 : index
    %c0_15 = arith.constant 0 : index
    %24 = vector.load %arg5[%c0_14, %c0_15] : memref<8x128xbf16, #tpu.memory_space<vmem>>, vector<8x128xbf16>
    %cst_16 = arith.constant dense<0.000000e+00> : vector<128x128xf32>
    %25 = tpu.matmul %23, %24, %cst_16 {dimension_numbers = #tpu.dot_dimension_numbers<[1], [0], [0], [1], [0, 0, 1, 1], [], []>} : vector<128x8xbf16>, vector<8x128xbf16>, vector<128x128xf32> -> vector<128x128xf32>
    %26 = vector.extract_strided_slice %16 {offsets = [0, 0], sizes = [128, 128], strides = [1, 1]} : vector<128x2048xf32> to vector<128x128xf32>
    %27 = vector.extract_strided_slice %25 {offsets = [0, 0], sizes = [128, 1], strides = [1, 1]} : vector<128x128xf32> to vector<128x1xf32>
    %28 = vector.broadcast %27 : vector<128x1xf32> to vector<128x128xf32>
    %29 = arith.mulf %26, %28 : vector<128x128xf32>
    %30 = vector.extract_strided_slice %16 {offsets = [0, 128], sizes = [128, 128], strides = [1, 1]} : vector<128x2048xf32> to vector<128x128xf32>
    %31 = vector.extract_strided_slice %25 {offsets = [0, 1], sizes = [128, 1], strides = [1, 1]} : vector<128x128xf32> to vector<128x1xf32>
    %32 = vector.broadcast %31 : vector<128x1xf32> to vector<128x128xf32>
    %33 = arith.mulf %30, %32 : vector<128x128xf32>
    %34 = vector.extract_strided_slice %16 {offsets = [0, 256], sizes = [128, 128], strides = [1, 1]} : vector<128x2048xf32> to vector<128x128xf32>
    %35 = vector.extract_strided_slice %25 {offsets = [0, 2], sizes = [128, 1], strides = [1, 1]} : vector<128x128xf32> to vector<128x1xf32>
    %36 = vector.broadcast %35 : vector<128x1xf32> to vector<128x128xf32>
    %37 = arith.mulf %34, %36 : vector<128x128xf32>
    %38 = vector.extract_strided_slice %16 {offsets = [0, 384], sizes = [128, 128], strides = [1, 1]} : vector<128x2048xf32> to vector<128x128xf32>
    %39 = vector.extract_strided_slice %25 {offsets = [0, 3], sizes = [128, 1], strides = [1, 1]} : vector<128x128xf32> to vector<128x1xf32>
    %40 = vector.broadcast %39 : vector<128x1xf32> to vector<128x128xf32>
    %41 = arith.mulf %38, %40 : vector<128x128xf32>
    %42 = vector.extract_strided_slice %16 {offsets = [0, 512], sizes = [128, 128], strides = [1, 1]} : vector<128x2048xf32> to vector<128x128xf32>
    %43 = vector.extract_strided_slice %25 {offsets = [0, 4], sizes = [128, 1], strides = [1, 1]} : vector<128x128xf32> to vector<128x1xf32>
    %44 = vector.broadcast %43 : vector<128x1xf32> to vector<128x128xf32>
    %45 = arith.mulf %42, %44 : vector<128x128xf32>
    %46 = vector.extract_strided_slice %16 {offsets = [0, 640], sizes = [128, 128], strides = [1, 1]} : vector<128x2048xf32> to vector<128x128xf32>
    %47 = vector.extract_strided_slice %25 {offsets = [0, 5], sizes = [128, 1], strides = [1, 1]} : vector<128x128xf32> to vector<128x1xf32>
    %48 = vector.broadcast %47 : vector<128x1xf32> to vector<128x128xf32>
    %49 = arith.mulf %46, %48 : vector<128x128xf32>
    %50 = vector.extract_strided_slice %16 {offsets = [0, 768], sizes = [128, 128], strides = [1, 1]} : vector<128x2048xf32> to vector<128x128xf32>
    %51 = vector.extract_strided_slice %25 {offsets = [0, 6], sizes = [128, 1], strides = [1, 1]} : vector<128x128xf32> to vector<128x1xf32>
    %52 = vector.broadcast %51 : vector<128x1xf32> to vector<128x128xf32>
    %53 = arith.mulf %50, %52 : vector<128x128xf32>
    %54 = vector.extract_strided_slice %16 {offsets = [0, 896], sizes = [128, 128], strides = [1, 1]} : vector<128x2048xf32> to vector<128x128xf32>
    %55 = vector.extract_strided_slice %25 {offsets = [0, 7], sizes = [128, 1], strides = [1, 1]} : vector<128x128xf32> to vector<128x1xf32>
    %56 = vector.broadcast %55 : vector<128x1xf32> to vector<128x128xf32>
    %57 = arith.mulf %54, %56 : vector<128x128xf32>
    %58 = vector.extract_strided_slice %16 {offsets = [0, 1024], sizes = [128, 128], strides = [1, 1]} : vector<128x2048xf32> to vector<128x128xf32>
    %59 = vector.extract_strided_slice %25 {offsets = [0, 8], sizes = [128, 1], strides = [1, 1]} : vector<128x128xf32> to vector<128x1xf32>
    %60 = vector.broadcast %59 : vector<128x1xf32> to vector<128x128xf32>
    %61 = arith.mulf %58, %60 : vector<128x128xf32>
    %62 = vector.extract_strided_slice %16 {offsets = [0, 1152], sizes = [128, 128], strides = [1, 1]} : vector<128x2048xf32> to vector<128x128xf32>
    %63 = vector.extract_strided_slice %25 {offsets = [0, 9], sizes = [128, 1], strides = [1, 1]} : vector<128x128xf32> to vector<128x1xf32>
    %64 = vector.broadcast %63 : vector<128x1xf32> to vector<128x128xf32>
    %65 = arith.mulf %62, %64 : vector<128x128xf32>
    %66 = vector.extract_strided_slice %16 {offsets = [0, 1280], sizes = [128, 128], strides = [1, 1]} : vector<128x2048xf32> to vector<128x128xf32>
    %67 = vector.extract_strided_slice %25 {offsets = [0, 10], sizes = [128, 1], strides = [1, 1]} : vector<128x128xf32> to vector<128x1xf32>
    %68 = vector.broadcast %67 : vector<128x1xf32> to vector<128x128xf32>
    %69 = arith.mulf %66, %68 : vector<128x128xf32>
    %70 = vector.extract_strided_slice %16 {offsets = [0, 1408], sizes = [128, 128], strides = [1, 1]} : vector<128x2048xf32> to vector<128x128xf32>
    %71 = vector.extract_strided_slice %25 {offsets = [0, 11], sizes = [128, 1], strides = [1, 1]} : vector<128x128xf32> to vector<128x1xf32>
    %72 = vector.broadcast %71 : vector<128x1xf32> to vector<128x128xf32>
    %73 = arith.mulf %70, %72 : vector<128x128xf32>
    %74 = vector.extract_strided_slice %16 {offsets = [0, 1536], sizes = [128, 128], strides = [1, 1]} : vector<128x2048xf32> to vector<128x128xf32>
    %75 = vector.extract_strided_slice %25 {offsets = [0, 12], sizes = [128, 1], strides = [1, 1]} : vector<128x128xf32> to vector<128x1xf32>
    %76 = vector.broadcast %75 : vector<128x1xf32> to vector<128x128xf32>
    %77 = arith.mulf %74, %76 : vector<128x128xf32>
    %78 = vector.extract_strided_slice %16 {offsets = [0, 1664], sizes = [128, 128], strides = [1, 1]} : vector<128x2048xf32> to vector<128x128xf32>
    %79 = vector.extract_strided_slice %25 {offsets = [0, 13], sizes = [128, 1], strides = [1, 1]} : vector<128x128xf32> to vector<128x1xf32>
    %80 = vector.broadcast %79 : vector<128x1xf32> to vector<128x128xf32>
    %81 = arith.mulf %78, %80 : vector<128x128xf32>
    %82 = vector.extract_strided_slice %16 {offsets = [0, 1792], sizes = [128, 128], strides = [1, 1]} : vector<128x2048xf32> to vector<128x128xf32>
    %83 = vector.extract_strided_slice %25 {offsets = [0, 14], sizes = [128, 1], strides = [1, 1]} : vector<128x128xf32> to vector<128x1xf32>
    %84 = vector.broadcast %83 : vector<128x1xf32> to vector<128x128xf32>
    %85 = arith.mulf %82, %84 : vector<128x128xf32>
    %86 = vector.extract_strided_slice %16 {offsets = [0, 1920], sizes = [128, 128], strides = [1, 1]} : vector<128x2048xf32> to vector<128x128xf32>
    %87 = vector.extract_strided_slice %25 {offsets = [0, 15], sizes = [128, 1], strides = [1, 1]} : vector<128x128xf32> to vector<128x1xf32>
    %88 = vector.broadcast %87 : vector<128x1xf32> to vector<128x128xf32>
    %89 = arith.mulf %86, %88 : vector<128x128xf32>
    %90 = arith.addf %29, %33 : vector<128x128xf32>
    %91 = arith.addf %37, %41 : vector<128x128xf32>
    %92 = arith.addf %45, %49 : vector<128x128xf32>
    %93 = arith.addf %53, %57 : vector<128x128xf32>
    %94 = arith.addf %61, %65 : vector<128x128xf32>
    %95 = arith.addf %69, %73 : vector<128x128xf32>
    %96 = arith.addf %77, %81 : vector<128x128xf32>
    %97 = arith.addf %85, %89 : vector<128x128xf32>
    %98 = arith.addf %90, %91 : vector<128x128xf32>
    %99 = arith.addf %92, %93 : vector<128x128xf32>
    %100 = arith.addf %94, %95 : vector<128x128xf32>
    %101 = arith.addf %96, %97 : vector<128x128xf32>
    %102 = arith.addf %98, %99 : vector<128x128xf32>
    %103 = arith.addf %100, %101 : vector<128x128xf32>
    %104 = arith.addf %102, %103 : vector<128x128xf32>
    %c0_17 = arith.constant 0 : index
    %c0_18 = arith.constant 0 : index
    %105 = vector.load %arg3[%c0_17, %c0_18] : memref<128x4xbf16, #tpu.memory_space<vmem>>, vector<128x4xbf16>
    %c0_19 = arith.constant 0 : index
    %c0_20 = arith.constant 0 : index
    %106 = vector.load %arg10[%c0_19, %c0_20] : memref<4x128xbf16, #tpu.memory_space<vmem>>, vector<4x128xbf16>
    %cst_21 = arith.constant dense<0.000000e+00> : vector<128x128xf32>
    %107 = tpu.matmul %105, %106, %cst_21 {dimension_numbers = #tpu.dot_dimension_numbers<[1], [0], [0], [1], [0, 0, 1, 1], [], []>} : vector<128x4xbf16>, vector<4x128xbf16>, vector<128x128xf32> -> vector<128x128xf32>
    %108 = arith.mulf %104, %107 : vector<128x128xf32>
    %109 = arith.truncf %108 : vector<128x128xf32> to vector<128x128xbf16>
    %c0_22 = arith.constant 0 : index
    %c0_23 = arith.constant 0 : index
    %110 = vector.load %arg11[%c0_22, %c0_23] : memref<128x128xbf16, #tpu.memory_space<vmem>>, vector<128x128xbf16>
    %cst_24 = arith.constant dense<0.000000e+00> : vector<128x128xf32>
    %111 = tpu.matmul %109, %110, %cst_24 {dimension_numbers = #tpu.dot_dimension_numbers<[1], [0], [0], [1], [0, 0, 1, 1], [], []>} : vector<128x128xbf16>, vector<128x128xbf16>, vector<128x128xf32> -> vector<128x128xf32>
    %cst_25 = arith.constant 1.250000e-01 : f32
    %112 = vector.broadcast %cst_25 : f32 to vector<128x128xf32>
    %113 = arith.mulf %111, %112 : vector<128x128xf32>
    %114 = tpu.iota {dimensions = array<i32: 1>} : vector<128x128xi32>
    %c127_i32 = arith.constant 127 : i32
    %115 = vector.broadcast %c127_i32 : i32 to vector<128x128xi32>
    %116 = arith.cmpi eq, %114, %115 : vector<128x128xi32>
    %cst_26 = arith.constant 1.000000e+00 : f32
    %117 = vector.broadcast %cst_26 : f32 to vector<128x128xf32>
    %118 = arith.select %116, %117, %113 : vector<128x128xi1>, vector<128x128xf32>
    %c0_27 = arith.constant 0 : index
    %c0_28 = arith.constant 0 : index
    %119 = vector.load %arg1[%c0_27, %c0_28] : memref<128x1xi32, #tpu.memory_space<vmem>>, vector<128x1xi32>
    %120 = vector.broadcast %119 : vector<128x1xi32> to vector<128x8xi32>
    %121 = arith.cmpi eq, %17, %120 : vector<128x8xi32>
    %122 = arith.extui %121 : vector<128x8xi1> to vector<128x8xi32>
    %123 = arith.sitofp %122 : vector<128x8xi32> to vector<128x8xf32>
    %124 = arith.truncf %123 : vector<128x8xf32> to vector<128x8xbf16>
    %c0_29 = arith.constant 0 : index
    %c0_30 = arith.constant 0 : index
    %125 = vector.load %arg14[%c0_29, %c0_30] : memref<8x128xf32, #tpu.memory_space<vmem>>, vector<8x128xf32>
    %126 = arith.truncf %118 : vector<128x128xf32> to vector<128x128xbf16>
    %cst_31 = arith.constant dense<0.000000e+00> : vector<8x128xf32>
    %127 = tpu.matmul %124, %126, %cst_31 {dimension_numbers = #tpu.dot_dimension_numbers<[0], [0], [1], [1], [0, 1, 1, 1], [], []>} : vector<128x8xbf16>, vector<128x128xbf16>, vector<8x128xf32> -> vector<8x128xf32>
    %128 = arith.addf %125, %127 : vector<8x128xf32>
    %c0_32 = arith.constant 0 : index
    %c0_33 = arith.constant 0 : index
    %129 = vector.load %arg14[%c0_32, %c0_33] : memref<8x128xf32, #tpu.memory_space<vmem>>, vector<8x128xf32>
    tpu.vector_store %arg14[%c0_32, %c0_33], %128 {strides = array<i32>} : memref<8x128xf32, #tpu.memory_space<vmem>>, vector<8x128xf32>,
    %c2_i32 = arith.constant 2 : i32
    %130 = arith.cmpi eq, %arg0, %c2_i32 : i32
    %131 = arith.extui %130 : i1 to i32
    %c0_i32_34 = arith.constant 0 : i32
    %132 = arith.cmpi ne, %131, %c0_i32_34 : i32
    scf.if %132 {
      %c0_35 = arith.constant 0 : index
      %c0_36 = arith.constant 0 : index
      %133 = vector.load %arg14[%c0_35, %c0_36] : memref<8x128xf32, #tpu.memory_space<vmem>>, vector<8x128xf32>
      %134 = vector.extract_strided_slice %133 {offsets = [0, 127], sizes = [8, 1], strides = [1, 1]} : vector<8x128xf32> to vector<8x1xf32>
      %cst_37 = arith.constant 1.000000e+00 : f32
      %135 = vector.broadcast %cst_37 : f32 to vector<8x1xf32>
      %136 = arith.maximumf %134, %135 : vector<8x1xf32>
      %137 = tpu.reciprocal %136 : vector<8x1xf32> -> vector<8x1xf32>
      %138 = vector.broadcast %137 : vector<8x1xf32> to vector<8x128xf32>
      %139 = arith.mulf %133, %138 : vector<8x128xf32>
      %c0_38 = arith.constant 0 : index
      %c0_39 = arith.constant 0 : index
      %140 = vector.load %arg5[%c0_38, %c0_39] : memref<8x128xbf16, #tpu.memory_space<vmem>>, vector<8x128xbf16>
      %141 = arith.extf %140 : vector<8x128xbf16> to vector<8x128xf32>
      %142 = arith.addf %139, %141 : vector<8x128xf32>
      %cst_40 = arith.constant dense<0.000000e+00> : vector<128xf32>
      %143 = vector.multi_reduction <add>, %142, %cst_40 [0] : vector<8x128xf32> to vector<128xf32>
      %144 = vector.shape_cast %143 : vector<128xf32> to vector<1x128xf32>
      %cst_41 = arith.constant 8.000000e+00 : f32
      %145 = vector.broadcast %cst_41 : f32 to vector<1x128xf32>
      %146 = arith.divf %144, %145 : vector<1x128xf32>
      %147 = vector.broadcast %146 : vector<1x128xf32> to vector<8x128xf32>
      %148 = arith.subf %142, %147 : vector<8x128xf32>
      %149 = arith.mulf %148, %148 : vector<8x128xf32>
      %cst_42 = arith.constant dense<0.000000e+00> : vector<128xf32>
      %150 = vector.multi_reduction <add>, %149, %cst_42 [0] : vector<8x128xf32> to vector<128xf32>
      %151 = vector.shape_cast %150 : vector<128xf32> to vector<1x128xf32>
      %cst_43 = arith.constant 8.000000e+00 : f32
      %152 = vector.broadcast %cst_43 : f32 to vector<1x128xf32>
      %153 = arith.divf %151, %152 : vector<1x128xf32>
      %cst_44 = arith.constant 9.99999974E-6 : f32
      %154 = vector.broadcast %cst_44 : f32 to vector<1x128xf32>
      %155 = arith.addf %153, %154 : vector<1x128xf32>
      %156 = math.rsqrt %155 : vector<1x128xf32>
      %157 = vector.broadcast %156 : vector<1x128xf32> to vector<8x128xf32>
      %158 = arith.mulf %148, %157 : vector<8x128xf32>
      %c0_45 = arith.constant 0 : index
      %c0_46 = arith.constant 0 : index
      %159 = vector.load %arg12[%c0_45, %c0_46] : memref<1x128xf32, #tpu.memory_space<vmem>>, vector<1x128xf32>
      %160 = vector.broadcast %159 : vector<1x128xf32> to vector<8x128xf32>
      %161 = arith.mulf %158, %160 : vector<8x128xf32>
      %c0_47 = arith.constant 0 : index
      %c0_48 = arith.constant 0 : index
      %162 = vector.load %arg13[%c0_47, %c0_48] : memref<1x128xf32, #tpu.memory_space<vmem>>, vector<1x128xf32>
      %163 = vector.broadcast %162 : vector<1x128xf32> to vector<8x128xf32>
      %164 = arith.addf %161, %163 : vector<8x128xf32>
      %c0_49 = arith.constant 0 : index
      %c0_50 = arith.constant 0 : index
      %165 = vector.load %arg14[%c0_49, %c0_50] : memref<8x128xf32, #tpu.memory_space<vmem>>, vector<8x128xf32>
      tpu.vector_store %arg14[%c0_49, %c0_50], %164 {strides = array<i32>} : memref<8x128xf32, #tpu.memory_space<vmem>>, vector<8x128xf32>,
    } else {
    }
    return
  }
  func.func @transform_0(%arg0: i32) -> (i32, i32) {
    %c0_i32 = arith.constant 0 : i32
    %c0_i32_0 = arith.constant 0 : i32
    return %arg0, %c0_i32 : i32, i32
  }
  func.func @transform_1(%arg0: i32) -> (i32, i32) {
    %c0_i32 = arith.constant 0 : i32
    %c0_i32_0 = arith.constant 0 : i32
    return %arg0, %c0_i32 : i32, i32
  }
  func.func @transform_2(%arg0: i32) -> (i32, i32) {
    %c0_i32 = arith.constant 0 : i32
    %c0_i32_0 = arith.constant 0 : i32
    return %arg0, %c0_i32 : i32, i32
  }
  func.func @transform_3(%arg0: i32) -> (i32, i32) {
    %c0_i32 = arith.constant 0 : i32
    %c0_i32_0 = arith.constant 0 : i32
    return %arg0, %c0_i32 : i32, i32
  }
  func.func @transform_4(%arg0: i32) -> (i32, i32) {
    %c0_i32 = arith.constant 0 : i32
    %c0_i32_0 = arith.constant 0 : i32
    %c0_i32_1 = arith.constant 0 : i32
    return %c0_i32, %c0_i32_0 : i32, i32
  }
  func.func @transform_5(%arg0: i32) -> (i32, i32) {
    %c0_i32 = arith.constant 0 : i32
    %c0_i32_0 = arith.constant 0 : i32
    %c0_i32_1 = arith.constant 0 : i32
    return %c0_i32, %c0_i32_0 : i32, i32
  }
  func.func @transform_6(%arg0: i32) -> (i32, i32) {
    %c0_i32 = arith.constant 0 : i32
    %c0_i32_0 = arith.constant 0 : i32
    %c0_i32_1 = arith.constant 0 : i32
    return %c0_i32, %c0_i32_0 : i32, i32
  }
  func.func @transform_7(%arg0: i32) -> (i32, i32) {
    %c0_i32 = arith.constant 0 : i32
    %c0_i32_0 = arith.constant 0 : i32
    %c0_i32_1 = arith.constant 0 : i32
    return %c0_i32, %c0_i32_0 : i32, i32
  }
  func.func @transform_8(%arg0: i32) -> (i32, i32) {
    %c0_i32 = arith.constant 0 : i32
    %c0_i32_0 = arith.constant 0 : i32
    %c0_i32_1 = arith.constant 0 : i32
    return %c0_i32, %c0_i32_0 : i32, i32
  }
  func.func @transform_9(%arg0: i32) -> (i32, i32) {
    %c0_i32 = arith.constant 0 : i32
    %c0_i32_0 = arith.constant 0 : i32
    %c0_i32_1 = arith.constant 0 : i32
    return %c0_i32, %c0_i32_0 : i32, i32
  }
  func.func @transform_10(%arg0: i32) -> (i32, i32) {
    %c0_i32 = arith.constant 0 : i32
    %c0_i32_0 = arith.constant 0 : i32
    %c0_i32_1 = arith.constant 0 : i32
    return %c0_i32, %c0_i32_0 : i32, i32
  }
  func.func @transform_11(%arg0: i32) -> (i32, i32) {
    %c0_i32 = arith.constant 0 : i32
    %c0_i32_0 = arith.constant 0 : i32
    %c0_i32_1 = arith.constant 0 : i32
    return %c0_i32, %c0_i32_0 : i32, i32
  }
  func.func @transform_12(%arg0: i32) -> (i32, i32) {
    %c0_i32 = arith.constant 0 : i32
    %c0_i32_0 = arith.constant 0 : i32
    %c0_i32_1 = arith.constant 0 : i32
    return %c0_i32, %c0_i32_0 : i32, i32
  }
  func.func @transform_13(%arg0: i32) -> (i32, i32) {
    %c0_i32 = arith.constant 0 : i32
    %c0_i32_0 = arith.constant 0 : i32
    %c0_i32_1 = arith.constant 0 : i32
    return %c0_i32, %c0_i32_0 : i32, i32
  }
}

</mosaic_0001>

<llo_original>
// kernel: tpu_custom_call.1
$region0: #{tpu_custom_call.1}
  #allocation0 [shape = 'u32[]', space=smem, size = 0x4, offset = 0x4, fixed_abs, tag = 'smem constant byte address 0x4 - core index']
  #allocation1 [shape = 'u32[144,128]{1,0:T(1,128)}', space=vmem, size = 0x12000, scoped, tag = 'internal scratch']
  %s0 = inlined_call_operand.vmem [shape: s32[384,1], index: 0, kind: input, shape index: {}]
  %s1 = inlined_call_operand.vmem [shape: s32[384,1], index: 1, kind: input, shape index: {}]
  %s2 = inlined_call_operand.vmem [shape: bf16[384,4], index: 2, kind: input, shape index: {}]
  %s3 = inlined_call_operand.vmem [shape: bf16[384,16], index: 3, kind: input, shape index: {}]
  %s4 = inlined_call_operand.vmem [shape: bf16[8,128], index: 4, kind: input, shape index: {}]
  %s5 = inlined_call_operand.vmem [shape: bf16[16,16], index: 5, kind: input, shape index: {}]
  %s6 = inlined_call_operand.vmem [shape: f32[1,16], index: 6, kind: input, shape index: {}]
  %s7 = inlined_call_operand.vmem [shape: bf16[16,2048], index: 7, kind: input, shape index: {}]
  %s8 = inlined_call_operand.vmem [shape: f32[1,2048], index: 8, kind: input, shape index: {}]
  %s9 = inlined_call_operand.vmem [shape: bf16[4,128], index: 9, kind: input, shape index: {}]
  %s10 = inlined_call_operand.vmem [shape: bf16[128,128], index: 10, kind: input, shape index: {}]
  %s11 = inlined_call_operand.vmem [shape: f32[1,128], index: 11, kind: input, shape index: {}]
  %s12 = inlined_call_operand.vmem [shape: f32[1,128], index: 12, kind: input, shape index: {}]
  %s13 = inlined_call_operand.hbm [shape: f32[8,128], index: 13, kind: output, shape index: {}]
  %s14 = sld [smem:[#allocation0]]
  $region93: #{tpu_custom_call.1} parent=0
    _
  %s16 = ssub.s32 1, %s14
  %s17 = scalar_select 0, %s16, %s14
  $region1: #{tpu_custom_call.1} parent=0
    #allocation2 [shape = 'u8[4096]{0}', space=vmem, size = 0x1000, scoped, tag = 'output window, operand 0, single buffered']
    #allocation3 [shape = 's32[2]{0}', space=sflag, size = 0x8, scoped, tag = 'scoped memory for tpu_custom_call.1']
    %18 = vsyncpa [#allocation3], 0
    loop: start=0, step=1, limit=5
    $region2: #{tpu_custom_call.1} parent=1 // loop_pre_header
      _
    $region3: #{tpu_custom_call.1} parent=1 // loop_header
      %s20 = sphi 0, %s24
      %p21 = scmp.ge.s32.totalorder %s20, 5
      %s30 = sphi 0, %s32
      %s33 = sphi 0, %s30
      %s34 = sphi 0, %s33
      %s50 = sphi 0, %s34
      %s56 = sphi 0, %s58
      %s59 = sphi 0, %s56
      %s60 = sphi 0, %s59
      %s76 = sphi 0, %s60
      %s82 = sphi 0, %s84
      %s85 = sphi 0, %s82
      %s86 = sphi 0, %s85
      %s102 = sphi 0, %s86
      %s108 = sphi 0, %s110
      %s111 = sphi 0, %s108
      %s112 = sphi 0, %s111
      %s128 = sphi 0, %s112
      %s132 = sphi 0, %s132
      %s134 = sphi 0, %s132
      %s135 = sphi 0, %s134
      %s149 = sphi 0, %s135
      %s153 = sphi 0, %s153
      %s155 = sphi 0, %s153
      %s156 = sphi 0, %s155
      %s170 = sphi 0, %s156
      %s174 = sphi 0, %s174
      %s176 = sphi 0, %s174
      %s177 = sphi 0, %s176
      %s191 = sphi 0, %s177
      %s195 = sphi 0, %s195
      %s197 = sphi 0, %s195
      %s198 = sphi 0, %s197
      %s212 = sphi 0, %s198
      %s216 = sphi 0, %s216
      %s218 = sphi 0, %s216
      %s219 = sphi 0, %s218
      %s233 = sphi 0, %s219
      %s237 = sphi 0, %s237
      %s239 = sphi 0, %s237
      %s240 = sphi 0, %s239
      %s254 = sphi 0, %s240
      %s258 = sphi 0, %s258
      %s260 = sphi 0, %s258
      %s261 = sphi 0, %s260
      %s275 = sphi 0, %s261
      %s279 = sphi 0, %s279
      %s281 = sphi 0, %s279
      %s282 = sphi 0, %s281
      %s296 = sphi 0, %s282
      %s300 = sphi 0, %s300
      %s302 = sphi 0, %s300
      %s303 = sphi 0, %s302
      %s317 = sphi 0, %s303
      %s321 = sphi 0, %s321
      %s323 = sphi 0, %s321
      %s324 = sphi 0, %s323
      %s338 = sphi 0, %s324
    $region4: #{tpu_custom_call.1} parent=1 // loop_header_branch
      %23 = sbr.rel (%p21) target = $region8
    $region5: #{tpu_custom_call.1} parent=1 // loop_body
      %s25 = ssub.s32 %s20, 1
      %s26 = ssub.s32 %s20, 2
      %s27 = sadd.s32 %s20, 1
      %s28 = ssub.s32 %s20, %s27
      %p29 = scmp.eq.s32.totalorder %s28, 0
      %s31 = sadd.s32 %s30, 1
      %s32 = scalar_select %p29, %s30, %s31
      %p35 = pneg %p29
      %p36 = scmp.eq.s32.totalorder %s20, 2
      %p37 = por %p35, %p36
      %p38 = scmp.ne.s32.totalorder %s30, %s33
      %p39 = scmp.eq.s32.totalorder %s20, 0
      %p40 = por %p38, %p39
      %p41 = scmp.ne.s32.totalorder %s30, %s33
      %p42 = scmp.eq.s32.totalorder %s25, 2
      %p43 = por %p41, %p42
      %p44 = scmp.ne.s32.totalorder %s33, %s34
      %p45 = scmp.eq.s32.totalorder %s25, 0
      %p46 = por %p44, %p45
      %p47 = scmp.ne.s32.totalorder %s33, %s34
      %p48 = scmp.eq.s32.totalorder %s26, 2
      %p49 = por %p47, %p48
      %p51 = scmp.ne.s32.totalorder %s34, %s50
      %p52 = scmp.eq.s32.totalorder %s26, 0
      %p53 = por %p51, %p52
      %s54 = ssub.s32 %s20, %s27
      %p55 = scmp.eq.s32.totalorder %s54, 0
      %s57 = sadd.s32 %s56, 1
      %s58 = scalar_select %p55, %s56, %s57
      %p61 = pneg %p55
      %p62 = scmp.eq.s32.totalorder %s20, 2
      %p63 = por %p61, %p62
      %p64 = scmp.ne.s32.totalorder %s56, %s59
      %p65 = scmp.eq.s32.totalorder %s20, 0
      %p66 = por %p64, %p65
      %p67 = scmp.ne.s32.totalorder %s56, %s59
      %p68 = scmp.eq.s32.totalorder %s25, 2
      %p69 = por %p67, %p68
      %p70 = scmp.ne.s32.totalorder %s59, %s60
      %p71 = scmp.eq.s32.totalorder %s25, 0
      %p72 = por %p70, %p71
      %p73 = scmp.ne.s32.totalorder %s59, %s60
      %p74 = scmp.eq.s32.totalorder %s26, 2
      %p75 = por %p73, %p74
      %p77 = scmp.ne.s32.totalorder %s60, %s76
      %p78 = scmp.eq.s32.totalorder %s26, 0
      %p79 = por %p77, %p78
      %s80 = ssub.s32 %s20, %s27
      %p81 = scmp.eq.s32.totalorder %s80, 0
      %s83 = sadd.s32 %s82, 1
      %s84 = scalar_select %p81, %s82, %s83
      %p87 = pneg %p81
      %p88 = scmp.eq.s32.totalorder %s20, 2
      %p89 = por %p87, %p88
      %p90 = scmp.ne.s32.totalorder %s82, %s85
      %p91 = scmp.eq.s32.totalorder %s20, 0
      %p92 = por %p90, %p91
      %p93 = scmp.ne.s32.totalorder %s82, %s85
      %p94 = scmp.eq.s32.totalorder %s25, 2
      %p95 = por %p93, %p94
      %p96 = scmp.ne.s32.totalorder %s85, %s86
      %p97 = scmp.eq.s32.totalorder %s25, 0
      %p98 = por %p96, %p97
      %p99 = scmp.ne.s32.totalorder %s85, %s86
      %p100 = scmp.eq.s32.totalorder %s26, 2
      %p101 = por %p99, %p100
      %p103 = scmp.ne.s32.totalorder %s86, %s102
      %p104 = scmp.eq.s32.totalorder %s26, 0
      %p105 = por %p103, %p104
      %s106 = ssub.s32 %s20, %s27
      %p107 = scmp.eq.s32.totalorder %s106, 0
      %s109 = sadd.s32 %s108, 1
      %s110 = scalar_select %p107, %s108, %s109
      %p113 = pneg %p107
      %p114 = scmp.eq.s32.totalorder %s20, 2
      %p115 = por %p113, %p114
      %p116 = scmp.ne.s32.totalorder %s108, %s111
      %p117 = scmp.eq.s32.totalorder %s20, 0
      %p118 = por %p116, %p117
      %p119 = scmp.ne.s32.totalorder %s108, %s111
      %p120 = scmp.eq.s32.totalorder %s25, 2
      %p121 = por %p119, %p120
      %p122 = scmp.ne.s32.totalorder %s111, %s112
      %p123 = scmp.eq.s32.totalorder %s25, 0
      %p124 = por %p122, %p123
      %p125 = scmp.ne.s32.totalorder %s111, %s112
      %p126 = scmp.eq.s32.totalorder %s26, 2
      %p127 = por %p125, %p126
      %p129 = scmp.ne.s32.totalorder %s112, %s128
      %p130 = scmp.eq.s32.totalorder %s26, 0
      %p131 = por %p129, %p130
      %s133 = sadd.s32 %s132, 1
      %p136 = scmp.eq.s32.totalorder %s20, 2
      %p137 = scmp.ne.s32.totalorder %s132, %s134
      %p138 = scmp.eq.s32.totalorder %s20, 0
      %p139 = por %p137, %p138
      %p140 = scmp.ne.s32.totalorder %s132, %s134
      %p141 = scmp.eq.s32.totalorder %s25, 2
      %p142 = por %p140, %p141
      %p143 = scmp.ne.s32.totalorder %s134, %s135
      %p144 = scmp.eq.s32.totalorder %s25, 0
      %p145 = por %p143, %p144
      %p146 = scmp.ne.s32.totalorder %s134, %s135
      %p147 = scmp.eq.s32.totalorder %s26, 2
      %p148 = por %p146, %p147
      %p150 = scmp.ne.s32.totalorder %s135, %s149
      %p151 = scmp.eq.s32.totalorder %s26, 0
      %p152 = por %p150, %p151
      %s154 = sadd.s32 %s153, 1
      %p157 = scmp.eq.s32.totalorder %s20, 2
      %p158 = scmp.ne.s32.totalorder %s153, %s155
      %p159 = scmp.eq.s32.totalorder %s20, 0
      %p160 = por %p158, %p159
      %p161 = scmp.ne.s32.totalorder %s153, %s155
      %p162 = scmp.eq.s32.totalorder %s25, 2
      %p163 = por %p161, %p162
      %p164 = scmp.ne.s32.totalorder %s155, %s156
      %p165 = scmp.eq.s32.totalorder %s25, 0
      %p166 = por %p164, %p165
      %p167 = scmp.ne.s32.totalorder %s155, %s156
      %p168 = scmp.eq.s32.totalorder %s26, 2
      %p169 = por %p167, %p168
      %p171 = scmp.ne.s32.totalorder %s156, %s170
      %p172 = scmp.eq.s32.totalorder %s26, 0
      %p173 = por %p171, %p172
      %s175 = sadd.s32 %s174, 1
      %p178 = scmp.eq.s32.totalorder %s20, 2
      %p179 = scmp.ne.s32.totalorder %s174, %s176
      %p180 = scmp.eq.s32.totalorder %s20, 0
      %p181 = por %p179, %p180
      %p182 = scmp.ne.s32.totalorder %s174, %s176
      %p183 = scmp.eq.s32.totalorder %s25, 2
      %p184 = por %p182, %p183
      %p185 = scmp.ne.s32.totalorder %s176, %s177
      %p186 = scmp.eq.s32.totalorder %s25, 0
      %p187 = por %p185, %p186
      %p188 = scmp.ne.s32.totalorder %s176, %s177
      %p189 = scmp.eq.s32.totalorder %s26, 2
      %p190 = por %p188, %p189
      %p192 = scmp.ne.s32.totalorder %s177, %s191
      %p193 = scmp.eq.s32.totalorder %s26, 0
      %p194 = por %p192, %p193
      %s196 = sadd.s32 %s195, 1
      %p199 = scmp.eq.s32.totalorder %s20, 2
      %p200 = scmp.ne.s32.totalorder %s195, %s197
      %p201 = scmp.eq.s32.totalorder %s20, 0
      %p202 = por %p200, %p201
      %p203 = scmp.ne.s32.totalorder %s195, %s197
      %p204 = scmp.eq.s32.totalorder %s25, 2
      %p205 = por %p203, %p204
      %p206 = scmp.ne.s32.totalorder %s197, %s198
      %p207 = scmp.eq.s32.totalorder %s25, 0
      %p208 = por %p206, %p207
      %p209 = scmp.ne.s32.totalorder %s197, %s198
      %p210 = scmp.eq.s32.totalorder %s26, 2
      %p211 = por %p209, %p210
      %p213 = scmp.ne.s32.totalorder %s198, %s212
      %p214 = scmp.eq.s32.totalorder %s26, 0
      %p215 = por %p213, %p214
      %s217 = sadd.s32 %s216, 1
      %p220 = scmp.eq.s32.totalorder %s20, 2
      %p221 = scmp.ne.s32.totalorder %s216, %s218
      %p222 = scmp.eq.s32.totalorder %s20, 0
      %p223 = por %p221, %p222
      %p224 = scmp.ne.s32.totalorder %s216, %s218
      %p225 = scmp.eq.s32.totalorder %s25, 2
      %p226 = por %p224, %p225
      %p227 = scmp.ne.s32.totalorder %s218, %s219
      %p228 = scmp.eq.s32.totalorder %s25, 0
      %p229 = por %p227, %p228
      %p230 = scmp.ne.s32.totalorder %s218, %s219
      %p231 = scmp.eq.s32.totalorder %s26, 2
      %p232 = por %p230, %p231
      %p234 = scmp.ne.s32.totalorder %s219, %s233
      %p235 = scmp.eq.s32.totalorder %s26, 0
      %p236 = por %p234, %p235
      %s238 = sadd.s32 %s237, 1
      %p241 = scmp.eq.s32.totalorder %s20, 2
      %p242 = scmp.ne.s32.totalorder %s237, %s239
      %p243 = scmp.eq.s32.totalorder %s20, 0
      %p244 = por %p242, %p243
      %p245 = scmp.ne.s32.totalorder %s237, %s239
      %p246 = scmp.eq.s32.totalorder %s25, 2
      %p247 = por %p245, %p246
      %p248 = scmp.ne.s32.totalorder %s239, %s240
      %p249 = scmp.eq.s32.totalorder %s25, 0
      %p250 = por %p248, %p249
      %p251 = scmp.ne.s32.totalorder %s239, %s240
      %p252 = scmp.eq.s32.totalorder %s26, 2
      %p253 = por %p251, %p252
      %p255 = scmp.ne.s32.totalorder %s240, %s254
      %p256 = scmp.eq.s32.totalorder %s26, 0
      %p257 = por %p255, %p256
      %s259 = sadd.s32 %s258, 1
      %p262 = scmp.eq.s32.totalorder %s20, 2
      %p263 = scmp.ne.s32.totalorder %s258, %s260
      %p264 = scmp.eq.s32.totalorder %s20, 0
      %p265 = por %p263, %p264
      %p266 = scmp.ne.s32.totalorder %s258, %s260
      %p267 = scmp.eq.s32.totalorder %s25, 2
      %p268 = por %p266, %p267
      %p269 = scmp.ne.s32.totalorder %s260, %s261
      %p270 = scmp.eq.s32.totalorder %s25, 0
      %p271 = por %p269, %p270
      %p272 = scmp.ne.s32.totalorder %s260, %s261
      %p273 = scmp.eq.s32.totalorder %s26, 2
      %p274 = por %p272, %p273
      %p276 = scmp.ne.s32.totalorder %s261, %s275
      %p277 = scmp.eq.s32.totalorder %s26, 0
      %p278 = por %p276, %p277
      %s280 = sadd.s32 %s279, 1
      %p283 = scmp.eq.s32.totalorder %s20, 2
      %p284 = scmp.ne.s32.totalorder %s279, %s281
      %p285 = scmp.eq.s32.totalorder %s20, 0
      %p286 = por %p284, %p285
      %p287 = scmp.ne.s32.totalorder %s279, %s281
      %p288 = scmp.eq.s32.totalorder %s25, 2
      %p289 = por %p287, %p288
      %p290 = scmp.ne.s32.totalorder %s281, %s282
      %p291 = scmp.eq.s32.totalorder %s25, 0
      %p292 = por %p290, %p291
      %p293 = scmp.ne.s32.totalorder %s281, %s282
      %p294 = scmp.eq.s32.totalorder %s26, 2
      %p295 = por %p293, %p294
      %p297 = scmp.ne.s32.totalorder %s282, %s296
      %p298 = scmp.eq.s32.totalorder %s26, 0
      %p299 = por %p297, %p298
      %s301 = sadd.s32 %s300, 1
      %p304 = scmp.eq.s32.totalorder %s20, 2
      %p305 = scmp.ne.s32.totalorder %s300, %s302
      %p306 = scmp.eq.s32.totalorder %s20, 0
      %p307 = por %p305, %p306
      %p308 = scmp.ne.s32.totalorder %s300, %s302
      %p309 = scmp.eq.s32.totalorder %s25, 2
      %p310 = por %p308, %p309
      %p311 = scmp.ne.s32.totalorder %s302, %s303
      %p312 = scmp.eq.s32.totalorder %s25, 0
      %p313 = por %p311, %p312
      %p314 = scmp.ne.s32.totalorder %s302, %s303
      %p315 = scmp.eq.s32.totalorder %s26, 2
      %p316 = por %p314, %p315
      %p318 = scmp.ne.s32.totalorder %s303, %s317
      %p319 = scmp.eq.s32.totalorder %s26, 0
      %p320 = por %p318, %p319
      %s322 = sadd.s32 %s321, 1
      %p325 = scmp.eq.s32.totalorder %s20, 2
      %p326 = scmp.ne.s32.totalorder %s321, %s323
      %p327 = scmp.eq.s32.totalorder %s20, 0
      %p328 = por %p326, %p327
      %p329 = scmp.ne.s32.totalorder %s321, %s323
      %p330 = scmp.eq.s32.totalorder %s25, 2
      %p331 = por %p329, %p330
      %p332 = scmp.ne.s32.totalorder %s323, %s324
      %p333 = scmp.eq.s32.totalorder %s25, 0
      %p334 = por %p332, %p333
      %p335 = scmp.ne.s32.totalorder %s323, %s324
      %p336 = scmp.eq.s32.totalorder %s26, 2
      %p337 = por %p335, %p336
      %p339 = scmp.ne.s32.totalorder %s324, %s338
      %p340 = scmp.eq.s32.totalorder %s26, 0
      %p341 = por %p339, %p340
      %p342 = scmp.le.s32.totalorder 1, %s20
      %p343 = scmp.lt.s32.totalorder %s20, 4
      %p344 = pnand %p342, %p343
      %p345 = pneg %p344
      // Predicated region
      $region9: #{tpu_custom_call.1} parent=5 // pred_check
        _
      $region10: #{tpu_custom_call.1} parent=5 // pred_check_branch
        %347 = sbr.rel (%p344) target = $region12
      $region11: #{tpu_custom_call.1} parent=5 // pred_region
        %s348 = ssub.s32 %s20, 1
        // Predicated region
        $region13: #{tpu_custom_call.1} parent=11 // pred_check
          %p349 = pneg %p145
        $region14: #{tpu_custom_call.1} parent=11 // pred_check_branch
          %351 = sbr.rel (%p349) target = $region16
        $region15: #{tpu_custom_call.1} parent=11 // pred_region
          _
        $region16: #{tpu_custom_call.1} parent=11 // pred_fallthru
          _
        // Predicated region
        $region17: #{tpu_custom_call.1} parent=11 // pred_check
          %p352 = pneg %p166
        $region18: #{tpu_custom_call.1} parent=11 // pred_check_branch
          %354 = sbr.rel (%p352) target = $region20
        $region19: #{tpu_custom_call.1} parent=11 // pred_region
          _
        $region20: #{tpu_custom_call.1} parent=11 // pred_fallthru
          _
        // Predicated region
        $region21: #{tpu_custom_call.1} parent=11 // pred_check
          %p355 = pneg %p187
        $region22: #{tpu_custom_call.1} parent=11 // pred_check_branch
          %357 = sbr.rel (%p355) target = $region24
        $region23: #{tpu_custom_call.1} parent=11 // pred_region
          _
        $region24: #{tpu_custom_call.1} parent=11 // pred_fallthru
          _
        // Predicated region
        $region25: #{tpu_custom_call.1} parent=11 // pred_check
          %p358 = pneg %p208
        $region26: #{tpu_custom_call.1} parent=11 // pred_check_branch
          %360 = sbr.rel (%p358) target = $region28
        $region27: #{tpu_custom_call.1} parent=11 // pred_region
          _
        $region28: #{tpu_custom_call.1} parent=11 // pred_fallthru
          _
        // Predicated region
        $region29: #{tpu_custom_call.1} parent=11 // pred_check
          %p361 = pneg %p229
        $region30: #{tpu_custom_call.1} parent=11 // pred_check_branch
          %363 = sbr.rel (%p361) target = $region32
        $region31: #{tpu_custom_call.1} parent=11 // pred_region
          _
        $region32: #{tpu_custom_call.1} parent=11 // pred_fallthru
          _
        // Predicated region
        $region33: #{tpu_custom_call.1} parent=11 // pred_check
          %p364 = pneg %p250
        $region34: #{tpu_custom_call.1} parent=11 // pred_check_branch
          %366 = sbr.rel (%p364) target = $region36
        $region35: #{tpu_custom_call.1} parent=11 // pred_region
          _
        $region36: #{tpu_custom_call.1} parent=11 // pred_fallthru
          _
        // Predicated region
        $region37: #{tpu_custom_call.1} parent=11 // pred_check
          %p367 = pneg %p271
        $region38: #{tpu_custom_call.1} parent=11 // pred_check_branch
          %369 = sbr.rel (%p367) target = $region40
        $region39: #{tpu_custom_call.1} parent=11 // pred_region
          _
        $region40: #{tpu_custom_call.1} parent=11 // pred_fallthru
          _
        // Predicated region
        $region41: #{tpu_custom_call.1} parent=11 // pred_check
          %p370 = pneg %p292
        $region42: #{tpu_custom_call.1} parent=11 // pred_check_branch
          %372 = sbr.rel (%p370) target = $region44
        $region43: #{tpu_custom_call.1} parent=11 // pred_region
          _
        $region44: #{tpu_custom_call.1} parent=11 // pred_fallthru
          _
        // Predicated region
        $region45: #{tpu_custom_call.1} parent=11 // pred_check
          %p373 = pneg %p313
        $region46: #{tpu_custom_call.1} parent=11 // pred_check_branch
          %375 = sbr.rel (%p373) target = $region48
        $region47: #{tpu_custom_call.1} parent=11 // pred_region
          _
        $region48: #{tpu_custom_call.1} parent=11 // pred_fallthru
          _
      $region12: #{tpu_custom_call.1} parent=5 // pred_fallthru
        _
      %p376 = scmp.lt.s32.totalorder %s20, 3
      // Predicated region
      $region49: #{tpu_custom_call.1} parent=5 // pred_check
        %p377 = pneg %p376
      $region50: #{tpu_custom_call.1} parent=5 // pred_check_branch
        %379 = sbr.rel (%p377) target = $region52
      $region51: #{tpu_custom_call.1} parent=5 // pred_region
        // Predicated region
        $region53: #{tpu_custom_call.1} parent=51 // pred_check
          %p380 = pneg %p40
        $region54: #{tpu_custom_call.1} parent=51 // pred_check_branch
          %382 = sbr.rel (%p380) target = $region56
        $region55: #{tpu_custom_call.1} parent=51 // pred_region
          %s383 = smul.u32 16, %s20
          %p384 = scmp.lt.s32.totalorder %s383, 47
          %s385 = scalar_select %p384, %s383, 47
          %s386 = smul.addr %s385, 8
          %s387 = scalar_lea.vmem %s0, %s386
          %s388 = smul.u32 16, %s20
        $region56: #{tpu_custom_call.1} parent=51 // pred_fallthru
          _
        // Predicated region
        $region57: #{tpu_custom_call.1} parent=51 // pred_check
          %p389 = pneg %p66
        $region58: #{tpu_custom_call.1} parent=51 // pred_check_branch
          %391 = sbr.rel (%p389) target = $region60
        $region59: #{tpu_custom_call.1} parent=51 // pred_region
          %s392 = smul.u32 16, %s20
          %p393 = scmp.lt.s32.totalorder %s392, 47
          %s394 = scalar_select %p393, %s392, 47
          %s395 = smul.addr %s394, 8
          %s396 = scalar_lea.vmem %s1, %s395
          %s397 = smul.u32 16, %s20
        $region60: #{tpu_custom_call.1} parent=51 // pred_fallthru
          _
        // Predicated region
        $region61: #{tpu_custom_call.1} parent=51 // pred_check
          %p398 = pneg %p92
        $region62: #{tpu_custom_call.1} parent=51 // pred_check_branch
          %400 = sbr.rel (%p398) target = $region64
        $region63: #{tpu_custom_call.1} parent=51 // pred_region
          %s401 = smul.u32 16, %s20
          %p402 = scmp.lt.s32.totalorder %s401, 47
          %s403 = scalar_select %p402, %s401, 47
          %s404 = smul.addr %s403, 4
          %s405 = scalar_lea.vmem %s2, %s404
          %s406 = smul.u32 16, %s20
        $region64: #{tpu_custom_call.1} parent=51 // pred_fallthru
          _
        // Predicated region
        $region65: #{tpu_custom_call.1} parent=51 // pred_check
          %p407 = pneg %p118
        $region66: #{tpu_custom_call.1} parent=51 // pred_check_branch
          %409 = sbr.rel (%p407) target = $region68
        $region67: #{tpu_custom_call.1} parent=51 // pred_region
          %s410 = smul.u32 16, %s20
          %p411 = scmp.lt.s32.totalorder %s410, 47
          %s412 = scalar_select %p411, %s410, 47
          %s413 = smul.addr %s412, 4
          %s414 = scalar_lea.vmem %s3, %s413
          %s415 = smul.u32 16, %s20
        $region68: #{tpu_custom_call.1} parent=51 // pred_fallthru
          _
      $region52: #{tpu_custom_call.1} parent=5 // pred_fallthru
        _
      %p416 = scmp.le.s32.totalorder 1, %s20
      %p417 = scmp.lt.s32.totalorder %s20, 4
      %p418 = pnand %p416, %p417
      %p419 = pneg %p418
      // Predicated region
      $region69: #{tpu_custom_call.1} parent=5 // pred_check
        _
      $region70: #{tpu_custom_call.1} parent=5 // pred_check_branch
        %421 = sbr.rel (%p418) target = $region72
      $region71: #{tpu_custom_call.1} parent=5 // pred_region
        %s422 = ssub.s32 %s20, 1
        %s423 = smul.u32 16, %s25
        %p424 = scmp.lt.s32.totalorder %s423, 47
        %s425 = scalar_select %p424, %s423, 47
        %s426 = smul.addr %s425, 8
        %s427 = scalar_lea.vmem %s0, %s426
        %p428 = pneg %p46
        %p429 = pneg %p43
        %s430 = smul.u32 16, %s25
        %p431 = scmp.lt.s32.totalorder %s430, 47
        %s432 = scalar_select %p431, %s430, 47
        %s433 = smul.addr %s432, 8
        %s434 = scalar_lea.vmem %s1, %s433
        %p435 = pneg %p72
        %p436 = pneg %p69
        %s437 = smul.u32 16, %s25
        %p438 = scmp.lt.s32.totalorder %s437, 47
        %s439 = scalar_select %p438, %s437, 47
        %s440 = smul.addr %s439, 4
        %s441 = scalar_lea.vmem %s2, %s440
        %p442 = pneg %p98
        %p443 = pneg %p95
        %s444 = smul.u32 16, %s25
        %p445 = scmp.lt.s32.totalorder %s444, 47
        %s446 = scalar_select %p445, %s444, 47
        %s447 = smul.addr %s446, 4
        %s448 = scalar_lea.vmem %s3, %s447
        %p449 = pneg %p124
        %p450 = pneg %p121
        %p451 = pneg %p145
        %p452 = pneg %p142
        %p453 = pneg %p166
        %p454 = pneg %p163
        %p455 = pneg %p187
        %p456 = pneg %p184
        %p457 = pneg %p208
        %p458 = pneg %p205
        %p459 = pneg %p229
        %p460 = pneg %p226
        %p461 = pneg %p250
        %p462 = pneg %p247
        %p463 = pneg %p271
        %p464 = pneg %p268
        %p465 = pneg %p292
        %p466 = pneg %p289
        %p467 = pneg %p313
        %p468 = pneg %p310
        %p469 = pneg %p334
        %p470 = pneg %p331
        %s471 = smul.u32 16, %s25
        %p472 = scmp.lt.s32.totalorder %s471, 47
        %s473 = scalar_select %p472, %s471, 47
        %s474 = smul.addr %s473, 8
        %s475 = scalar_lea.vmem %s0, %s474
        %s476 = smul.u32 16, %s25
        %s477 = smul.u32 16, %s25
        %p478 = scmp.lt.s32.totalorder %s477, 47
        %s479 = scalar_select %p478, %s477, 47
        %s480 = smul.addr %s479, 8
        %s481 = scalar_lea.vmem %s1, %s480
        %s482 = smul.u32 16, %s25
        %s483 = smul.u32 16, %s25
        %p484 = scmp.lt.s32.totalorder %s483, 47
        %s485 = scalar_select %p484, %s483, 47
        %s486 = smul.addr %s485, 4
        %s487 = scalar_lea.vmem %s2, %s486
        %s488 = smul.u32 16, %s25
        %s489 = smul.u32 16, %s25
        %p490 = scmp.lt.s32.totalorder %s489, 47
        %s491 = scalar_select %p490, %s489, 47
        %s492 = smul.addr %s491, 4
        %s493 = scalar_lea.vmem %s3, %s492
        %s494 = smul.u32 16, %s25
        %p496 = scmp.eq.s32.totalorder %s25, 0
        // Predicated region
        $region73: #{tpu_custom_call.1} parent=71 // pred_check
          %p497 = pneg %p496
        $region74: #{tpu_custom_call.1} parent=71 // pred_check_branch
          %499 = sbr.rel (%p497) target = $region76
        $region75: #{tpu_custom_call.1} parent=71 // pred_region
          %500 = vst [vmem:[#allocation2] sm:$0xff] 0.0
        $region76: #{tpu_custom_call.1} parent=71 // pred_fallthru
          _
        %v501 = vld [vmem:[%s493] sm:$0xf]
        %v502 = vld [vmem:[%s493 + $0x4] sm:$0xf]
        %v503 = vld [vmem:[%s493 + $0x8] sm:$0xf]
        %v504 = vld [vmem:[%s493 + $0xc] sm:$0xf]
        %v505 = vld [vmem:[%s493 + $0x10] sm:$0xf]
        %v506 = vld [vmem:[%s493 + $0x14] sm:$0xf]
        %v507 = vld [vmem:[%s493 + $0x18] sm:$0xf]
        %v508 = vld [vmem:[%s493 + $0x1c] sm:$0xf]
        %v509 = vld [vmem:[%s493 + $0x20] sm:$0xf]
        %v510 = vld [vmem:[%s493 + $0x24] sm:$0xf]
        %v511 = vld [vmem:[%s493 + $0x28] sm:$0xf]
        %v512 = vld [vmem:[%s493 + $0x2c] sm:$0xf]
        %v513 = vld [vmem:[%s493 + $0x30] sm:$0xf]
        %v514 = vld [vmem:[%s493 + $0x34] sm:$0xf]
        %v515 = vld [vmem:[%s493 + $0x38] sm:$0xf]
        %v516 = vld [vmem:[%s493 + $0x3c] sm:$0xf]
        %v517 = vld [vmem:[%s5] sm:$0xf]
        %v518 = vld [vmem:[%s5 + $0x4] sm:$0xf]
        %v519 = vld [vmem:[%s6] sm:$0x1]
        %v521 = vlaneseq
        %v522 = vshrl.u32 %v521, 7
        %v523 = vsub.s32 0, %v522
        %v524 = vrot.slane %v519, %v523
        %v542 = vunpack.c.l.b16 %v501
        %v543 = vunpack.c.l.b16 %v502
        %v544 = vunpack.c.l.b16 %v503
        %v545 = vunpack.c.l.b16 %v504
        %v546 = vunpack.c.l.b16 %v505
        %v547 = vunpack.c.l.b16 %v506
        %v548 = vunpack.c.l.b16 %v507
        %v549 = vunpack.c.l.b16 %v508
        %v550 = vunpack.c.l.b16 %v509
        %v551 = vunpack.c.l.b16 %v510
        %v552 = vunpack.c.l.b16 %v511
        %v553 = vunpack.c.l.b16 %v512
        %v554 = vunpack.c.l.b16 %v513
        %v555 = vunpack.c.l.b16 %v514
        %v556 = vunpack.c.l.b16 %v515
        %v557 = vunpack.c.l.b16 %v516
        %v558 = vpack.c.b16 %v543, %v542
        %v559 = vpack.c.b16 %v545, %v544
        %v560 = vpack.c.b16 %v547, %v546
        %v561 = vpack.c.b16 %v549, %v548
        %v562 = vpack.c.b16 %v551, %v550
        %v563 = vpack.c.b16 %v553, %v552
        %v564 = vpack.c.b16 %v555, %v554
        %v565 = vpack.c.b16 %v557, %v556
        %v568 = vunpack.c.l.b16 %v517
        %v569 = vunpack.c.l.b16 %v518
        %v570 = vpack.c.b16 %v569, %v568
        %vm572 = vcmask 130048
        %v574 = vsel %vm572, %v558, 0
        %v577 = vsel %vm572, %v559, 0
        %v580 = vsel %vm572, %v560, 0
        %v583 = vsel %vm572, %v561, 0
        %v586 = vsel %vm572, %v562, 0
        %v589 = vsel %vm572, %v563, 0
        %v592 = vsel %vm572, %v564, 0
        %v595 = vsel %vm572, %v565, 0
        %597 = vmatprep.subr.bf16.mxu0 0
        %598 = vmatpush1.bf16.msra.mxu0 0
        %599 = vmatprep.subr.bf16.mxu0 0
        %600 = vmatpush1.bf16.msra.mxu0 0
        %601 = vmatprep.subr.bf16.mxu0 0
        %602 = vmatpush1.bf16.msra.mxu0 0
        %603 = vmatprep.subr.bf16.mxu0 0
        %604 = vmatpush1.bf16.msra.mxu0 0
        %605 = vmatprep.subr.bf16.mxu0 0
        %606 = vmatpush1.bf16.msra.mxu0 0
        %607 = vmatprep.subr.bf16.mxu0 0
        %608 = vmatpush1.bf16.msra.mxu0 0
        %609 = vmatprep.subr.bf16.mxu0 0
        %610 = vmatpush1.bf16.msra.mxu0 0
        %611 = vmatprep.subr.bf16.mxu0 0
        %612 = vmatpush1.bf16.msra.mxu0 %v570
        %613 = vmatprep.subr.bf16.mxu0 0
        %614 = vmatpush2.bf16.msra.mxu0 0
        %615 = vmatprep.subr.bf16.mxu0 0
        %616 = vmatpush2.bf16.msra.mxu0 0
        %617 = vmatprep.subr.bf16.mxu0 0
        %618 = vmatpush2.bf16.msra.mxu0 0
        %619 = vmatprep.subr.bf16.mxu0 0
        %620 = vmatpush2.bf16.msra.mxu0 0
        %621 = vmatprep.subr.bf16.mxu0 0
        %622 = vmatpush2.bf16.msra.mxu0 0
        %623 = vmatprep.subr.bf16.mxu0 0
        %624 = vmatpush2.bf16.msra.mxu0 0
        %625 = vmatprep.subr.bf16.mxu0 0
        %626 = vmatpush2.bf16.msra.mxu0 0
        %627 = vmatprep.subr.bf16.mxu0 0
        %628 = vmatpush2.bf16.msra.mxu0 0
        %629 = vmatprep.mubr.bf16.mxu0 0
        %630 = vmatmul.mubr.bf16.gmra.mxu0 %v574
        %v631 = vpop.f32.mrf.mxu0
        %v632 = vadd.f32 %v524, %v631
        %v633 = vpop.f32.mrf.mxu0
        %v634 = vpop.f32.mrf.mxu0
        %v635 = vadd.f32 %v524, %v634
        %v636 = vpop.f32.mrf.mxu0
        %637 = vmatprep.mubr.bf16.mxu0 0
        %638 = vmatmul.mubr.bf16.gmra.mxu0 %v577
        %v639 = vpop.f32.mrf.mxu0
        %v640 = vadd.f32 %v524, %v639
        %v641 = vpop.f32.mrf.mxu0
        %v642 = vpop.f32.mrf.mxu0
        %v643 = vadd.f32 %v524, %v642
        %v644 = vpop.f32.mrf.mxu0
        %645 = vmatprep.mubr.bf16.mxu0 0
        %646 = vmatmul.mubr.bf16.gmra.mxu0 %v580
        %v647 = vpop.f32.mrf.mxu0
        %v648 = vadd.f32 %v524, %v647
        %v649 = vpop.f32.mrf.mxu0
        %v650 = vpop.f32.mrf.mxu0
        %v651 = vadd.f32 %v524, %v650
        %v652 = vpop.f32.mrf.mxu0
        %653 = vmatprep.mubr.bf16.mxu0 0
        %654 = vmatmul.mubr.bf16.gmra.mxu0 %v583
        %v655 = vpop.f32.mrf.mxu0
        %v656 = vadd.f32 %v524, %v655
        %v657 = vpop.f32.mrf.mxu0
        %v658 = vpop.f32.mrf.mxu0
        %v659 = vadd.f32 %v524, %v658
        %v660 = vpop.f32.mrf.mxu0
        %661 = vmatprep.mubr.bf16.mxu0 0
        %662 = vmatmul.mubr.bf16.gmra.mxu0 %v586
        %v663 = vpop.f32.mrf.mxu0
        %v664 = vadd.f32 %v524, %v663
        %v665 = vpop.f32.mrf.mxu0
        %v666 = vpop.f32.mrf.mxu0
        %v667 = vadd.f32 %v524, %v666
        %v668 = vpop.f32.mrf.mxu0
        %669 = vmatprep.mubr.bf16.mxu0 0
        %670 = vmatmul.mubr.bf16.gmra.mxu0 %v589
        %v671 = vpop.f32.mrf.mxu0
        %v672 = vadd.f32 %v524, %v671
        %v673 = vpop.f32.mrf.mxu0
        %v674 = vpop.f32.mrf.mxu0
        %v675 = vadd.f32 %v524, %v674
        %v676 = vpop.f32.mrf.mxu0
        %677 = vmatprep.mubr.bf16.mxu0 0
        %678 = vmatmul.mubr.bf16.gmra.mxu0 %v592
        %v679 = vpop.f32.mrf.mxu0
        %v680 = vadd.f32 %v524, %v679
        %v681 = vpop.f32.mrf.mxu0
        %v682 = vpop.f32.mrf.mxu0
        %v683 = vadd.f32 %v524, %v682
        %v684 = vpop.f32.mrf.mxu0
        %685 = vmatprep.mubr.bf16.mxu0 0
        %686 = vmatmul.mubr.bf16.gmra.mxu0 %v595
        %v687 = vpop.f32.mrf.mxu0
        %v688 = vadd.f32 %v524, %v687
        %v689 = vpop.f32.mrf.mxu0
        %v690 = vpop.f32.mrf.mxu0
        %v691 = vadd.f32 %v524, %v690
        %v692 = vpop.f32.mrf.mxu0
        %693 = vdwg.mxu0
        %v694 = vmax.f32 %v632, 0.0
        %v695 = vmax.f32 %v635, 0.0
        %v696 = vmax.f32 %v640, 0.0
        %v697 = vmax.f32 %v643, 0.0
        %v698 = vmax.f32 %v648, 0.0
        %v699 = vmax.f32 %v651, 0.0
        %v700 = vmax.f32 %v656, 0.0
        %v701 = vmax.f32 %v659, 0.0
        %v702 = vmax.f32 %v664, 0.0
        %v703 = vmax.f32 %v667, 0.0
        %v704 = vmax.f32 %v672, 0.0
        %v705 = vmax.f32 %v675, 0.0
        %v706 = vmax.f32 %v680, 0.0
        %v707 = vmax.f32 %v683, 0.0
        %v708 = vmax.f32 %v688, 0.0
        %v709 = vmax.f32 %v691, 0.0
        %v710 = vpack.c.bf16 %v695, %v694
        %v711 = vpack.c.bf16 %v697, %v696
        %v712 = vpack.c.bf16 %v699, %v698
        %v713 = vpack.c.bf16 %v701, %v700
        %v714 = vpack.c.bf16 %v703, %v702
        %v715 = vpack.c.bf16 %v705, %v704
        %v716 = vpack.c.bf16 %v707, %v706
        %v717 = vpack.c.bf16 %v709, %v708
        %v718 = vld [vmem:[%s7] sm:$0xff]
        %v719 = vld [vmem:[%s7 + $0x8] sm:$0xff]
        %v720 = vld [vmem:[%s7 + $0x10] sm:$0xff]
        %v721 = vld [vmem:[%s7 + $0x18] sm:$0xff]
        %v722 = vld [vmem:[%s7 + $0x20] sm:$0xff]
        %v723 = vld [vmem:[%s7 + $0x28] sm:$0xff]
        %v724 = vld [vmem:[%s7 + $0x30] sm:$0xff]
        %v725 = vld [vmem:[%s7 + $0x38] sm:$0xff]
        %v726 = vld [vmem:[%s7 + $0x40] sm:$0xff]
        %v727 = vld [vmem:[%s7 + $0x48] sm:$0xff]
        %v728 = vld [vmem:[%s7 + $0x50] sm:$0xff]
        %v729 = vld [vmem:[%s7 + $0x58] sm:$0xff]
        %v730 = vld [vmem:[%s7 + $0x60] sm:$0xff]
        %v731 = vld [vmem:[%s7 + $0x68] sm:$0xff]
        %v732 = vld [vmem:[%s7 + $0x70] sm:$0xff]
        %v733 = vld [vmem:[%s7 + $0x78] sm:$0xff]
        %v734 = vld [vmem:[%s8] sm:$0xff]
        %v735 = vld [vmem:[%s8 + $0x8] sm:$0xff]
        %v738 = vlaneseq
        %v739 = vshrl.u32 %v738, 7
        %v740 = vsub.s32 0, %v739
        %v741 = vrot.slane %v734, %v740
        %v742 = vlaneseq
        %v743 = vshrl.u32 %v742, 7
        %v744 = vsub.s32 1, %v743
        %v745 = vrot.slane %v734, %v744
        %v746 = vlaneseq
        %v747 = vshrl.u32 %v746, 7
        %v748 = vsub.s32 2, %v747
        %v749 = vrot.slane %v734, %v748
        %v750 = vlaneseq
        %v751 = vshrl.u32 %v750, 7
        %v752 = vsub.s32 3, %v751
        %v753 = vrot.slane %v734, %v752
        %v754 = vlaneseq
        %v755 = vshrl.u32 %v754, 7
        %v756 = vsub.s32 4, %v755
        %v757 = vrot.slane %v734, %v756
        %v758 = vlaneseq
        %v759 = vshrl.u32 %v758, 7
        %v760 = vsub.s32 5, %v759
        %v761 = vrot.slane %v734, %v760
        %v762 = vlaneseq
        %v763 = vshrl.u32 %v762, 7
        %v764 = vsub.s32 6, %v763
        %v765 = vrot.slane %v734, %v764
        %v766 = vlaneseq
        %v767 = vshrl.u32 %v766, 7
        %v768 = vsub.s32 7, %v767
        %v769 = vrot.slane %v734, %v768
        %v770 = vlaneseq
        %v771 = vshrl.u32 %v770, 7
        %v772 = vsub.s32 0, %v771
        %v773 = vrot.slane %v735, %v772
        %v774 = vlaneseq
        %v775 = vshrl.u32 %v774, 7
        %v776 = vsub.s32 1, %v775
        %v777 = vrot.slane %v735, %v776
        %v778 = vlaneseq
        %v779 = vshrl.u32 %v778, 7
        %v780 = vsub.s32 2, %v779
        %v781 = vrot.slane %v735, %v780
        %v782 = vlaneseq
        %v783 = vshrl.u32 %v782, 7
        %v784 = vsub.s32 3, %v783
        %v785 = vrot.slane %v735, %v784
        %v786 = vlaneseq
        %v787 = vshrl.u32 %v786, 7
        %v788 = vsub.s32 4, %v787
        %v789 = vrot.slane %v735, %v788
        %v790 = vlaneseq
        %v791 = vshrl.u32 %v790, 7
        %v792 = vsub.s32 5, %v791
        %v793 = vrot.slane %v735, %v792
        %v794 = vlaneseq
        %v795 = vshrl.u32 %v794, 7
        %v796 = vsub.s32 6, %v795
        %v797 = vrot.slane %v735, %v796
        %v798 = vlaneseq
        %v799 = vshrl.u32 %v798, 7
        %v800 = vsub.s32 7, %v799
        %v801 = vrot.slane %v735, %v800
        %v834 = vunpack.c.l.b16 %v718
        %v835 = vunpack.c.h.b16 %v718
        %v836 = vunpack.c.l.b16 %v719
        %v837 = vunpack.c.h.b16 %v719
        %v838 = vunpack.c.l.b16 %v720
        %v839 = vunpack.c.h.b16 %v720
        %v840 = vunpack.c.l.b16 %v721
        %v841 = vunpack.c.h.b16 %v721
        %v842 = vunpack.c.l.b16 %v722
        %v843 = vunpack.c.h.b16 %v722
        %v844 = vunpack.c.l.b16 %v723
        %v845 = vunpack.c.h.b16 %v723
        %v846 = vunpack.c.l.b16 %v724
        %v847 = vunpack.c.h.b16 %v724
        %v848 = vunpack.c.l.b16 %v725
        %v849 = vunpack.c.h.b16 %v725
        %v850 = vunpack.c.l.b16 %v726
        %v851 = vunpack.c.h.b16 %v726
        %v852 = vunpack.c.l.b16 %v727
        %v853 = vunpack.c.h.b16 %v727
        %v854 = vunpack.c.l.b16 %v728
        %v855 = vunpack.c.h.b16 %v728
        %v856 = vunpack.c.l.b16 %v729
        %v857 = vunpack.c.h.b16 %v729
        %v858 = vunpack.c.l.b16 %v730
        %v859 = vunpack.c.h.b16 %v730
        %v860 = vunpack.c.l.b16 %v731
        %v861 = vunpack.c.h.b16 %v731
        %v862 = vunpack.c.l.b16 %v732
        %v863 = vunpack.c.h.b16 %v732
        %v864 = vunpack.c.l.b16 %v733
        %v865 = vunpack.c.h.b16 %v733
        %v866 = vpack.c.b16 %v850, %v834
        %v867 = vpack.c.b16 %v851, %v835
        %v868 = vpack.c.b16 %v852, %v836
        %v869 = vpack.c.b16 %v853, %v837
        %v870 = vpack.c.b16 %v854, %v838
        %v871 = vpack.c.b16 %v855, %v839
        %v872 = vpack.c.b16 %v856, %v840
        %v873 = vpack.c.b16 %v857, %v841
        %v874 = vpack.c.b16 %v858, %v842
        %v875 = vpack.c.b16 %v859, %v843
        %v876 = vpack.c.b16 %v860, %v844
        %v877 = vpack.c.b16 %v861, %v845
        %v878 = vpack.c.b16 %v862, %v846
        %v879 = vpack.c.b16 %v863, %v847
        %v880 = vpack.c.b16 %v864, %v848
        %v881 = vpack.c.b16 %v865, %v849
        %v899 = vsel %vm572, %v710, 0
        %v902 = vsel %vm572, %v711, 0
        %v905 = vsel %vm572, %v712, 0
        %v908 = vsel %vm572, %v713, 0
        %v911 = vsel %vm572, %v714, 0
        %v914 = vsel %vm572, %v715, 0
        %v917 = vsel %vm572, %v716, 0
        %v920 = vsel %vm572, %v717, 0
        %922 = vmatprep.subr.bf16.mxu0 0
        %923 = vmatpush1.bf16.msra.mxu0 0
        %924 = vmatprep.subr.bf16.mxu0 0
        %925 = vmatpush1.bf16.msra.mxu0 0
        %926 = vmatprep.subr.bf16.mxu0 0
        %927 = vmatpush1.bf16.msra.mxu0 0
        %928 = vmatprep.subr.bf16.mxu0 0
        %929 = vmatpush1.bf16.msra.mxu0 0
        %930 = vmatprep.subr.bf16.mxu0 0
        %931 = vmatpush1.bf16.msra.mxu0 0
        %932 = vmatprep.subr.bf16.mxu0 0
        %933 = vmatpush1.bf16.msra.mxu0 0
        %934 = vmatprep.subr.bf16.mxu0 0
        %935 = vmatpush1.bf16.msra.mxu0 0
        %936 = vmatprep.subr.bf16.mxu0 %v867
        %937 = vmatpush1.bf16.msra.mxu0 %v866
        %938 = vmatprep.subr.bf16.mxu0 0
        %939 = vmatpush2.bf16.msra.mxu0 0
        %940 = vmatprep.subr.bf16.mxu0 0
        %941 = vmatpush2.bf16.msra.mxu0 0
        %942 = vmatprep.subr.bf16.mxu0 0
        %943 = vmatpush2.bf16.msra.mxu0 0
        %944 = vmatprep.subr.bf16.mxu0 0
        %945 = vmatpush2.bf16.msra.mxu0 0
        %946 = vmatprep.subr.bf16.mxu0 0
        %947 = vmatpush2.bf16.msra.mxu0 0
        %948 = vmatprep.subr.bf16.mxu0 0
        %949 = vmatpush2.bf16.msra.mxu0 0
        %950 = vmatprep.subr.bf16.mxu0 0
        %951 = vmatpush2.bf16.msra.mxu0 0
        %952 = vmatprep.subr.bf16.mxu0 0
        %953 = vmatpush2.bf16.msra.mxu0 0
        %954 = vmatprep.mubr.bf16.mxu0 0
        %955 = vmatmul.mubr.bf16.gmra.mxu0 %v899
        %v956 = vpop.f32.mrf.mxu0
        %v957 = vadd.f32 %v741, %v956
        %v958 = vpop.f32.mrf.mxu0
        %v959 = vadd.f32 %v745, %v958
        %v960 = vpop.f32.mrf.mxu0
        %v961 = vadd.f32 %v741, %v960
        %v962 = vpop.f32.mrf.mxu0
        %v963 = vadd.f32 %v745, %v962
        %964 = vmatprep.mubr.bf16.mxu0 0
        %965 = vmatmul.mubr.bf16.gmra.mxu0 %v902
        %v966 = vpop.f32.mrf.mxu0
        %v967 = vadd.f32 %v741, %v966
        %v968 = vpop.f32.mrf.mxu0
        %v969 = vadd.f32 %v745, %v968
        %v970 = vpop.f32.mrf.mxu0
        %v971 = vadd.f32 %v741, %v970
        %v972 = vpop.f32.mrf.mxu0
        %v973 = vadd.f32 %v745, %v972
        %974 = vmatprep.mubr.bf16.mxu0 0
        %975 = vmatmul.mubr.bf16.gmra.mxu0 %v905
        %v976 = vpop.f32.mrf.mxu0
        %v977 = vadd.f32 %v741, %v976
        %v978 = vpop.f32.mrf.mxu0
        %v979 = vadd.f32 %v745, %v978
        %v980 = vpop.f32.mrf.mxu0
        %v981 = vadd.f32 %v741, %v980
        %v982 = vpop.f32.mrf.mxu0
        %v983 = vadd.f32 %v745, %v982
        %984 = vmatprep.mubr.bf16.mxu0 0
        %985 = vmatmul.mubr.bf16.gmra.mxu0 %v908
        %v986 = vpop.f32.mrf.mxu0
        %v987 = vadd.f32 %v741, %v986
        %v988 = vpop.f32.mrf.mxu0
        %v989 = vadd.f32 %v745, %v988
        %v990 = vpop.f32.mrf.mxu0
        %v991 = vadd.f32 %v741, %v990
        %v992 = vpop.f32.mrf.mxu0
        %v993 = vadd.f32 %v745, %v992
        %994 = vmatprep.mubr.bf16.mxu0 0
        %995 = vmatmul.mubr.bf16.gmra.mxu0 %v911
        %v996 = vpop.f32.mrf.mxu0
        %v997 = vadd.f32 %v741, %v996
        %v998 = vpop.f32.mrf.mxu0
        %v999 = vadd.f32 %v745, %v998
        %v1000 = vpop.f32.mrf.mxu0
        %v1001 = vadd.f32 %v741, %v1000
        %v1002 = vpop.f32.mrf.mxu0
        %v1003 = vadd.f32 %v745, %v1002
        %1004 = vmatprep.mubr.bf16.mxu0 0
        %1005 = vmatmul.mubr.bf16.gmra.mxu0 %v914
        %v1006 = vpop.f32.mrf.mxu0
        %v1007 = vadd.f32 %v741, %v1006
        %v1008 = vpop.f32.mrf.mxu0
        %v1009 = vadd.f32 %v745, %v1008
        %v1010 = vpop.f32.mrf.mxu0
        %v1011 = vadd.f32 %v741, %v1010
        %v1012 = vpop.f32.mrf.mxu0
        %v1013 = vadd.f32 %v745, %v1012
        %1014 = vmatprep.mubr.bf16.mxu0 0
        %1015 = vmatmul.mubr.bf16.gmra.mxu0 %v917
        %v1016 = vpop.f32.mrf.mxu0
        %v1017 = vadd.f32 %v741, %v1016
        %v1018 = vpop.f32.mrf.mxu0
        %v1019 = vadd.f32 %v745, %v1018
        %v1020 = vpop.f32.mrf.mxu0
        %v1021 = vadd.f32 %v741, %v1020
        %v1022 = vpop.f32.mrf.mxu0
        %v1023 = vadd.f32 %v745, %v1022
        %1024 = vmatprep.mubr.bf16.mxu0 0
        %1025 = vmatmul.mubr.bf16.gmra.mxu0 %v920
        %v1026 = vpop.f32.mrf.mxu0
        %v1027 = vadd.f32 %v741, %v1026
        %v1028 = vpop.f32.mrf.mxu0
        %v1029 = vadd.f32 %v745, %v1028
        %v1030 = vpop.f32.mrf.mxu0
        %v1031 = vadd.f32 %v741, %v1030
        %v1032 = vpop.f32.mrf.mxu0
        %v1033 = vadd.f32 %v745, %v1032
        %1034 = vdwg.mxu0
        %1035 = vmatprep.subr.bf16.mxu0 0
        %1036 = vmatpush1.bf16.msra.mxu0 0
        %1037 = vmatprep.subr.bf16.mxu0 0
        %1038 = vmatpush1.bf16.msra.mxu0 0
        %1039 = vmatprep.subr.bf16.mxu0 0
        %1040 = vmatpush1.bf16.msra.mxu0 0
        %1041 = vmatprep.subr.bf16.mxu0 0
        %1042 = vmatpush1.bf16.msra.mxu0 0
        %1043 = vmatprep.subr.bf16.mxu0 0
        %1044 = vmatpush1.bf16.msra.mxu0 0
        %1045 = vmatprep.subr.bf16.mxu0 0
        %1046 = vmatpush1.bf16.msra.mxu0 0
        %1047 = vmatprep.subr.bf16.mxu0 0
        %1048 = vmatpush1.bf16.msra.mxu0 0
        %1049 = vmatprep.subr.bf16.mxu0 %v869
        %1050 = vmatpush1.bf16.msra.mxu0 %v868
        %1051 = vmatprep.subr.bf16.mxu0 0
        %1052 = vmatpush2.bf16.msra.mxu0 0
        %1053 = vmatprep.subr.bf16.mxu0 0
        %1054 = vmatpush2.bf16.msra.mxu0 0
        %1055 = vmatprep.subr.bf16.mxu0 0
        %1056 = vmatpush2.bf16.msra.mxu0 0
        %1057 = vmatprep.subr.bf16.mxu0 0
        %1058 = vmatpush2.bf16.msra.mxu0 0
        %1059 = vmatprep.subr.bf16.mxu0 0
        %1060 = vmatpush2.bf16.msra.mxu0 0
        %1061 = vmatprep.subr.bf16.mxu0 0
        %1062 = vmatpush2.bf16.msra.mxu0 0
        %1063 = vmatprep.subr.bf16.mxu0 0
        %1064 = vmatpush2.bf16.msra.mxu0 0
        %1065 = vmatprep.subr.bf16.mxu0 0
        %1066 = vmatpush2.bf16.msra.mxu0 0
        %1067 = vmatprep.mubr.bf16.mxu0 0
        %1068 = vmatmul.mubr.bf16.gmra.mxu0 %v899
        %v1069 = vpop.f32.mrf.mxu0
        %v1070 = vadd.f32 %v749, %v1069
        %v1071 = vpop.f32.mrf.mxu0
        %v1072 = vadd.f32 %v753, %v1071
        %v1073 = vpop.f32.mrf.mxu0
        %v1074 = vadd.f32 %v749, %v1073
        %v1075 = vpop.f32.mrf.mxu0
        %v1076 = vadd.f32 %v753, %v1075
        %1077 = vmatprep.mubr.bf16.mxu0 0
        %1078 = vmatmul.mubr.bf16.gmra.mxu0 %v902
        %v1079 = vpop.f32.mrf.mxu0
        %v1080 = vadd.f32 %v749, %v1079
        %v1081 = vpop.f32.mrf.mxu0
        %v1082 = vadd.f32 %v753, %v1081
        %v1083 = vpop.f32.mrf.mxu0
        %v1084 = vadd.f32 %v749, %v1083
        %v1085 = vpop.f32.mrf.mxu0
        %v1086 = vadd.f32 %v753, %v1085
        %1087 = vmatprep.mubr.bf16.mxu0 0
        %1088 = vmatmul.mubr.bf16.gmra.mxu0 %v905
        %v1089 = vpop.f32.mrf.mxu0
        %v1090 = vadd.f32 %v749, %v1089
        %v1091 = vpop.f32.mrf.mxu0
        %v1092 = vadd.f32 %v753, %v1091
        %v1093 = vpop.f32.mrf.mxu0
        %v1094 = vadd.f32 %v749, %v1093
        %v1095 = vpop.f32.mrf.mxu0
        %v1096 = vadd.f32 %v753, %v1095
        %1097 = vmatprep.mubr.bf16.mxu0 0
        %1098 = vmatmul.mubr.bf16.gmra.mxu0 %v908
        %v1099 = vpop.f32.mrf.mxu0
        %v1100 = vadd.f32 %v749, %v1099
        %v1101 = vpop.f32.mrf.mxu0
        %v1102 = vadd.f32 %v753, %v1101
        %v1103 = vpop.f32.mrf.mxu0
        %v1104 = vadd.f32 %v749, %v1103
        %v1105 = vpop.f32.mrf.mxu0
        %v1106 = vadd.f32 %v753, %v1105
        %1107 = vmatprep.mubr.bf16.mxu0 0
        %1108 = vmatmul.mubr.bf16.gmra.mxu0 %v911
        %v1109 = vpop.f32.mrf.mxu0
        %v1110 = vadd.f32 %v749, %v1109
        %v1111 = vpop.f32.mrf.mxu0
        %v1112 = vadd.f32 %v753, %v1111
        %v1113 = vpop.f32.mrf.mxu0
        %v1114 = vadd.f32 %v749, %v1113
        %v1115 = vpop.f32.mrf.mxu0
        %v1116 = vadd.f32 %v753, %v1115
        %1117 = vmatprep.mubr.bf16.mxu0 0
        %1118 = vmatmul.mubr.bf16.gmra.mxu0 %v914
        %v1119 = vpop.f32.mrf.mxu0
        %v1120 = vadd.f32 %v749, %v1119
        %v1121 = vpop.f32.mrf.mxu0
        %v1122 = vadd.f32 %v753, %v1121
        %v1123 = vpop.f32.mrf.mxu0
        %v1124 = vadd.f32 %v749, %v1123
        %v1125 = vpop.f32.mrf.mxu0
        %v1126 = vadd.f32 %v753, %v1125
        %1127 = vmatprep.mubr.bf16.mxu0 0
        %1128 = vmatmul.mubr.bf16.gmra.mxu0 %v917
        %v1129 = vpop.f32.mrf.mxu0
        %v1130 = vadd.f32 %v749, %v1129
        %v1131 = vpop.f32.mrf.mxu0
        %v1132 = vadd.f32 %v753, %v1131
        %v1133 = vpop.f32.mrf.mxu0
        %v1134 = vadd.f32 %v749, %v1133
        %v1135 = vpop.f32.mrf.mxu0
        %v1136 = vadd.f32 %v753, %v1135
        %1137 = vmatprep.mubr.bf16.mxu0 0
        %1138 = vmatmul.mubr.bf16.gmra.mxu0 %v920
        %v1139 = vpop.f32.mrf.mxu0
        %v1140 = vadd.f32 %v749, %v1139
        %v1141 = vpop.f32.mrf.mxu0
        %v1142 = vadd.f32 %v753, %v1141
        %v1143 = vpop.f32.mrf.mxu0
        %v1144 = vadd.f32 %v749, %v1143
        %v1145 = vpop.f32.mrf.mxu0
        %v1146 = vadd.f32 %v753, %v1145
        %1147 = vdwg.mxu0
        %1148 = vmatprep.subr.bf16.mxu0 0
        %1149 = vmatpush1.bf16.msra.mxu0 0
        %1150 = vmatprep.subr.bf16.mxu0 0
        %1151 = vmatpush1.bf16.msra.mxu0 0
        %1152 = vmatprep.subr.bf16.mxu0 0
        %1153 = vmatpush1.bf16.msra.mxu0 0
        %1154 = vmatprep.subr.bf16.mxu0 0
        %1155 = vmatpush1.bf16.msra.mxu0 0
        %1156 = vmatprep.subr.bf16.mxu0 0
        %1157 = vmatpush1.bf16.msra.mxu0 0
        %1158 = vmatprep.subr.bf16.mxu0 0
        %1159 = vmatpush1.bf16.msra.mxu0 0
        %1160 = vmatprep.subr.bf16.mxu0 0
        %1161 = vmatpush1.bf16.msra.mxu0 0
        %1162 = vmatprep.subr.bf16.mxu0 %v871
        %1163 = vmatpush1.bf16.msra.mxu0 %v870
        %1164 = vmatprep.subr.bf16.mxu0 0
        %1165 = vmatpush2.bf16.msra.mxu0 0
        %1166 = vmatprep.subr.bf16.mxu0 0
        %1167 = vmatpush2.bf16.msra.mxu0 0
        %1168 = vmatprep.subr.bf16.mxu0 0
        %1169 = vmatpush2.bf16.msra.mxu0 0
        %1170 = vmatprep.subr.bf16.mxu0 0
        %1171 = vmatpush2.bf16.msra.mxu0 0
        %1172 = vmatprep.subr.bf16.mxu0 0
        %1173 = vmatpush2.bf16.msra.mxu0 0
        %1174 = vmatprep.subr.bf16.mxu0 0
        %1175 = vmatpush2.bf16.msra.mxu0 0
        %1176 = vmatprep.subr.bf16.mxu0 0
        %1177 = vmatpush2.bf16.msra.mxu0 0
        %1178 = vmatprep.subr.bf16.mxu0 0
        %1179 = vmatpush2.bf16.msra.mxu0 0
        %1180 = vmatprep.mubr.bf16.mxu0 0
        %1181 = vmatmul.mubr.bf16.gmra.mxu0 %v899
        %v1182 = vpop.f32.mrf.mxu0
        %v1183 = vadd.f32 %v757, %v1182
        %v1184 = vpop.f32.mrf.mxu0
        %v1185 = vadd.f32 %v761, %v1184
        %v1186 = vpop.f32.mrf.mxu0
        %v1187 = vadd.f32 %v757, %v1186
        %v1188 = vpop.f32.mrf.mxu0
        %v1189 = vadd.f32 %v761, %v1188
        %1190 = vmatprep.mubr.bf16.mxu0 0
        %1191 = vmatmul.mubr.bf16.gmra.mxu0 %v902
        %v1192 = vpop.f32.mrf.mxu0
        %v1193 = vadd.f32 %v757, %v1192
        %v1194 = vpop.f32.mrf.mxu0
        %v1195 = vadd.f32 %v761, %v1194
        %v1196 = vpop.f32.mrf.mxu0
        %v1197 = vadd.f32 %v757, %v1196
        %v1198 = vpop.f32.mrf.mxu0
        %v1199 = vadd.f32 %v761, %v1198
        %1200 = vmatprep.mubr.bf16.mxu0 0
        %1201 = vmatmul.mubr.bf16.gmra.mxu0 %v905
        %v1202 = vpop.f32.mrf.mxu0
        %v1203 = vadd.f32 %v757, %v1202
        %v1204 = vpop.f32.mrf.mxu0
        %v1205 = vadd.f32 %v761, %v1204
        %v1206 = vpop.f32.mrf.mxu0
        %v1207 = vadd.f32 %v757, %v1206
        %v1208 = vpop.f32.mrf.mxu0
        %v1209 = vadd.f32 %v761, %v1208
        %1210 = vmatprep.mubr.bf16.mxu0 0
        %1211 = vmatmul.mubr.bf16.gmra.mxu0 %v908
        %v1212 = vpop.f32.mrf.mxu0
        %v1213 = vadd.f32 %v757, %v1212
        %v1214 = vpop.f32.mrf.mxu0
        %v1215 = vadd.f32 %v761, %v1214
        %v1216 = vpop.f32.mrf.mxu0
        %v1217 = vadd.f32 %v757, %v1216
        %v1218 = vpop.f32.mrf.mxu0
        %v1219 = vadd.f32 %v761, %v1218
        %1220 = vmatprep.mubr.bf16.mxu0 0
        %1221 = vmatmul.mubr.bf16.gmra.mxu0 %v911
        %v1222 = vpop.f32.mrf.mxu0
        %v1223 = vadd.f32 %v757, %v1222
        %v1224 = vpop.f32.mrf.mxu0
        %v1225 = vadd.f32 %v761, %v1224
        %v1226 = vpop.f32.mrf.mxu0
        %v1227 = vadd.f32 %v757, %v1226
        %v1228 = vpop.f32.mrf.mxu0
        %v1229 = vadd.f32 %v761, %v1228
        %1230 = vmatprep.mubr.bf16.mxu0 0
        %1231 = vmatmul.mubr.bf16.gmra.mxu0 %v914
        %v1232 = vpop.f32.mrf.mxu0
        %v1233 = vadd.f32 %v757, %v1232
        %v1234 = vpop.f32.mrf.mxu0
        %v1235 = vadd.f32 %v761, %v1234
        %v1236 = vpop.f32.mrf.mxu0
        %v1237 = vadd.f32 %v757, %v1236
        %v1238 = vpop.f32.mrf.mxu0
        %v1239 = vadd.f32 %v761, %v1238
        %1240 = vmatprep.mubr.bf16.mxu0 0
        %1241 = vmatmul.mubr.bf16.gmra.mxu0 %v917
        %v1242 = vpop.f32.mrf.mxu0
        %v1243 = vadd.f32 %v757, %v1242
        %v1244 = vpop.f32.mrf.mxu0
        %v1245 = vadd.f32 %v761, %v1244
        %v1246 = vpop.f32.mrf.mxu0
        %v1247 = vadd.f32 %v757, %v1246
        %v1248 = vpop.f32.mrf.mxu0
        %v1249 = vadd.f32 %v761, %v1248
        %1250 = vmatprep.mubr.bf16.mxu0 0
        %1251 = vmatmul.mubr.bf16.gmra.mxu0 %v920
        %v1252 = vpop.f32.mrf.mxu0
        %v1253 = vadd.f32 %v757, %v1252
        %v1254 = vpop.f32.mrf.mxu0
        %v1255 = vadd.f32 %v761, %v1254
        %v1256 = vpop.f32.mrf.mxu0
        %v1257 = vadd.f32 %v757, %v1256
        %v1258 = vpop.f32.mrf.mxu0
        %v1259 = vadd.f32 %v761, %v1258
        %1260 = vdwg.mxu0
        %1261 = vmatprep.subr.bf16.mxu0 0
        %1262 = vmatpush1.bf16.msra.mxu0 0
        %1263 = vmatprep.subr.bf16.mxu0 0
        %1264 = vmatpush1.bf16.msra.mxu0 0
        %1265 = vmatprep.subr.bf16.mxu0 0
        %1266 = vmatpush1.bf16.msra.mxu0 0
        %1267 = vmatprep.subr.bf16.mxu0 0
        %1268 = vmatpush1.bf16.msra.mxu0 0
        %1269 = vmatprep.subr.bf16.mxu0 0
        %1270 = vmatpush1.bf16.msra.mxu0 0
        %1271 = vmatprep.subr.bf16.mxu0 0
        %1272 = vmatpush1.bf16.msra.mxu0 0
        %1273 = vmatprep.subr.bf16.mxu0 0
        %1274 = vmatpush1.bf16.msra.mxu0 0
        %1275 = vmatprep.subr.bf16.mxu0 %v873
        %1276 = vmatpush1.bf16.msra.mxu0 %v872
        %1277 = vmatprep.subr.bf16.mxu0 0
        %1278 = vmatpush2.bf16.msra.mxu0 0
        %1279 = vmatprep.subr.bf16.mxu0 0
        %1280 = vmatpush2.bf16.msra.mxu0 0
        %1281 = vmatprep.subr.bf16.mxu0 0
        %1282 = vmatpush2.bf16.msra.mxu0 0
        %1283 = vmatprep.subr.bf16.mxu0 0
        %1284 = vmatpush2.bf16.msra.mxu0 0
        %1285 = vmatprep.subr.bf16.mxu0 0
        %1286 = vmatpush2.bf16.msra.mxu0 0
        %1287 = vmatprep.subr.bf16.mxu0 0
        %1288 = vmatpush2.bf16.msra.mxu0 0
        %1289 = vmatprep.subr.bf16.mxu0 0
        %1290 = vmatpush2.bf16.msra.mxu0 0
        %1291 = vmatprep.subr.bf16.mxu0 0
        %1292 = vmatpush2.bf16.msra.mxu0 0
        %1293 = vmatprep.mubr.bf16.mxu0 0
        %1294 = vmatmul.mubr.bf16.gmra.mxu0 %v899
        %v1295 = vpop.f32.mrf.mxu0
        %v1296 = vadd.f32 %v765, %v1295
        %v1297 = vpop.f32.mrf.mxu0
        %v1298 = vadd.f32 %v769, %v1297
        %v1299 = vpop.f32.mrf.mxu0
        %v1300 = vadd.f32 %v765, %v1299
        %v1301 = vpop.f32.mrf.mxu0
        %v1302 = vadd.f32 %v769, %v1301
        %1303 = vmatprep.mubr.bf16.mxu0 0
        %1304 = vmatmul.mubr.bf16.gmra.mxu0 %v902
        %v1305 = vpop.f32.mrf.mxu0
        %v1306 = vadd.f32 %v765, %v1305
        %v1307 = vpop.f32.mrf.mxu0
        %v1308 = vadd.f32 %v769, %v1307
        %v1309 = vpop.f32.mrf.mxu0
        %v1310 = vadd.f32 %v765, %v1309
        %v1311 = vpop.f32.mrf.mxu0
        %v1312 = vadd.f32 %v769, %v1311
        %1313 = vmatprep.mubr.bf16.mxu0 0
        %1314 = vmatmul.mubr.bf16.gmra.mxu0 %v905
        %v1315 = vpop.f32.mrf.mxu0
        %v1316 = vadd.f32 %v765, %v1315
        %v1317 = vpop.f32.mrf.mxu0
        %v1318 = vadd.f32 %v769, %v1317
        %v1319 = vpop.f32.mrf.mxu0
        %v1320 = vadd.f32 %v765, %v1319
        %v1321 = vpop.f32.mrf.mxu0
        %v1322 = vadd.f32 %v769, %v1321
        %1323 = vmatprep.mubr.bf16.mxu0 0
        %1324 = vmatmul.mubr.bf16.gmra.mxu0 %v908
        %v1325 = vpop.f32.mrf.mxu0
        %v1326 = vadd.f32 %v765, %v1325
        %v1327 = vpop.f32.mrf.mxu0
        %v1328 = vadd.f32 %v769, %v1327
        %v1329 = vpop.f32.mrf.mxu0
        %v1330 = vadd.f32 %v765, %v1329
        %v1331 = vpop.f32.mrf.mxu0
        %v1332 = vadd.f32 %v769, %v1331
        %1333 = vmatprep.mubr.bf16.mxu0 0
        %1334 = vmatmul.mubr.bf16.gmra.mxu0 %v911
        %v1335 = vpop.f32.mrf.mxu0
        %v1336 = vadd.f32 %v765, %v1335
        %v1337 = vpop.f32.mrf.mxu0
        %v1338 = vadd.f32 %v769, %v1337
        %v1339 = vpop.f32.mrf.mxu0
        %v1340 = vadd.f32 %v765, %v1339
        %v1341 = vpop.f32.mrf.mxu0
        %v1342 = vadd.f32 %v769, %v1341
        %1343 = vmatprep.mubr.bf16.mxu0 0
        %1344 = vmatmul.mubr.bf16.gmra.mxu0 %v914
        %v1345 = vpop.f32.mrf.mxu0
        %v1346 = vadd.f32 %v765, %v1345
        %v1347 = vpop.f32.mrf.mxu0
        %v1348 = vadd.f32 %v769, %v1347
        %v1349 = vpop.f32.mrf.mxu0
        %v1350 = vadd.f32 %v765, %v1349
        %v1351 = vpop.f32.mrf.mxu0
        %v1352 = vadd.f32 %v769, %v1351
        %1353 = vmatprep.mubr.bf16.mxu0 0
        %1354 = vmatmul.mubr.bf16.gmra.mxu0 %v917
        %v1355 = vpop.f32.mrf.mxu0
        %v1356 = vadd.f32 %v765, %v1355
        %v1357 = vpop.f32.mrf.mxu0
        %v1358 = vadd.f32 %v769, %v1357
        %v1359 = vpop.f32.mrf.mxu0
        %v1360 = vadd.f32 %v765, %v1359
        %v1361 = vpop.f32.mrf.mxu0
        %v1362 = vadd.f32 %v769, %v1361
        %1363 = vmatprep.mubr.bf16.mxu0 0
        %1364 = vmatmul.mubr.bf16.gmra.mxu0 %v920
        %v1365 = vpop.f32.mrf.mxu0
        %v1366 = vadd.f32 %v765, %v1365
        %v1367 = vpop.f32.mrf.mxu0
        %v1368 = vadd.f32 %v769, %v1367
        %v1369 = vpop.f32.mrf.mxu0
        %v1370 = vadd.f32 %v765, %v1369
        %v1371 = vpop.f32.mrf.mxu0
        %v1372 = vadd.f32 %v769, %v1371
        %1373 = vdwg.mxu0
        %1374 = vmatprep.subr.bf16.mxu0 0
        %1375 = vmatpush1.bf16.msra.mxu0 0
        %1376 = vmatprep.subr.bf16.mxu0 0
        %1377 = vmatpush1.bf16.msra.mxu0 0
        %1378 = vmatprep.subr.bf16.mxu0 0
        %1379 = vmatpush1.bf16.msra.mxu0 0
        %1380 = vmatprep.subr.bf16.mxu0 0
        %1381 = vmatpush1.bf16.msra.mxu0 0
        %1382 = vmatprep.subr.bf16.mxu0 0
        %1383 = vmatpush1.bf16.msra.mxu0 0
        %1384 = vmatprep.subr.bf16.mxu0 0
        %1385 = vmatpush1.bf16.msra.mxu0 0
        %1386 = vmatprep.subr.bf16.mxu0 0
        %1387 = vmatpush1.bf16.msra.mxu0 0
        %1388 = vmatprep.subr.bf16.mxu0 %v875
        %1389 = vmatpush1.bf16.msra.mxu0 %v874
        %1390 = vmatprep.subr.bf16.mxu0 0
        %1391 = vmatpush2.bf16.msra.mxu0 0
        %1392 = vmatprep.subr.bf16.mxu0 0
        %1393 = vmatpush2.bf16.msra.mxu0 0
        %1394 = vmatprep.subr.bf16.mxu0 0
        %1395 = vmatpush2.bf16.msra.mxu0 0
        %1396 = vmatprep.subr.bf16.mxu0 0
        %1397 = vmatpush2.bf16.msra.mxu0 0
        %1398 = vmatprep.subr.bf16.mxu0 0
        %1399 = vmatpush2.bf16.msra.mxu0 0
        %1400 = vmatprep.subr.bf16.mxu0 0
        %1401 = vmatpush2.bf16.msra.mxu0 0
        %1402 = vmatprep.subr.bf16.mxu0 0
        %1403 = vmatpush2.bf16.msra.mxu0 0
        %1404 = vmatprep.subr.bf16.mxu0 0
        %1405 = vmatpush2.bf16.msra.mxu0 0
        %1406 = vmatprep.mubr.bf16.mxu0 0
        %1407 = vmatmul.mubr.bf16.gmra.mxu0 %v899
        %v1408 = vpop.f32.mrf.mxu0
        %v1409 = vadd.f32 %v773, %v1408
        %v1410 = vpop.f32.mrf.mxu0
        %v1411 = vadd.f32 %v777, %v1410
        %v1412 = vpop.f32.mrf.mxu0
        %v1413 = vadd.f32 %v773, %v1412
        %v1414 = vpop.f32.mrf.mxu0
        %v1415 = vadd.f32 %v777, %v1414
        %1416 = vmatprep.mubr.bf16.mxu0 0
        %1417 = vmatmul.mubr.bf16.gmra.mxu0 %v902
        %v1418 = vpop.f32.mrf.mxu0
        %v1419 = vadd.f32 %v773, %v1418
        %v1420 = vpop.f32.mrf.mxu0
        %v1421 = vadd.f32 %v777, %v1420
        %v1422 = vpop.f32.mrf.mxu0
        %v1423 = vadd.f32 %v773, %v1422
        %v1424 = vpop.f32.mrf.mxu0
        %v1425 = vadd.f32 %v777, %v1424
        %1426 = vmatprep.mubr.bf16.mxu0 0
        %1427 = vmatmul.mubr.bf16.gmra.mxu0 %v905
        %v1428 = vpop.f32.mrf.mxu0
        %v1429 = vadd.f32 %v773, %v1428
        %v1430 = vpop.f32.mrf.mxu0
        %v1431 = vadd.f32 %v777, %v1430
        %v1432 = vpop.f32.mrf.mxu0
        %v1433 = vadd.f32 %v773, %v1432
        %v1434 = vpop.f32.mrf.mxu0
        %v1435 = vadd.f32 %v777, %v1434
        %1436 = vmatprep.mubr.bf16.mxu0 0
        %1437 = vmatmul.mubr.bf16.gmra.mxu0 %v908
        %v1438 = vpop.f32.mrf.mxu0
        %v1439 = vadd.f32 %v773, %v1438
        %v1440 = vpop.f32.mrf.mxu0
        %v1441 = vadd.f32 %v777, %v1440
        %v1442 = vpop.f32.mrf.mxu0
        %v1443 = vadd.f32 %v773, %v1442
        %v1444 = vpop.f32.mrf.mxu0
        %v1445 = vadd.f32 %v777, %v1444
        %1446 = vmatprep.mubr.bf16.mxu0 0
        %1447 = vmatmul.mubr.bf16.gmra.mxu0 %v911
        %v1448 = vpop.f32.mrf.mxu0
        %v1449 = vadd.f32 %v773, %v1448
        %v1450 = vpop.f32.mrf.mxu0
        %v1451 = vadd.f32 %v777, %v1450
        %v1452 = vpop.f32.mrf.mxu0
        %v1453 = vadd.f32 %v773, %v1452
        %v1454 = vpop.f32.mrf.mxu0
        %v1455 = vadd.f32 %v777, %v1454
        %1456 = vmatprep.mubr.bf16.mxu0 0
        %1457 = vmatmul.mubr.bf16.gmra.mxu0 %v914
        %v1458 = vpop.f32.mrf.mxu0
        %v1459 = vadd.f32 %v773, %v1458
        %v1460 = vpop.f32.mrf.mxu0
        %v1461 = vadd.f32 %v777, %v1460
        %v1462 = vpop.f32.mrf.mxu0
        %v1463 = vadd.f32 %v773, %v1462
        %v1464 = vpop.f32.mrf.mxu0
        %v1465 = vadd.f32 %v777, %v1464
        %1466 = vmatprep.mubr.bf16.mxu0 0
        %1467 = vmatmul.mubr.bf16.gmra.mxu0 %v917
        %v1468 = vpop.f32.mrf.mxu0
        %v1469 = vadd.f32 %v773, %v1468
        %v1470 = vpop.f32.mrf.mxu0
        %v1471 = vadd.f32 %v777, %v1470
        %v1472 = vpop.f32.mrf.mxu0
        %v1473 = vadd.f32 %v773, %v1472
        %v1474 = vpop.f32.mrf.mxu0
        %v1475 = vadd.f32 %v777, %v1474
        %1476 = vmatprep.mubr.bf16.mxu0 0
        %1477 = vmatmul.mubr.bf16.gmra.mxu0 %v920
        %v1478 = vpop.f32.mrf.mxu0
        %v1479 = vadd.f32 %v773, %v1478
        %v1480 = vpop.f32.mrf.mxu0
        %v1481 = vadd.f32 %v777, %v1480
        %v1482 = vpop.f32.mrf.mxu0
        %v1483 = vadd.f32 %v773, %v1482
        %v1484 = vpop.f32.mrf.mxu0
        %v1485 = vadd.f32 %v777, %v1484
        %1486 = vdwg.mxu0
        %1487 = vmatprep.subr.bf16.mxu0 0
        %1488 = vmatpush1.bf16.msra.mxu0 0
        %1489 = vmatprep.subr.bf16.mxu0 0
        %1490 = vmatpush1.bf16.msra.mxu0 0
        %1491 = vmatprep.subr.bf16.mxu0 0
        %1492 = vmatpush1.bf16.msra.mxu0 0
        %1493 = vmatprep.subr.bf16.mxu0 0
        %1494 = vmatpush1.bf16.msra.mxu0 0
        %1495 = vmatprep.subr.bf16.mxu0 0
        %1496 = vmatpush1.bf16.msra.mxu0 0
        %1497 = vmatprep.subr.bf16.mxu0 0
        %1498 = vmatpush1.bf16.msra.mxu0 0
        %1499 = vmatprep.subr.bf16.mxu0 0
        %1500 = vmatpush1.bf16.msra.mxu0 0
        %1501 = vmatprep.subr.bf16.mxu0 %v877
        %1502 = vmatpush1.bf16.msra.mxu0 %v876
        %1503 = vmatprep.subr.bf16.mxu0 0
        %1504 = vmatpush2.bf16.msra.mxu0 0
        %1505 = vmatprep.subr.bf16.mxu0 0
        %1506 = vmatpush2.bf16.msra.mxu0 0
        %1507 = vmatprep.subr.bf16.mxu0 0
        %1508 = vmatpush2.bf16.msra.mxu0 0
        %1509 = vmatprep.subr.bf16.mxu0 0
        %1510 = vmatpush2.bf16.msra.mxu0 0
        %1511 = vmatprep.subr.bf16.mxu0 0
        %1512 = vmatpush2.bf16.msra.mxu0 0
        %1513 = vmatprep.subr.bf16.mxu0 0
        %1514 = vmatpush2.bf16.msra.mxu0 0
        %1515 = vmatprep.subr.bf16.mxu0 0
        %1516 = vmatpush2.bf16.msra.mxu0 0
        %1517 = vmatprep.subr.bf16.mxu0 0
        %1518 = vmatpush2.bf16.msra.mxu0 0
        %1519 = vmatprep.mubr.bf16.mxu0 0
        %1520 = vmatmul.mubr.bf16.gmra.mxu0 %v899
        %v1521 = vpop.f32.mrf.mxu0
        %v1522 = vadd.f32 %v781, %v1521
        %v1523 = vpop.f32.mrf.mxu0
        %v1524 = vadd.f32 %v785, %v1523
        %v1525 = vpop.f32.mrf.mxu0
        %v1526 = vadd.f32 %v781, %v1525
        %v1527 = vpop.f32.mrf.mxu0
        %v1528 = vadd.f32 %v785, %v1527
        %1529 = vmatprep.mubr.bf16.mxu0 0
        %1530 = vmatmul.mubr.bf16.gmra.mxu0 %v902
        %v1531 = vpop.f32.mrf.mxu0
        %v1532 = vadd.f32 %v781, %v1531
        %v1533 = vpop.f32.mrf.mxu0
        %v1534 = vadd.f32 %v785, %v1533
        %v1535 = vpop.f32.mrf.mxu0
        %v1536 = vadd.f32 %v781, %v1535
        %v1537 = vpop.f32.mrf.mxu0
        %v1538 = vadd.f32 %v785, %v1537
        %1539 = vmatprep.mubr.bf16.mxu0 0
        %1540 = vmatmul.mubr.bf16.gmra.mxu0 %v905
        %v1541 = vpop.f32.mrf.mxu0
        %v1542 = vadd.f32 %v781, %v1541
        %v1543 = vpop.f32.mrf.mxu0
        %v1544 = vadd.f32 %v785, %v1543
        %v1545 = vpop.f32.mrf.mxu0
        %v1546 = vadd.f32 %v781, %v1545
        %v1547 = vpop.f32.mrf.mxu0
        %v1548 = vadd.f32 %v785, %v1547
        %1549 = vmatprep.mubr.bf16.mxu0 0
        %1550 = vmatmul.mubr.bf16.gmra.mxu0 %v908
        %v1551 = vpop.f32.mrf.mxu0
        %v1552 = vadd.f32 %v781, %v1551
        %v1553 = vpop.f32.mrf.mxu0
        %v1554 = vadd.f32 %v785, %v1553
        %v1555 = vpop.f32.mrf.mxu0
        %v1556 = vadd.f32 %v781, %v1555
        %v1557 = vpop.f32.mrf.mxu0
        %v1558 = vadd.f32 %v785, %v1557
        %1559 = vmatprep.mubr.bf16.mxu0 0
        %1560 = vmatmul.mubr.bf16.gmra.mxu0 %v911
        %v1561 = vpop.f32.mrf.mxu0
        %v1562 = vadd.f32 %v781, %v1561
        %v1563 = vpop.f32.mrf.mxu0
        %v1564 = vadd.f32 %v785, %v1563
        %v1565 = vpop.f32.mrf.mxu0
        %v1566 = vadd.f32 %v781, %v1565
        %v1567 = vpop.f32.mrf.mxu0
        %v1568 = vadd.f32 %v785, %v1567
        %1569 = vmatprep.mubr.bf16.mxu0 0
        %1570 = vmatmul.mubr.bf16.gmra.mxu0 %v914
        %v1571 = vpop.f32.mrf.mxu0
        %v1572 = vadd.f32 %v781, %v1571
        %v1573 = vpop.f32.mrf.mxu0
        %v1574 = vadd.f32 %v785, %v1573
        %v1575 = vpop.f32.mrf.mxu0
        %v1576 = vadd.f32 %v781, %v1575
        %v1577 = vpop.f32.mrf.mxu0
        %v1578 = vadd.f32 %v785, %v1577
        %1579 = vmatprep.mubr.bf16.mxu0 0
        %1580 = vmatmul.mubr.bf16.gmra.mxu0 %v917
        %v1581 = vpop.f32.mrf.mxu0
        %v1582 = vadd.f32 %v781, %v1581
        %v1583 = vpop.f32.mrf.mxu0
        %v1584 = vadd.f32 %v785, %v1583
        %v1585 = vpop.f32.mrf.mxu0
        %v1586 = vadd.f32 %v781, %v1585
        %v1587 = vpop.f32.mrf.mxu0
        %v1588 = vadd.f32 %v785, %v1587
        %1589 = vmatprep.mubr.bf16.mxu0 0
        %1590 = vmatmul.mubr.bf16.gmra.mxu0 %v920
        %v1591 = vpop.f32.mrf.mxu0
        %v1592 = vadd.f32 %v781, %v1591
        %v1593 = vpop.f32.mrf.mxu0
        %v1594 = vadd.f32 %v785, %v1593
        %v1595 = vpop.f32.mrf.mxu0
        %v1596 = vadd.f32 %v781, %v1595
        %v1597 = vpop.f32.mrf.mxu0
        %v1598 = vadd.f32 %v785, %v1597
        %1599 = vdwg.mxu0
        %1600 = vmatprep.subr.bf16.mxu0 0
        %1601 = vmatpush1.bf16.msra.mxu0 0
        %1602 = vmatprep.subr.bf16.mxu0 0
        %1603 = vmatpush1.bf16.msra.mxu0 0
        %1604 = vmatprep.subr.bf16.mxu0 0
        %1605 = vmatpush1.bf16.msra.mxu0 0
        %1606 = vmatprep.subr.bf16.mxu0 0
        %1607 = vmatpush1.bf16.msra.mxu0 0
        %1608 = vmatprep.subr.bf16.mxu0 0
        %1609 = vmatpush1.bf16.msra.mxu0 0
        %1610 = vmatprep.subr.bf16.mxu0 0
        %1611 = vmatpush1.bf16.msra.mxu0 0
        %1612 = vmatprep.subr.bf16.mxu0 0
        %1613 = vmatpush1.bf16.msra.mxu0 0
        %1614 = vmatprep.subr.bf16.mxu0 %v879
        %1615 = vmatpush1.bf16.msra.mxu0 %v878
        %1616 = vmatprep.subr.bf16.mxu0 0
        %1617 = vmatpush2.bf16.msra.mxu0 0
        %1618 = vmatprep.subr.bf16.mxu0 0
        %1619 = vmatpush2.bf16.msra.mxu0 0
        %1620 = vmatprep.subr.bf16.mxu0 0
        %1621 = vmatpush2.bf16.msra.mxu0 0
        %1622 = vmatprep.subr.bf16.mxu0 0
        %1623 = vmatpush2.bf16.msra.mxu0 0
        %1624 = vmatprep.subr.bf16.mxu0 0
        %1625 = vmatpush2.bf16.msra.mxu0 0
        %1626 = vmatprep.subr.bf16.mxu0 0
        %1627 = vmatpush2.bf16.msra.mxu0 0
        %1628 = vmatprep.subr.bf16.mxu0 0
        %1629 = vmatpush2.bf16.msra.mxu0 0
        %1630 = vmatprep.subr.bf16.mxu0 0
        %1631 = vmatpush2.bf16.msra.mxu0 0
        %1632 = vmatprep.mubr.bf16.mxu0 0
        %1633 = vmatmul.mubr.bf16.gmra.mxu0 %v899
        %v1634 = vpop.f32.mrf.mxu0
        %v1635 = vadd.f32 %v789, %v1634
        %v1636 = vpop.f32.mrf.mxu0
        %v1637 = vadd.f32 %v793, %v1636
        %v1638 = vpop.f32.mrf.mxu0
        %v1639 = vadd.f32 %v789, %v1638
        %v1640 = vpop.f32.mrf.mxu0
        %v1641 = vadd.f32 %v793, %v1640
        %1642 = vmatprep.mubr.bf16.mxu0 0
        %1643 = vmatmul.mubr.bf16.gmra.mxu0 %v902
        %v1644 = vpop.f32.mrf.mxu0
        %v1645 = vadd.f32 %v789, %v1644
        %v1646 = vpop.f32.mrf.mxu0
        %v1647 = vadd.f32 %v793, %v1646
        %v1648 = vpop.f32.mrf.mxu0
        %v1649 = vadd.f32 %v789, %v1648
        %v1650 = vpop.f32.mrf.mxu0
        %v1651 = vadd.f32 %v793, %v1650
        %1652 = vmatprep.mubr.bf16.mxu0 0
        %1653 = vmatmul.mubr.bf16.gmra.mxu0 %v905
        %v1654 = vpop.f32.mrf.mxu0
        %v1655 = vadd.f32 %v789, %v1654
        %v1656 = vpop.f32.mrf.mxu0
        %v1657 = vadd.f32 %v793, %v1656
        %v1658 = vpop.f32.mrf.mxu0
        %v1659 = vadd.f32 %v789, %v1658
        %v1660 = vpop.f32.mrf.mxu0
        %v1661 = vadd.f32 %v793, %v1660
        %1662 = vmatprep.mubr.bf16.mxu0 0
        %1663 = vmatmul.mubr.bf16.gmra.mxu0 %v908
        %v1664 = vpop.f32.mrf.mxu0
        %v1665 = vadd.f32 %v789, %v1664
        %v1666 = vpop.f32.mrf.mxu0
        %v1667 = vadd.f32 %v793, %v1666
        %v1668 = vpop.f32.mrf.mxu0
        %v1669 = vadd.f32 %v789, %v1668
        %v1670 = vpop.f32.mrf.mxu0
        %v1671 = vadd.f32 %v793, %v1670
        %1672 = vmatprep.mubr.bf16.mxu0 0
        %1673 = vmatmul.mubr.bf16.gmra.mxu0 %v911
        %v1674 = vpop.f32.mrf.mxu0
        %v1675 = vadd.f32 %v789, %v1674
        %v1676 = vpop.f32.mrf.mxu0
        %v1677 = vadd.f32 %v793, %v1676
        %v1678 = vpop.f32.mrf.mxu0
        %v1679 = vadd.f32 %v789, %v1678
        %v1680 = vpop.f32.mrf.mxu0
        %v1681 = vadd.f32 %v793, %v1680
        %1682 = vmatprep.mubr.bf16.mxu0 0
        %1683 = vmatmul.mubr.bf16.gmra.mxu0 %v914
        %v1684 = vpop.f32.mrf.mxu0
        %v1685 = vadd.f32 %v789, %v1684
        %v1686 = vpop.f32.mrf.mxu0
        %v1687 = vadd.f32 %v793, %v1686
        %v1688 = vpop.f32.mrf.mxu0
        %v1689 = vadd.f32 %v789, %v1688
        %v1690 = vpop.f32.mrf.mxu0
        %v1691 = vadd.f32 %v793, %v1690
        %1692 = vmatprep.mubr.bf16.mxu0 0
        %1693 = vmatmul.mubr.bf16.gmra.mxu0 %v917
        %v1694 = vpop.f32.mrf.mxu0
        %v1695 = vadd.f32 %v789, %v1694
        %v1696 = vpop.f32.mrf.mxu0
        %v1697 = vadd.f32 %v793, %v1696
        %v1698 = vpop.f32.mrf.mxu0
        %v1699 = vadd.f32 %v789, %v1698
        %v1700 = vpop.f32.mrf.mxu0
        %v1701 = vadd.f32 %v793, %v1700
        %1702 = vmatprep.mubr.bf16.mxu0 0
        %1703 = vmatmul.mubr.bf16.gmra.mxu0 %v920
        %v1704 = vpop.f32.mrf.mxu0
        %v1705 = vadd.f32 %v789, %v1704
        %v1706 = vpop.f32.mrf.mxu0
        %v1707 = vadd.f32 %v793, %v1706
        %v1708 = vpop.f32.mrf.mxu0
        %v1709 = vadd.f32 %v789, %v1708
        %v1710 = vpop.f32.mrf.mxu0
        %v1711 = vadd.f32 %v793, %v1710
        %1712 = vdwg.mxu0
        %1713 = vmatprep.subr.bf16.mxu0 0
        %1714 = vmatpush1.bf16.msra.mxu0 0
        %1715 = vmatprep.subr.bf16.mxu0 0
        %1716 = vmatpush1.bf16.msra.mxu0 0
        %1717 = vmatprep.subr.bf16.mxu0 0
        %1718 = vmatpush1.bf16.msra.mxu0 0
        %1719 = vmatprep.subr.bf16.mxu0 0
        %1720 = vmatpush1.bf16.msra.mxu0 0
        %1721 = vmatprep.subr.bf16.mxu0 0
        %1722 = vmatpush1.bf16.msra.mxu0 0
        %1723 = vmatprep.subr.bf16.mxu0 0
        %1724 = vmatpush1.bf16.msra.mxu0 0
        %1725 = vmatprep.subr.bf16.mxu0 0
        %1726 = vmatpush1.bf16.msra.mxu0 0
        %1727 = vmatprep.subr.bf16.mxu0 %v881
        %1728 = vmatpush1.bf16.msra.mxu0 %v880
        %1729 = vmatprep.subr.bf16.mxu0 0
        %1730 = vmatpush2.bf16.msra.mxu0 0
        %1731 = vmatprep.subr.bf16.mxu0 0
        %1732 = vmatpush2.bf16.msra.mxu0 0
        %1733 = vmatprep.subr.bf16.mxu0 0
        %1734 = vmatpush2.bf16.msra.mxu0 0
        %1735 = vmatprep.subr.bf16.mxu0 0
        %1736 = vmatpush2.bf16.msra.mxu0 0
        %1737 = vmatprep.subr.bf16.mxu0 0
        %1738 = vmatpush2.bf16.msra.mxu0 0
        %1739 = vmatprep.subr.bf16.mxu0 0
        %1740 = vmatpush2.bf16.msra.mxu0 0
        %1741 = vmatprep.subr.bf16.mxu0 0
        %1742 = vmatpush2.bf16.msra.mxu0 0
        %1743 = vmatprep.subr.bf16.mxu0 0
        %1744 = vmatpush2.bf16.msra.mxu0 0
        %1745 = vmatprep.mubr.bf16.mxu0 0
        %1746 = vmatmul.mubr.bf16.gmra.mxu0 %v899
        %v1747 = vpop.f32.mrf.mxu0
        %v1748 = vadd.f32 %v797, %v1747
        %v1749 = vpop.f32.mrf.mxu0
        %v1750 = vadd.f32 %v801, %v1749
        %v1751 = vpop.f32.mrf.mxu0
        %v1752 = vadd.f32 %v797, %v1751
        %v1753 = vpop.f32.mrf.mxu0
        %v1754 = vadd.f32 %v801, %v1753
        %1755 = vmatprep.mubr.bf16.mxu0 0
        %1756 = vmatmul.mubr.bf16.gmra.mxu0 %v902
        %v1757 = vpop.f32.mrf.mxu0
        %v1758 = vadd.f32 %v797, %v1757
        %v1759 = vpop.f32.mrf.mxu0
        %v1760 = vadd.f32 %v801, %v1759
        %v1761 = vpop.f32.mrf.mxu0
        %v1762 = vadd.f32 %v797, %v1761
        %v1763 = vpop.f32.mrf.mxu0
        %v1764 = vadd.f32 %v801, %v1763
        %1765 = vmatprep.mubr.bf16.mxu0 0
        %1766 = vmatmul.mubr.bf16.gmra.mxu0 %v905
        %v1767 = vpop.f32.mrf.mxu0
        %v1768 = vadd.f32 %v797, %v1767
        %v1769 = vpop.f32.mrf.mxu0
        %v1770 = vadd.f32 %v801, %v1769
        %v1771 = vpop.f32.mrf.mxu0
        %v1772 = vadd.f32 %v797, %v1771
        %v1773 = vpop.f32.mrf.mxu0
        %v1774 = vadd.f32 %v801, %v1773
        %1775 = vmatprep.mubr.bf16.mxu0 0
        %1776 = vmatmul.mubr.bf16.gmra.mxu0 %v908
        %v1777 = vpop.f32.mrf.mxu0
        %v1778 = vadd.f32 %v797, %v1777
        %v1779 = vpop.f32.mrf.mxu0
        %v1780 = vadd.f32 %v801, %v1779
        %v1781 = vpop.f32.mrf.mxu0
        %v1782 = vadd.f32 %v797, %v1781
        %v1783 = vpop.f32.mrf.mxu0
        %v1784 = vadd.f32 %v801, %v1783
        %1785 = vmatprep.mubr.bf16.mxu0 0
        %1786 = vmatmul.mubr.bf16.gmra.mxu0 %v911
        %v1787 = vpop.f32.mrf.mxu0
        %v1788 = vadd.f32 %v797, %v1787
        %v1789 = vpop.f32.mrf.mxu0
        %v1790 = vadd.f32 %v801, %v1789
        %v1791 = vpop.f32.mrf.mxu0
        %v1792 = vadd.f32 %v797, %v1791
        %v1793 = vpop.f32.mrf.mxu0
        %v1794 = vadd.f32 %v801, %v1793
        %1795 = vmatprep.mubr.bf16.mxu0 0
        %1796 = vmatmul.mubr.bf16.gmra.mxu0 %v914
        %v1797 = vpop.f32.mrf.mxu0
        %v1798 = vadd.f32 %v797, %v1797
        %v1799 = vpop.f32.mrf.mxu0
        %v1800 = vadd.f32 %v801, %v1799
        %v1801 = vpop.f32.mrf.mxu0
        %v1802 = vadd.f32 %v797, %v1801
        %v1803 = vpop.f32.mrf.mxu0
        %v1804 = vadd.f32 %v801, %v1803
        %1805 = vmatprep.mubr.bf16.mxu0 0
        %1806 = vmatmul.mubr.bf16.gmra.mxu0 %v917
        %v1807 = vpop.f32.mrf.mxu0
        %v1808 = vadd.f32 %v797, %v1807
        %v1809 = vpop.f32.mrf.mxu0
        %v1810 = vadd.f32 %v801, %v1809
        %v1811 = vpop.f32.mrf.mxu0
        %v1812 = vadd.f32 %v797, %v1811
        %v1813 = vpop.f32.mrf.mxu0
        %v1814 = vadd.f32 %v801, %v1813
        %1815 = vmatprep.mubr.bf16.mxu0 0
        %1816 = vmatmul.mubr.bf16.gmra.mxu0 %v920
        %v1817 = vpop.f32.mrf.mxu0
        %v1818 = vadd.f32 %v797, %v1817
        %v1819 = vpop.f32.mrf.mxu0
        %v1820 = vadd.f32 %v801, %v1819
        %v1821 = vpop.f32.mrf.mxu0
        %v1822 = vadd.f32 %v797, %v1821
        %v1823 = vpop.f32.mrf.mxu0
        %v1824 = vadd.f32 %v801, %v1823
        %1825 = vdwg.mxu0
        %v1826 = vlaneseq
        %v1827 = vand.u32 %v1826, 127
        %v1828 = vld [vmem:[%s481] sm:$0xff]
        %v1829 = vld [vmem:[%s481 + $0x8] sm:$0xff]
        %v1830 = vld [vmem:[%s481 + $0x10] sm:$0xff]
        %v1831 = vld [vmem:[%s481 + $0x18] sm:$0xff]
        %v1832 = vld [vmem:[%s481 + $0x20] sm:$0xff]
        %v1833 = vld [vmem:[%s481 + $0x28] sm:$0xff]
        %v1834 = vld [vmem:[%s481 + $0x30] sm:$0xff]
        %v1835 = vld [vmem:[%s481 + $0x38] sm:$0xff]
        %v1836 = vld [vmem:[%s481 + $0x40] sm:$0xff]
        %v1837 = vld [vmem:[%s481 + $0x48] sm:$0xff]
        %v1838 = vld [vmem:[%s481 + $0x50] sm:$0xff]
        %v1839 = vld [vmem:[%s481 + $0x58] sm:$0xff]
        %v1840 = vld [vmem:[%s481 + $0x60] sm:$0xff]
        %v1841 = vld [vmem:[%s481 + $0x68] sm:$0xff]
        %v1842 = vld [vmem:[%s481 + $0x70] sm:$0xff]
        %v1843 = vld [vmem:[%s481 + $0x78] sm:$0xff]
        %1844 = vset.pattern.permute.xlu0 0
        %1845 = vperm.xlu0 %1844, %v1828
        %v1846 = vpop.permute.xlu0 %1845
        %1847 = vset.pattern.permute.xlu0 0
        %1848 = vperm.xlu0 %1847, %v1829
        %v1849 = vpop.permute.xlu0 %1848
        %1850 = vset.pattern.permute.xlu0 0
        %1851 = vperm.xlu0 %1850, %v1830
        %v1852 = vpop.permute.xlu0 %1851
        %1853 = vset.pattern.permute.xlu0 0
        %1854 = vperm.xlu0 %1853, %v1831
        %v1855 = vpop.permute.xlu0 %1854
        %1856 = vset.pattern.permute.xlu0 0
        %1857 = vperm.xlu0 %1856, %v1832
        %v1858 = vpop.permute.xlu0 %1857
        %1859 = vset.pattern.permute.xlu0 0
        %1860 = vperm.xlu0 %1859, %v1833
        %v1861 = vpop.permute.xlu0 %1860
        %1862 = vset.pattern.permute.xlu0 0
        %1863 = vperm.xlu0 %1862, %v1834
        %v1864 = vpop.permute.xlu0 %1863
        %1865 = vset.pattern.permute.xlu0 0
        %1866 = vperm.xlu0 %1865, %v1835
        %v1867 = vpop.permute.xlu0 %1866
        %1868 = vset.pattern.permute.xlu0 0
        %1869 = vperm.xlu0 %1868, %v1836
        %v1870 = vpop.permute.xlu0 %1869
        %1871 = vset.pattern.permute.xlu0 0
        %1872 = vperm.xlu0 %1871, %v1837
        %v1873 = vpop.permute.xlu0 %1872
        %1874 = vset.pattern.permute.xlu0 0
        %1875 = vperm.xlu0 %1874, %v1838
        %v1876 = vpop.permute.xlu0 %1875
        %1877 = vset.pattern.permute.xlu0 0
        %1878 = vperm.xlu0 %1877, %v1839
        %v1879 = vpop.permute.xlu0 %1878
        %1880 = vset.pattern.permute.xlu0 0
        %1881 = vperm.xlu0 %1880, %v1840
        %v1882 = vpop.permute.xlu0 %1881
        %1883 = vset.pattern.permute.xlu0 0
        %1884 = vperm.xlu0 %1883, %v1841
        %v1885 = vpop.permute.xlu0 %1884
        %1886 = vset.pattern.permute.xlu0 0
        %1887 = vperm.xlu0 %1886, %v1842
        %v1888 = vpop.permute.xlu0 %1887
        %1889 = vset.pattern.permute.xlu0 0
        %1890 = vperm.xlu0 %1889, %v1843
        %v1891 = vpop.permute.xlu0 %1890
        %vm1892 = vcmp.eq.s32.totalorder %v1827, %v1846
        %vm1893 = vcmp.eq.s32.totalorder %v1827, %v1849
        %vm1894 = vcmp.eq.s32.totalorder %v1827, %v1852
        %vm1895 = vcmp.eq.s32.totalorder %v1827, %v1855
        %vm1896 = vcmp.eq.s32.totalorder %v1827, %v1858
        %vm1897 = vcmp.eq.s32.totalorder %v1827, %v1861
        %vm1898 = vcmp.eq.s32.totalorder %v1827, %v1864
        %vm1899 = vcmp.eq.s32.totalorder %v1827, %v1867
        %vm1900 = vcmp.eq.s32.totalorder %v1827, %v1870
        %vm1901 = vcmp.eq.s32.totalorder %v1827, %v1873
        %vm1902 = vcmp.eq.s32.totalorder %v1827, %v1876
        %vm1903 = vcmp.eq.s32.totalorder %v1827, %v1879
        %vm1904 = vcmp.eq.s32.totalorder %v1827, %v1882
        %vm1905 = vcmp.eq.s32.totalorder %v1827, %v1885
        %vm1906 = vcmp.eq.s32.totalorder %v1827, %v1888
        %vm1907 = vcmp.eq.s32.totalorder %v1827, %v1891
        %v1908 = vsel %vm1892, 1, 0
        %v1909 = vsel %vm1893, 1, 0
        %v1910 = vsel %vm1894, 1, 0
        %v1911 = vsel %vm1895, 1, 0
        %v1912 = vsel %vm1896, 1, 0
        %v1913 = vsel %vm1897, 1, 0
        %v1914 = vsel %vm1898, 1, 0
        %v1915 = vsel %vm1899, 1, 0
        %v1916 = vsel %vm1900, 1, 0
        %v1917 = vsel %vm1901, 1, 0
        %v1918 = vsel %vm1902, 1, 0
        %v1919 = vsel %vm1903, 1, 0
        %v1920 = vsel %vm1904, 1, 0
        %v1921 = vsel %vm1905, 1, 0
        %v1922 = vsel %vm1906, 1, 0
        %v1923 = vsel %vm1907, 1, 0
        %v1924 = vcvt.s32.f32 %v1908
        %v1925 = vcvt.s32.f32 %v1909
        %v1926 = vcvt.s32.f32 %v1910
        %v1927 = vcvt.s32.f32 %v1911
        %v1928 = vcvt.s32.f32 %v1912
        %v1929 = vcvt.s32.f32 %v1913
        %v1930 = vcvt.s32.f32 %v1914
        %v1931 = vcvt.s32.f32 %v1915
        %v1932 = vcvt.s32.f32 %v1916
        %v1933 = vcvt.s32.f32 %v1917
        %v1934 = vcvt.s32.f32 %v1918
        %v1935 = vcvt.s32.f32 %v1919
        %v1936 = vcvt.s32.f32 %v1920
        %v1937 = vcvt.s32.f32 %v1921
        %v1938 = vcvt.s32.f32 %v1922
        %v1939 = vcvt.s32.f32 %v1923
        %v1940 = vpack.c.bf16 %v1925, %v1924
        %v1941 = vpack.c.bf16 %v1927, %v1926
        %v1942 = vpack.c.bf16 %v1929, %v1928
        %v1943 = vpack.c.bf16 %v1931, %v1930
        %v1944 = vpack.c.bf16 %v1933, %v1932
        %v1945 = vpack.c.bf16 %v1935, %v1934
        %v1946 = vpack.c.bf16 %v1937, %v1936
        %v1947 = vpack.c.bf16 %v1939, %v1938
        %v1948 = vld [vmem:[%s4] sm:$0xf]
        %vm1949 = vcmask 64512
        %v1951 = vsel %vm1949, %v1940, 0
        %v1954 = vsel %vm1949, %v1941, 0
        %v1957 = vsel %vm1949, %v1942, 0
        %v1960 = vsel %vm1949, %v1943, 0
        %v1963 = vsel %vm1949, %v1944, 0
        %v1966 = vsel %vm1949, %v1945, 0
        %v1969 = vsel %vm1949, %v1946, 0
        %v1972 = vsel %vm1949, %v1947, 0
        %vm1974 = vcmask 1043456
        %v1976 = vsel %vm1974, %v1948, 0
        %1978 = vmatprep.subr.bf16.mxu0 0
        %1979 = vmatpush1.bf16.msra.mxu0 0
        %1980 = vmatprep.subr.bf16.mxu0 0
        %1981 = vmatpush1.bf16.msra.mxu0 0
        %1982 = vmatprep.subr.bf16.mxu0 0
        %1983 = vmatpush1.bf16.msra.mxu0 0
        %1984 = vmatprep.subr.bf16.mxu0 0
        %1985 = vmatpush1.bf16.msra.mxu0 0
        %1986 = vmatprep.subr.bf16.mxu0 0
        %1987 = vmatpush1.bf16.msra.mxu0 0
        %1988 = vmatprep.subr.bf16.mxu0 0
        %1989 = vmatpush1.bf16.msra.mxu0 0
        %1990 = vmatprep.subr.bf16.mxu0 0
        %1991 = vmatpush1.bf16.msra.mxu0 0
        %1992 = vmatprep.subr.bf16.mxu0 0
        %1993 = vmatpush1.bf16.msra.mxu0 %v1976
        %1994 = vmatprep.subr.bf16.mxu0 0
        %1995 = vmatpush2.bf16.msra.mxu0 0
        %1996 = vmatprep.subr.bf16.mxu0 0
        %1997 = vmatpush2.bf16.msra.mxu0 0
        %1998 = vmatprep.subr.bf16.mxu0 0
        %1999 = vmatpush2.bf16.msra.mxu0 0
        %2000 = vmatprep.subr.bf16.mxu0 0
        %2001 = vmatpush2.bf16.msra.mxu0 0
        %2002 = vmatprep.subr.bf16.mxu0 0
        %2003 = vmatpush2.bf16.msra.mxu0 0
        %2004 = vmatprep.subr.bf16.mxu0 0
        %2005 = vmatpush2.bf16.msra.mxu0 0
        %2006 = vmatprep.subr.bf16.mxu0 0
        %2007 = vmatpush2.bf16.msra.mxu0 0
        %2008 = vmatprep.subr.bf16.mxu0 0
        %2009 = vmatpush2.bf16.msra.mxu0 0
        %2010 = vmatprep.mubr.bf16.mxu0 0
        %2011 = vmatmul.mubr.bf16.gmra.mxu0 %v1951
        %v2012 = vpop.f32.mrf.mxu0
        %v2013 = vadd.f32 0.0, %v2012
        %v2014 = vpop.f32.mrf.mxu0
        %v2015 = vpop.f32.mrf.mxu0
        %v2016 = vadd.f32 0.0, %v2015
        %v2017 = vpop.f32.mrf.mxu0
        %2018 = vmatprep.mubr.bf16.mxu0 0
        %2019 = vmatmul.mubr.bf16.gmra.mxu0 %v1954
        %v2020 = vpop.f32.mrf.mxu0
        %v2021 = vadd.f32 0.0, %v2020
        %v2022 = vpop.f32.mrf.mxu0
        %v2023 = vpop.f32.mrf.mxu0
        %v2024 = vadd.f32 0.0, %v2023
        %v2025 = vpop.f32.mrf.mxu0
        %2026 = vmatprep.mubr.bf16.mxu0 0
        %2027 = vmatmul.mubr.bf16.gmra.mxu0 %v1957
        %v2028 = vpop.f32.mrf.mxu0
        %v2029 = vadd.f32 0.0, %v2028
        %v2030 = vpop.f32.mrf.mxu0
        %v2031 = vpop.f32.mrf.mxu0
        %v2032 = vadd.f32 0.0, %v2031
        %v2033 = vpop.f32.mrf.mxu0
        %2034 = vmatprep.mubr.bf16.mxu0 0
        %2035 = vmatmul.mubr.bf16.gmra.mxu0 %v1960
        %v2036 = vpop.f32.mrf.mxu0
        %v2037 = vadd.f32 0.0, %v2036
        %v2038 = vpop.f32.mrf.mxu0
        %v2039 = vpop.f32.mrf.mxu0
        %v2040 = vadd.f32 0.0, %v2039
        %v2041 = vpop.f32.mrf.mxu0
        %2042 = vmatprep.mubr.bf16.mxu0 0
        %2043 = vmatmul.mubr.bf16.gmra.mxu0 %v1963
        %v2044 = vpop.f32.mrf.mxu0
        %v2045 = vadd.f32 0.0, %v2044
        %v2046 = vpop.f32.mrf.mxu0
        %v2047 = vpop.f32.mrf.mxu0
        %v2048 = vadd.f32 0.0, %v2047
        %v2049 = vpop.f32.mrf.mxu0
        %2050 = vmatprep.mubr.bf16.mxu0 0
        %2051 = vmatmul.mubr.bf16.gmra.mxu0 %v1966
        %v2052 = vpop.f32.mrf.mxu0
        %v2053 = vadd.f32 0.0, %v2052
        %v2054 = vpop.f32.mrf.mxu0
        %v2055 = vpop.f32.mrf.mxu0
        %v2056 = vadd.f32 0.0, %v2055
        %v2057 = vpop.f32.mrf.mxu0
        %2058 = vmatprep.mubr.bf16.mxu0 0
        %2059 = vmatmul.mubr.bf16.gmra.mxu0 %v1969
        %v2060 = vpop.f32.mrf.mxu0
        %v2061 = vadd.f32 0.0, %v2060
        %v2062 = vpop.f32.mrf.mxu0
        %v2063 = vpop.f32.mrf.mxu0
        %v2064 = vadd.f32 0.0, %v2063
        %v2065 = vpop.f32.mrf.mxu0
        %2066 = vmatprep.mubr.bf16.mxu0 0
        %2067 = vmatmul.mubr.bf16.gmra.mxu0 %v1972
        %v2068 = vpop.f32.mrf.mxu0
        %v2069 = vadd.f32 0.0, %v2068
        %v2070 = vpop.f32.mrf.mxu0
        %v2071 = vpop.f32.mrf.mxu0
        %v2072 = vadd.f32 0.0, %v2071
        %v2073 = vpop.f32.mrf.mxu0
        %2074 = vdwg.mxu0
        %2076 = vset.pattern.permute.xlu0 0
        %2077 = vperm.xlu0 %2076, %v2013
        %v2078 = vpop.permute.xlu0 %2077
        %2081 = vset.pattern.permute.xlu0 0
        %2082 = vperm.xlu0 %2081, %v2016
        %v2083 = vpop.permute.xlu0 %2082
        %2086 = vset.pattern.permute.xlu0 0
        %2087 = vperm.xlu0 %2086, %v2021
        %v2088 = vpop.permute.xlu0 %2087
        %2091 = vset.pattern.permute.xlu0 0
        %2092 = vperm.xlu0 %2091, %v2024
        %v2093 = vpop.permute.xlu0 %2092
        %2096 = vset.pattern.permute.xlu0 0
        %2097 = vperm.xlu0 %2096, %v2029
        %v2098 = vpop.permute.xlu0 %2097
        %2101 = vset.pattern.permute.xlu0 0
        %2102 = vperm.xlu0 %2101, %v2032
        %v2103 = vpop.permute.xlu0 %2102
        %2106 = vset.pattern.permute.xlu0 0
        %2107 = vperm.xlu0 %2106, %v2037
        %v2108 = vpop.permute.xlu0 %2107
        %2111 = vset.pattern.permute.xlu0 0
        %2112 = vperm.xlu0 %2111, %v2040
        %v2113 = vpop.permute.xlu0 %2112
        %2116 = vset.pattern.permute.xlu0 0
        %2117 = vperm.xlu0 %2116, %v2045
        %v2118 = vpop.permute.xlu0 %2117
        %2121 = vset.pattern.permute.xlu0 0
        %2122 = vperm.xlu0 %2121, %v2048
        %v2123 = vpop.permute.xlu0 %2122
        %2126 = vset.pattern.permute.xlu0 0
        %2127 = vperm.xlu0 %2126, %v2053
        %v2128 = vpop.permute.xlu0 %2127
        %2131 = vset.pattern.permute.xlu0 0
        %2132 = vperm.xlu0 %2131, %v2056
        %v2133 = vpop.permute.xlu0 %2132
        %2136 = vset.pattern.permute.xlu0 0
        %2137 = vperm.xlu0 %2136, %v2061
        %v2138 = vpop.permute.xlu0 %2137
        %2141 = vset.pattern.permute.xlu0 0
        %2142 = vperm.xlu0 %2141, %v2064
        %v2143 = vpop.permute.xlu0 %2142
        %2146 = vset.pattern.permute.xlu0 0
        %2147 = vperm.xlu0 %2146, %v2069
        %v2148 = vpop.permute.xlu0 %2147
        %2151 = vset.pattern.permute.xlu0 0
        %2152 = vperm.xlu0 %2151, %v2072
        %v2153 = vpop.permute.xlu0 %2152
        %v2155 = vmul.f32 %v957, %v2078
        %v2156 = vmul.f32 %v961, %v2083
        %v2157 = vmul.f32 %v967, %v2088
        %v2158 = vmul.f32 %v971, %v2093
        %v2159 = vmul.f32 %v977, %v2098
        %v2160 = vmul.f32 %v981, %v2103
        %v2161 = vmul.f32 %v987, %v2108
        %v2162 = vmul.f32 %v991, %v2113
        %v2163 = vmul.f32 %v997, %v2118
        %v2164 = vmul.f32 %v1001, %v2123
        %v2165 = vmul.f32 %v1007, %v2128
        %v2166 = vmul.f32 %v1011, %v2133
        %v2167 = vmul.f32 %v1017, %v2138
        %v2168 = vmul.f32 %v1021, %v2143
        %v2169 = vmul.f32 %v1027, %v2148
        %v2170 = vmul.f32 %v1031, %v2153
        %2171 = vset.pattern.permute.xlu0 1
        %2172 = vperm.xlu0 %2171, %v2013
        %v2173 = vpop.permute.xlu0 %2172
        %2175 = vset.pattern.permute.xlu0 1
        %2176 = vperm.xlu0 %2175, %v2016
        %v2177 = vpop.permute.xlu0 %2176
        %2179 = vset.pattern.permute.xlu0 1
        %2180 = vperm.xlu0 %2179, %v2021
        %v2181 = vpop.permute.xlu0 %2180
        %2183 = vset.pattern.permute.xlu0 1
        %2184 = vperm.xlu0 %2183, %v2024
        %v2185 = vpop.permute.xlu0 %2184
        %2187 = vset.pattern.permute.xlu0 1
        %2188 = vperm.xlu0 %2187, %v2029
        %v2189 = vpop.permute.xlu0 %2188
        %2191 = vset.pattern.permute.xlu0 1
        %2192 = vperm.xlu0 %2191, %v2032
        %v2193 = vpop.permute.xlu0 %2192
        %2195 = vset.pattern.permute.xlu0 1
        %2196 = vperm.xlu0 %2195, %v2037
        %v2197 = vpop.permute.xlu0 %2196
        %2199 = vset.pattern.permute.xlu0 1
        %2200 = vperm.xlu0 %2199, %v2040
        %v2201 = vpop.permute.xlu0 %2200
        %2203 = vset.pattern.permute.xlu0 1
        %2204 = vperm.xlu0 %2203, %v2045
        %v2205 = vpop.permute.xlu0 %2204
        %2207 = vset.pattern.permute.xlu0 1
        %2208 = vperm.xlu0 %2207, %v2048
        %v2209 = vpop.permute.xlu0 %2208
        %2211 = vset.pattern.permute.xlu0 1
        %2212 = vperm.xlu0 %2211, %v2053
        %v2213 = vpop.permute.xlu0 %2212
        %2215 = vset.pattern.permute.xlu0 1
        %2216 = vperm.xlu0 %2215, %v2056
        %v2217 = vpop.permute.xlu0 %2216
        %2219 = vset.pattern.permute.xlu0 1
        %2220 = vperm.xlu0 %2219, %v2061
        %v2221 = vpop.permute.xlu0 %2220
        %2223 = vset.pattern.permute.xlu0 1
        %2224 = vperm.xlu0 %2223, %v2064
        %v2225 = vpop.permute.xlu0 %2224
        %2227 = vset.pattern.permute.xlu0 1
        %2228 = vperm.xlu0 %2227, %v2069
        %v2229 = vpop.permute.xlu0 %2228
        %2231 = vset.pattern.permute.xlu0 1
        %2232 = vperm.xlu0 %2231, %v2072
        %v2233 = vpop.permute.xlu0 %2232
        %v2235 = vmul.f32 %v959, %v2173
        %v2236 = vmul.f32 %v963, %v2177
        %v2237 = vmul.f32 %v969, %v2181
        %v2238 = vmul.f32 %v973, %v2185
        %v2239 = vmul.f32 %v979, %v2189
        %v2240 = vmul.f32 %v983, %v2193
        %v2241 = vmul.f32 %v989, %v2197
        %v2242 = vmul.f32 %v993, %v2201
        %v2243 = vmul.f32 %v999, %v2205
        %v2244 = vmul.f32 %v1003, %v2209
        %v2245 = vmul.f32 %v1009, %v2213
        %v2246 = vmul.f32 %v1013, %v2217
        %v2247 = vmul.f32 %v1019, %v2221
        %v2248 = vmul.f32 %v1023, %v2225
        %v2249 = vmul.f32 %v1029, %v2229
        %v2250 = vmul.f32 %v1033, %v2233
        %2251 = vset.pattern.permute.xlu0 2
        %2252 = vperm.xlu0 %2251, %v2013
        %v2253 = vpop.permute.xlu0 %2252
        %2255 = vset.pattern.permute.xlu0 2
        %2256 = vperm.xlu0 %2255, %v2016
        %v2257 = vpop.permute.xlu0 %2256
        %2259 = vset.pattern.permute.xlu0 2
        %2260 = vperm.xlu0 %2259, %v2021
        %v2261 = vpop.permute.xlu0 %2260
        %2263 = vset.pattern.permute.xlu0 2
        %2264 = vperm.xlu0 %2263, %v2024
        %v2265 = vpop.permute.xlu0 %2264
        %2267 = vset.pattern.permute.xlu0 2
        %2268 = vperm.xlu0 %2267, %v2029
        %v2269 = vpop.permute.xlu0 %2268
        %2271 = vset.pattern.permute.xlu0 2
        %2272 = vperm.xlu0 %2271, %v2032
        %v2273 = vpop.permute.xlu0 %2272
        %2275 = vset.pattern.permute.xlu0 2
        %2276 = vperm.xlu0 %2275, %v2037
        %v2277 = vpop.permute.xlu0 %2276
        %2279 = vset.pattern.permute.xlu0 2
        %2280 = vperm.xlu0 %2279, %v2040
        %v2281 = vpop.permute.xlu0 %2280
        %2283 = vset.pattern.permute.xlu0 2
        %2284 = vperm.xlu0 %2283, %v2045
        %v2285 = vpop.permute.xlu0 %2284
        %2287 = vset.pattern.permute.xlu0 2
        %2288 = vperm.xlu0 %2287, %v2048
        %v2289 = vpop.permute.xlu0 %2288
        %2291 = vset.pattern.permute.xlu0 2
        %2292 = vperm.xlu0 %2291, %v2053
        %v2293 = vpop.permute.xlu0 %2292
        %2295 = vset.pattern.permute.xlu0 2
        %2296 = vperm.xlu0 %2295, %v2056
        %v2297 = vpop.permute.xlu0 %2296
        %2299 = vset.pattern.permute.xlu0 2
        %2300 = vperm.xlu0 %2299, %v2061
        %v2301 = vpop.permute.xlu0 %2300
        %2303 = vset.pattern.permute.xlu0 2
        %2304 = vperm.xlu0 %2303, %v2064
        %v2305 = vpop.permute.xlu0 %2304
        %2307 = vset.pattern.permute.xlu0 2
        %2308 = vperm.xlu0 %2307, %v2069
        %v2309 = vpop.permute.xlu0 %2308
        %2311 = vset.pattern.permute.xlu0 2
        %2312 = vperm.xlu0 %2311, %v2072
        %v2313 = vpop.permute.xlu0 %2312
        %v2315 = vmul.f32 %v1070, %v2253
        %v2316 = vmul.f32 %v1074, %v2257
        %v2317 = vmul.f32 %v1080, %v2261
        %v2318 = vmul.f32 %v1084, %v2265
        %v2319 = vmul.f32 %v1090, %v2269
        %v2320 = vmul.f32 %v1094, %v2273
        %v2321 = vmul.f32 %v1100, %v2277
        %v2322 = vmul.f32 %v1104, %v2281
        %v2323 = vmul.f32 %v1110, %v2285
        %v2324 = vmul.f32 %v1114, %v2289
        %v2325 = vmul.f32 %v1120, %v2293
        %v2326 = vmul.f32 %v1124, %v2297
        %v2327 = vmul.f32 %v1130, %v2301
        %v2328 = vmul.f32 %v1134, %v2305
        %v2329 = vmul.f32 %v1140, %v2309
        %v2330 = vmul.f32 %v1144, %v2313
        %2331 = vset.pattern.permute.xlu0 3
        %2332 = vperm.xlu0 %2331, %v2013
        %v2333 = vpop.permute.xlu0 %2332
        %2335 = vset.pattern.permute.xlu0 3
        %2336 = vperm.xlu0 %2335, %v2016
        %v2337 = vpop.permute.xlu0 %2336
        %2339 = vset.pattern.permute.xlu0 3
        %2340 = vperm.xlu0 %2339, %v2021
        %v2341 = vpop.permute.xlu0 %2340
        %2343 = vset.pattern.permute.xlu0 3
        %2344 = vperm.xlu0 %2343, %v2024
        %v2345 = vpop.permute.xlu0 %2344
        %2347 = vset.pattern.permute.xlu0 3
        %2348 = vperm.xlu0 %2347, %v2029
        %v2349 = vpop.permute.xlu0 %2348
        %2351 = vset.pattern.permute.xlu0 3
        %2352 = vperm.xlu0 %2351, %v2032
        %v2353 = vpop.permute.xlu0 %2352
        %2355 = vset.pattern.permute.xlu0 3
        %2356 = vperm.xlu0 %2355, %v2037
        %v2357 = vpop.permute.xlu0 %2356
        %2359 = vset.pattern.permute.xlu0 3
        %2360 = vperm.xlu0 %2359, %v2040
        %v2361 = vpop.permute.xlu0 %2360
        %2363 = vset.pattern.permute.xlu0 3
        %2364 = vperm.xlu0 %2363, %v2045
        %v2365 = vpop.permute.xlu0 %2364
        %2367 = vset.pattern.permute.xlu0 3
        %2368 = vperm.xlu0 %2367, %v2048
        %v2369 = vpop.permute.xlu0 %2368
        %2371 = vset.pattern.permute.xlu0 3
        %2372 = vperm.xlu0 %2371, %v2053
        %v2373 = vpop.permute.xlu0 %2372
        %2375 = vset.pattern.permute.xlu0 3
        %2376 = vperm.xlu0 %2375, %v2056
        %v2377 = vpop.permute.xlu0 %2376
        %2379 = vset.pattern.permute.xlu0 3
        %2380 = vperm.xlu0 %2379, %v2061
        %v2381 = vpop.permute.xlu0 %2380
        %2383 = vset.pattern.permute.xlu0 3
        %2384 = vperm.xlu0 %2383, %v2064
        %v2385 = vpop.permute.xlu0 %2384
        %2387 = vset.pattern.permute.xlu0 3
        %2388 = vperm.xlu0 %2387, %v2069
        %v2389 = vpop.permute.xlu0 %2388
        %2391 = vset.pattern.permute.xlu0 3
        %2392 = vperm.xlu0 %2391, %v2072
        %v2393 = vpop.permute.xlu0 %2392
        %v2395 = vmul.f32 %v1072, %v2333
        %v2396 = vmul.f32 %v1076, %v2337
        %v2397 = vmul.f32 %v1082, %v2341
        %v2398 = vmul.f32 %v1086, %v2345
        %v2399 = vmul.f32 %v1092, %v2349
        %v2400 = vmul.f32 %v1096, %v2353
        %v2401 = vmul.f32 %v1102, %v2357
        %v2402 = vmul.f32 %v1106, %v2361
        %v2403 = vmul.f32 %v1112, %v2365
        %v2404 = vmul.f32 %v1116, %v2369
        %v2405 = vmul.f32 %v1122, %v2373
        %v2406 = vmul.f32 %v1126, %v2377
        %v2407 = vmul.f32 %v1132, %v2381
        %v2408 = vmul.f32 %v1136, %v2385
        %v2409 = vmul.f32 %v1142, %v2389
        %v2410 = vmul.f32 %v1146, %v2393
        %2411 = vset.pattern.permute.xlu0 4
        %2412 = vperm.xlu0 %2411, %v2013
        %v2413 = vpop.permute.xlu0 %2412
        %2415 = vset.pattern.permute.xlu0 4
        %2416 = vperm.xlu0 %2415, %v2016
        %v2417 = vpop.permute.xlu0 %2416
        %2419 = vset.pattern.permute.xlu0 4
        %2420 = vperm.xlu0 %2419, %v2021
        %v2421 = vpop.permute.xlu0 %2420
        %2423 = vset.pattern.permute.xlu0 4
        %2424 = vperm.xlu0 %2423, %v2024
        %v2425 = vpop.permute.xlu0 %2424
        %2427 = vset.pattern.permute.xlu0 4
        %2428 = vperm.xlu0 %2427, %v2029
        %v2429 = vpop.permute.xlu0 %2428
        %2431 = vset.pattern.permute.xlu0 4
        %2432 = vperm.xlu0 %2431, %v2032
        %v2433 = vpop.permute.xlu0 %2432
        %2435 = vset.pattern.permute.xlu0 4
        %2436 = vperm.xlu0 %2435, %v2037
        %v2437 = vpop.permute.xlu0 %2436
        %2439 = vset.pattern.permute.xlu0 4
        %2440 = vperm.xlu0 %2439, %v2040
        %v2441 = vpop.permute.xlu0 %2440
        %2443 = vset.pattern.permute.xlu0 4
        %2444 = vperm.xlu0 %2443, %v2045
        %v2445 = vpop.permute.xlu0 %2444
        %2447 = vset.pattern.permute.xlu0 4
        %2448 = vperm.xlu0 %2447, %v2048
        %v2449 = vpop.permute.xlu0 %2448
        %2451 = vset.pattern.permute.xlu0 4
        %2452 = vperm.xlu0 %2451, %v2053
        %v2453 = vpop.permute.xlu0 %2452
        %2455 = vset.pattern.permute.xlu0 4
        %2456 = vperm.xlu0 %2455, %v2056
        %v2457 = vpop.permute.xlu0 %2456
        %2459 = vset.pattern.permute.xlu0 4
        %2460 = vperm.xlu0 %2459, %v2061
        %v2461 = vpop.permute.xlu0 %2460
        %2463 = vset.pattern.permute.xlu0 4
        %2464 = vperm.xlu0 %2463, %v2064
        %v2465 = vpop.permute.xlu0 %2464
        %2467 = vset.pattern.permute.xlu0 4
        %2468 = vperm.xlu0 %2467, %v2069
        %v2469 = vpop.permute.xlu0 %2468
        %2471 = vset.pattern.permute.xlu0 4
        %2472 = vperm.xlu0 %2471, %v2072
        %v2473 = vpop.permute.xlu0 %2472
        %v2475 = vmul.f32 %v1183, %v2413
        %v2476 = vmul.f32 %v1187, %v2417
        %v2477 = vmul.f32 %v1193, %v2421
        %v2478 = vmul.f32 %v1197, %v2425
        %v2479 = vmul.f32 %v1203, %v2429
        %v2480 = vmul.f32 %v1207, %v2433
        %v2481 = vmul.f32 %v1213, %v2437
        %v2482 = vmul.f32 %v1217, %v2441
        %v2483 = vmul.f32 %v1223, %v2445
        %v2484 = vmul.f32 %v1227, %v2449
        %v2485 = vmul.f32 %v1233, %v2453
        %v2486 = vmul.f32 %v1237, %v2457
        %v2487 = vmul.f32 %v1243, %v2461
        %v2488 = vmul.f32 %v1247, %v2465
        %v2489 = vmul.f32 %v1253, %v2469
        %v2490 = vmul.f32 %v1257, %v2473
        %2491 = vset.pattern.permute.xlu0 5
        %2492 = vperm.xlu0 %2491, %v2013
        %v2493 = vpop.permute.xlu0 %2492
        %2495 = vset.pattern.permute.xlu0 5
        %2496 = vperm.xlu0 %2495, %v2016
        %v2497 = vpop.permute.xlu0 %2496
        %2499 = vset.pattern.permute.xlu0 5
        %2500 = vperm.xlu0 %2499, %v2021
        %v2501 = vpop.permute.xlu0 %2500
        %2503 = vset.pattern.permute.xlu0 5
        %2504 = vperm.xlu0 %2503, %v2024
        %v2505 = vpop.permute.xlu0 %2504
        %2507 = vset.pattern.permute.xlu0 5
        %2508 = vperm.xlu0 %2507, %v2029
        %v2509 = vpop.permute.xlu0 %2508
        %2511 = vset.pattern.permute.xlu0 5
        %2512 = vperm.xlu0 %2511, %v2032
        %v2513 = vpop.permute.xlu0 %2512
        %2515 = vset.pattern.permute.xlu0 5
        %2516 = vperm.xlu0 %2515, %v2037
        %v2517 = vpop.permute.xlu0 %2516
        %2519 = vset.pattern.permute.xlu0 5
        %2520 = vperm.xlu0 %2519, %v2040
        %v2521 = vpop.permute.xlu0 %2520
        %2523 = vset.pattern.permute.xlu0 5
        %2524 = vperm.xlu0 %2523, %v2045
        %v2525 = vpop.permute.xlu0 %2524
        %2527 = vset.pattern.permute.xlu0 5
        %2528 = vperm.xlu0 %2527, %v2048
        %v2529 = vpop.permute.xlu0 %2528
        %2531 = vset.pattern.permute.xlu0 5
        %2532 = vperm.xlu0 %2531, %v2053
        %v2533 = vpop.permute.xlu0 %2532
        %2535 = vset.pattern.permute.xlu0 5
        %2536 = vperm.xlu0 %2535, %v2056
        %v2537 = vpop.permute.xlu0 %2536
        %2539 = vset.pattern.permute.xlu0 5
        %2540 = vperm.xlu0 %2539, %v2061
        %v2541 = vpop.permute.xlu0 %2540
        %2543 = vset.pattern.permute.xlu0 5
        %2544 = vperm.xlu0 %2543, %v2064
        %v2545 = vpop.permute.xlu0 %2544
        %2547 = vset.pattern.permute.xlu0 5
        %2548 = vperm.xlu0 %2547, %v2069
        %v2549 = vpop.permute.xlu0 %2548
        %2551 = vset.pattern.permute.xlu0 5
        %2552 = vperm.xlu0 %2551, %v2072
        %v2553 = vpop.permute.xlu0 %2552
        %v2555 = vmul.f32 %v1185, %v2493
        %v2556 = vmul.f32 %v1189, %v2497
        %v2557 = vmul.f32 %v1195, %v2501
        %v2558 = vmul.f32 %v1199, %v2505
        %v2559 = vmul.f32 %v1205, %v2509
        %v2560 = vmul.f32 %v1209, %v2513
        %v2561 = vmul.f32 %v1215, %v2517
        %v2562 = vmul.f32 %v1219, %v2521
        %v2563 = vmul.f32 %v1225, %v2525
        %v2564 = vmul.f32 %v1229, %v2529
        %v2565 = vmul.f32 %v1235, %v2533
        %v2566 = vmul.f32 %v1239, %v2537
        %v2567 = vmul.f32 %v1245, %v2541
        %v2568 = vmul.f32 %v1249, %v2545
        %v2569 = vmul.f32 %v1255, %v2549
        %v2570 = vmul.f32 %v1259, %v2553
        %2571 = vset.pattern.permute.xlu0 6
        %2572 = vperm.xlu0 %2571, %v2013
        %v2573 = vpop.permute.xlu0 %2572
        %2575 = vset.pattern.permute.xlu0 6
        %2576 = vperm.xlu0 %2575, %v2016
        %v2577 = vpop.permute.xlu0 %2576
        %2579 = vset.pattern.permute.xlu0 6
        %2580 = vperm.xlu0 %2579, %v2021
        %v2581 = vpop.permute.xlu0 %2580
        %2583 = vset.pattern.permute.xlu0 6
        %2584 = vperm.xlu0 %2583, %v2024
        %v2585 = vpop.permute.xlu0 %2584
        %2587 = vset.pattern.permute.xlu0 6
        %2588 = vperm.xlu0 %2587, %v2029
        %v2589 = vpop.permute.xlu0 %2588
        %2591 = vset.pattern.permute.xlu0 6
        %2592 = vperm.xlu0 %2591, %v2032
        %v2593 = vpop.permute.xlu0 %2592
        %2595 = vset.pattern.permute.xlu0 6
        %2596 = vperm.xlu0 %2595, %v2037
        %v2597 = vpop.permute.xlu0 %2596
        %2599 = vset.pattern.permute.xlu0 6
        %2600 = vperm.xlu0 %2599, %v2040
        %v2601 = vpop.permute.xlu0 %2600
        %2603 = vset.pattern.permute.xlu0 6
        %2604 = vperm.xlu0 %2603, %v2045
        %v2605 = vpop.permute.xlu0 %2604
        %2607 = vset.pattern.permute.xlu0 6
        %2608 = vperm.xlu0 %2607, %v2048
        %v2609 = vpop.permute.xlu0 %2608
        %2611 = vset.pattern.permute.xlu0 6
        %2612 = vperm.xlu0 %2611, %v2053
        %v2613 = vpop.permute.xlu0 %2612
        %2615 = vset.pattern.permute.xlu0 6
        %2616 = vperm.xlu0 %2615, %v2056
        %v2617 = vpop.permute.xlu0 %2616
        %2619 = vset.pattern.permute.xlu0 6
        %2620 = vperm.xlu0 %2619, %v2061
        %v2621 = vpop.permute.xlu0 %2620
        %2623 = vset.pattern.permute.xlu0 6
        %2624 = vperm.xlu0 %2623, %v2064
        %v2625 = vpop.permute.xlu0 %2624
        %2627 = vset.pattern.permute.xlu0 6
        %2628 = vperm.xlu0 %2627, %v2069
        %v2629 = vpop.permute.xlu0 %2628
        %2631 = vset.pattern.permute.xlu0 6
        %2632 = vperm.xlu0 %2631, %v2072
        %v2633 = vpop.permute.xlu0 %2632
        %v2635 = vmul.f32 %v1296, %v2573
        %v2636 = vmul.f32 %v1300, %v2577
        %v2637 = vmul.f32 %v1306, %v2581
        %v2638 = vmul.f32 %v1310, %v2585
        %v2639 = vmul.f32 %v1316, %v2589
        %v2640 = vmul.f32 %v1320, %v2593
        %v2641 = vmul.f32 %v1326, %v2597
        %v2642 = vmul.f32 %v1330, %v2601
        %v2643 = vmul.f32 %v1336, %v2605
        %v2644 = vmul.f32 %v1340, %v2609
        %v2645 = vmul.f32 %v1346, %v2613
        %v2646 = vmul.f32 %v1350, %v2617
        %v2647 = vmul.f32 %v1356, %v2621
        %v2648 = vmul.f32 %v1360, %v2625
        %v2649 = vmul.f32 %v1366, %v2629
        %v2650 = vmul.f32 %v1370, %v2633
        %2651 = vset.pattern.permute.xlu0 7
        %2652 = vperm.xlu0 %2651, %v2013
        %v2653 = vpop.permute.xlu0 %2652
        %2655 = vset.pattern.permute.xlu0 7
        %2656 = vperm.xlu0 %2655, %v2016
        %v2657 = vpop.permute.xlu0 %2656
        %2659 = vset.pattern.permute.xlu0 7
        %2660 = vperm.xlu0 %2659, %v2021
        %v2661 = vpop.permute.xlu0 %2660
        %2663 = vset.pattern.permute.xlu0 7
        %2664 = vperm.xlu0 %2663, %v2024
        %v2665 = vpop.permute.xlu0 %2664
        %2667 = vset.pattern.permute.xlu0 7
        %2668 = vperm.xlu0 %2667, %v2029
        %v2669 = vpop.permute.xlu0 %2668
        %2671 = vset.pattern.permute.xlu0 7
        %2672 = vperm.xlu0 %2671, %v2032
        %v2673 = vpop.permute.xlu0 %2672
        %2675 = vset.pattern.permute.xlu0 7
        %2676 = vperm.xlu0 %2675, %v2037
        %v2677 = vpop.permute.xlu0 %2676
        %2679 = vset.pattern.permute.xlu0 7
        %2680 = vperm.xlu0 %2679, %v2040
        %v2681 = vpop.permute.xlu0 %2680
        %2683 = vset.pattern.permute.xlu0 7
        %2684 = vperm.xlu0 %2683, %v2045
        %v2685 = vpop.permute.xlu0 %2684
        %2687 = vset.pattern.permute.xlu0 7
        %2688 = vperm.xlu0 %2687, %v2048
        %v2689 = vpop.permute.xlu0 %2688
        %2691 = vset.pattern.permute.xlu0 7
        %2692 = vperm.xlu0 %2691, %v2053
        %v2693 = vpop.permute.xlu0 %2692
        %2695 = vset.pattern.permute.xlu0 7
        %2696 = vperm.xlu0 %2695, %v2056
        %v2697 = vpop.permute.xlu0 %2696
        %2699 = vset.pattern.permute.xlu0 7
        %2700 = vperm.xlu0 %2699, %v2061
        %v2701 = vpop.permute.xlu0 %2700
        %2703 = vset.pattern.permute.xlu0 7
        %2704 = vperm.xlu0 %2703, %v2064
        %v2705 = vpop.permute.xlu0 %2704
        %2707 = vset.pattern.permute.xlu0 7
        %2708 = vperm.xlu0 %2707, %v2069
        %v2709 = vpop.permute.xlu0 %2708
        %2711 = vset.pattern.permute.xlu0 7
        %2712 = vperm.xlu0 %2711, %v2072
        %v2713 = vpop.permute.xlu0 %2712
        %v2715 = vmul.f32 %v1298, %v2653
        %v2716 = vmul.f32 %v1302, %v2657
        %v2717 = vmul.f32 %v1308, %v2661
        %v2718 = vmul.f32 %v1312, %v2665
        %v2719 = vmul.f32 %v1318, %v2669
        %v2720 = vmul.f32 %v1322, %v2673
        %v2721 = vmul.f32 %v1328, %v2677
        %v2722 = vmul.f32 %v1332, %v2681
        %v2723 = vmul.f32 %v1338, %v2685
        %v2724 = vmul.f32 %v1342, %v2689
        %v2725 = vmul.f32 %v1348, %v2693
        %v2726 = vmul.f32 %v1352, %v2697
        %v2727 = vmul.f32 %v1358, %v2701
        %v2728 = vmul.f32 %v1362, %v2705
        %v2729 = vmul.f32 %v1368, %v2709
        %v2730 = vmul.f32 %v1372, %v2713
        %2731 = vset.pattern.permute.xlu0 8
        %2732 = vperm.xlu0 %2731, %v2013
        %v2733 = vpop.permute.xlu0 %2732
        %2735 = vset.pattern.permute.xlu0 8
        %2736 = vperm.xlu0 %2735, %v2016
        %v2737 = vpop.permute.xlu0 %2736
        %2739 = vset.pattern.permute.xlu0 8
        %2740 = vperm.xlu0 %2739, %v2021
        %v2741 = vpop.permute.xlu0 %2740
        %2743 = vset.pattern.permute.xlu0 8
        %2744 = vperm.xlu0 %2743, %v2024
        %v2745 = vpop.permute.xlu0 %2744
        %2747 = vset.pattern.permute.xlu0 8
        %2748 = vperm.xlu0 %2747, %v2029
        %v2749 = vpop.permute.xlu0 %2748
        %2751 = vset.pattern.permute.xlu0 8
        %2752 = vperm.xlu0 %2751, %v2032
        %v2753 = vpop.permute.xlu0 %2752
        %2755 = vset.pattern.permute.xlu0 8
        %2756 = vperm.xlu0 %2755, %v2037
        %v2757 = vpop.permute.xlu0 %2756
        %2759 = vset.pattern.permute.xlu0 8
        %2760 = vperm.xlu0 %2759, %v2040
        %v2761 = vpop.permute.xlu0 %2760
        %2763 = vset.pattern.permute.xlu0 8
        %2764 = vperm.xlu0 %2763, %v2045
        %v2765 = vpop.permute.xlu0 %2764
        %2767 = vset.pattern.permute.xlu0 8
        %2768 = vperm.xlu0 %2767, %v2048
        %v2769 = vpop.permute.xlu0 %2768
        %2771 = vset.pattern.permute.xlu0 8
        %2772 = vperm.xlu0 %2771, %v2053
        %v2773 = vpop.permute.xlu0 %2772
        %2775 = vset.pattern.permute.xlu0 8
        %2776 = vperm.xlu0 %2775, %v2056
        %v2777 = vpop.permute.xlu0 %2776
        %2779 = vset.pattern.permute.xlu0 8
        %2780 = vperm.xlu0 %2779, %v2061
        %v2781 = vpop.permute.xlu0 %2780
        %2783 = vset.pattern.permute.xlu0 8
        %2784 = vperm.xlu0 %2783, %v2064
        %v2785 = vpop.permute.xlu0 %2784
        %2787 = vset.pattern.permute.xlu0 8
        %2788 = vperm.xlu0 %2787, %v2069
        %v2789 = vpop.permute.xlu0 %2788
        %2791 = vset.pattern.permute.xlu0 8
        %2792 = vperm.xlu0 %2791, %v2072
        %v2793 = vpop.permute.xlu0 %2792
        %v2795 = vmul.f32 %v1409, %v2733
        %v2796 = vmul.f32 %v1413, %v2737
        %v2797 = vmul.f32 %v1419, %v2741
        %v2798 = vmul.f32 %v1423, %v2745
        %v2799 = vmul.f32 %v1429, %v2749
        %v2800 = vmul.f32 %v1433, %v2753
        %v2801 = vmul.f32 %v1439, %v2757
        %v2802 = vmul.f32 %v1443, %v2761
        %v2803 = vmul.f32 %v1449, %v2765
        %v2804 = vmul.f32 %v1453, %v2769
        %v2805 = vmul.f32 %v1459, %v2773
        %v2806 = vmul.f32 %v1463, %v2777
        %v2807 = vmul.f32 %v1469, %v2781
        %v2808 = vmul.f32 %v1473, %v2785
        %v2809 = vmul.f32 %v1479, %v2789
        %v2810 = vmul.f32 %v1483, %v2793
        %2811 = vset.pattern.permute.xlu0 9
        %2812 = vperm.xlu0 %2811, %v2013
        %v2813 = vpop.permute.xlu0 %2812
        %2815 = vset.pattern.permute.xlu0 9
        %2816 = vperm.xlu0 %2815, %v2016
        %v2817 = vpop.permute.xlu0 %2816
        %2819 = vset.pattern.permute.xlu0 9
        %2820 = vperm.xlu0 %2819, %v2021
        %v2821 = vpop.permute.xlu0 %2820
        %2823 = vset.pattern.permute.xlu0 9
        %2824 = vperm.xlu0 %2823, %v2024
        %v2825 = vpop.permute.xlu0 %2824
        %2827 = vset.pattern.permute.xlu0 9
        %2828 = vperm.xlu0 %2827, %v2029
        %v2829 = vpop.permute.xlu0 %2828
        %2831 = vset.pattern.permute.xlu0 9
        %2832 = vperm.xlu0 %2831, %v2032
        %v2833 = vpop.permute.xlu0 %2832
        %2835 = vset.pattern.permute.xlu0 9
        %2836 = vperm.xlu0 %2835, %v2037
        %v2837 = vpop.permute.xlu0 %2836
        %2839 = vset.pattern.permute.xlu0 9
        %2840 = vperm.xlu0 %2839, %v2040
        %v2841 = vpop.permute.xlu0 %2840
        %2843 = vset.pattern.permute.xlu0 9
        %2844 = vperm.xlu0 %2843, %v2045
        %v2845 = vpop.permute.xlu0 %2844
        %2847 = vset.pattern.permute.xlu0 9
        %2848 = vperm.xlu0 %2847, %v2048
        %v2849 = vpop.permute.xlu0 %2848
        %2851 = vset.pattern.permute.xlu0 9
        %2852 = vperm.xlu0 %2851, %v2053
        %v2853 = vpop.permute.xlu0 %2852
        %2855 = vset.pattern.permute.xlu0 9
        %2856 = vperm.xlu0 %2855, %v2056
        %v2857 = vpop.permute.xlu0 %2856
        %2859 = vset.pattern.permute.xlu0 9
        %2860 = vperm.xlu0 %2859, %v2061
        %v2861 = vpop.permute.xlu0 %2860
        %2863 = vset.pattern.permute.xlu0 9
        %2864 = vperm.xlu0 %2863, %v2064
        %v2865 = vpop.permute.xlu0 %2864
        %2867 = vset.pattern.permute.xlu0 9
        %2868 = vperm.xlu0 %2867, %v2069
        %v2869 = vpop.permute.xlu0 %2868
        %2871 = vset.pattern.permute.xlu0 9
        %2872 = vperm.xlu0 %2871, %v2072
        %v2873 = vpop.permute.xlu0 %2872
        %v2875 = vmul.f32 %v1411, %v2813
        %v2876 = vmul.f32 %v1415, %v2817
        %v2877 = vmul.f32 %v1421, %v2821
        %v2878 = vmul.f32 %v1425, %v2825
        %v2879 = vmul.f32 %v1431, %v2829
        %v2880 = vmul.f32 %v1435, %v2833
        %v2881 = vmul.f32 %v1441, %v2837
        %v2882 = vmul.f32 %v1445, %v2841
        %v2883 = vmul.f32 %v1451, %v2845
        %v2884 = vmul.f32 %v1455, %v2849
        %v2885 = vmul.f32 %v1461, %v2853
        %v2886 = vmul.f32 %v1465, %v2857
        %v2887 = vmul.f32 %v1471, %v2861
        %v2888 = vmul.f32 %v1475, %v2865
        %v2889 = vmul.f32 %v1481, %v2869
        %v2890 = vmul.f32 %v1485, %v2873
        %2891 = vset.pattern.permute.xlu0 10
        %2892 = vperm.xlu0 %2891, %v2013
        %v2893 = vpop.permute.xlu0 %2892
        %2895 = vset.pattern.permute.xlu0 10
        %2896 = vperm.xlu0 %2895, %v2016
        %v2897 = vpop.permute.xlu0 %2896
        %2899 = vset.pattern.permute.xlu0 10
        %2900 = vperm.xlu0 %2899, %v2021
        %v2901 = vpop.permute.xlu0 %2900
        %2903 = vset.pattern.permute.xlu0 10
        %2904 = vperm.xlu0 %2903, %v2024
        %v2905 = vpop.permute.xlu0 %2904
        %2907 = vset.pattern.permute.xlu0 10
        %2908 = vperm.xlu0 %2907, %v2029
        %v2909 = vpop.permute.xlu0 %2908
        %2911 = vset.pattern.permute.xlu0 10
        %2912 = vperm.xlu0 %2911, %v2032
        %v2913 = vpop.permute.xlu0 %2912
        %2915 = vset.pattern.permute.xlu0 10
        %2916 = vperm.xlu0 %2915, %v2037
        %v2917 = vpop.permute.xlu0 %2916
        %2919 = vset.pattern.permute.xlu0 10
        %2920 = vperm.xlu0 %2919, %v2040
        %v2921 = vpop.permute.xlu0 %2920
        %2923 = vset.pattern.permute.xlu0 10
        %2924 = vperm.xlu0 %2923, %v2045
        %v2925 = vpop.permute.xlu0 %2924
        %2927 = vset.pattern.permute.xlu0 10
        %2928 = vperm.xlu0 %2927, %v2048
        %v2929 = vpop.permute.xlu0 %2928
        %2931 = vset.pattern.permute.xlu0 10
        %2932 = vperm.xlu0 %2931, %v2053
        %v2933 = vpop.permute.xlu0 %2932
        %2935 = vset.pattern.permute.xlu0 10
        %2936 = vperm.xlu0 %2935, %v2056
        %v2937 = vpop.permute.xlu0 %2936
        %2939 = vset.pattern.permute.xlu0 10
        %2940 = vperm.xlu0 %2939, %v2061
        %v2941 = vpop.permute.xlu0 %2940
        %2943 = vset.pattern.permute.xlu0 10
        %2944 = vperm.xlu0 %2943, %v2064
        %v2945 = vpop.permute.xlu0 %2944
        %2947 = vset.pattern.permute.xlu0 10
        %2948 = vperm.xlu0 %2947, %v2069
        %v2949 = vpop.permute.xlu0 %2948
        %2951 = vset.pattern.permute.xlu0 10
        %2952 = vperm.xlu0 %2951, %v2072
        %v2953 = vpop.permute.xlu0 %2952
        %v2955 = vmul.f32 %v1522, %v2893
        %v2956 = vmul.f32 %v1526, %v2897
        %v2957 = vmul.f32 %v1532, %v2901
        %v2958 = vmul.f32 %v1536, %v2905
        %v2959 = vmul.f32 %v1542, %v2909
        %v2960 = vmul.f32 %v1546, %v2913
        %v2961 = vmul.f32 %v1552, %v2917
        %v2962 = vmul.f32 %v1556, %v2921
        %v2963 = vmul.f32 %v1562, %v2925
        %v2964 = vmul.f32 %v1566, %v2929
        %v2965 = vmul.f32 %v1572, %v2933
        %v2966 = vmul.f32 %v1576, %v2937
        %v2967 = vmul.f32 %v1582, %v2941
        %v2968 = vmul.f32 %v1586, %v2945
        %v2969 = vmul.f32 %v1592, %v2949
        %v2970 = vmul.f32 %v1596, %v2953
        %2971 = vset.pattern.permute.xlu0 11
        %2972 = vperm.xlu0 %2971, %v2013
        %v2973 = vpop.permute.xlu0 %2972
        %2975 = vset.pattern.permute.xlu0 11
        %2976 = vperm.xlu0 %2975, %v2016
        %v2977 = vpop.permute.xlu0 %2976
        %2979 = vset.pattern.permute.xlu0 11
        %2980 = vperm.xlu0 %2979, %v2021
        %v2981 = vpop.permute.xlu0 %2980
        %2983 = vset.pattern.permute.xlu0 11
        %2984 = vperm.xlu0 %2983, %v2024
        %v2985 = vpop.permute.xlu0 %2984
        %2987 = vset.pattern.permute.xlu0 11
        %2988 = vperm.xlu0 %2987, %v2029
        %v2989 = vpop.permute.xlu0 %2988
        %2991 = vset.pattern.permute.xlu0 11
        %2992 = vperm.xlu0 %2991, %v2032
        %v2993 = vpop.permute.xlu0 %2992
        %2995 = vset.pattern.permute.xlu0 11
        %2996 = vperm.xlu0 %2995, %v2037
        %v2997 = vpop.permute.xlu0 %2996
        %2999 = vset.pattern.permute.xlu0 11
        %3000 = vperm.xlu0 %2999, %v2040
        %v3001 = vpop.permute.xlu0 %3000
        %3003 = vset.pattern.permute.xlu0 11
        %3004 = vperm.xlu0 %3003, %v2045
        %v3005 = vpop.permute.xlu0 %3004
        %3007 = vset.pattern.permute.xlu0 11
        %3008 = vperm.xlu0 %3007, %v2048
        %v3009 = vpop.permute.xlu0 %3008
        %3011 = vset.pattern.permute.xlu0 11
        %3012 = vperm.xlu0 %3011, %v2053
        %v3013 = vpop.permute.xlu0 %3012
        %3015 = vset.pattern.permute.xlu0 11
        %3016 = vperm.xlu0 %3015, %v2056
        %v3017 = vpop.permute.xlu0 %3016
        %3019 = vset.pattern.permute.xlu0 11
        %3020 = vperm.xlu0 %3019, %v2061
        %v3021 = vpop.permute.xlu0 %3020
        %3023 = vset.pattern.permute.xlu0 11
        %3024 = vperm.xlu0 %3023, %v2064
        %v3025 = vpop.permute.xlu0 %3024
        %3027 = vset.pattern.permute.xlu0 11
        %3028 = vperm.xlu0 %3027, %v2069
        %v3029 = vpop.permute.xlu0 %3028
        %3031 = vset.pattern.permute.xlu0 11
        %3032 = vperm.xlu0 %3031, %v2072
        %v3033 = vpop.permute.xlu0 %3032
        %v3035 = vmul.f32 %v1524, %v2973
        %v3036 = vmul.f32 %v1528, %v2977
        %v3037 = vmul.f32 %v1534, %v2981
        %v3038 = vmul.f32 %v1538, %v2985
        %v3039 = vmul.f32 %v1544, %v2989
        %v3040 = vmul.f32 %v1548, %v2993
        %v3041 = vmul.f32 %v1554, %v2997
        %v3042 = vmul.f32 %v1558, %v3001
        %v3043 = vmul.f32 %v1564, %v3005
        %v3044 = vmul.f32 %v1568, %v3009
        %v3045 = vmul.f32 %v1574, %v3013
        %v3046 = vmul.f32 %v1578, %v3017
        %v3047 = vmul.f32 %v1584, %v3021
        %v3048 = vmul.f32 %v1588, %v3025
        %v3049 = vmul.f32 %v1594, %v3029
        %v3050 = vmul.f32 %v1598, %v3033
        %3051 = vset.pattern.permute.xlu0 12
        %3052 = vperm.xlu0 %3051, %v2013
        %v3053 = vpop.permute.xlu0 %3052
        %3055 = vset.pattern.permute.xlu0 12
        %3056 = vperm.xlu0 %3055, %v2016
        %v3057 = vpop.permute.xlu0 %3056
        %3059 = vset.pattern.permute.xlu0 12
        %3060 = vperm.xlu0 %3059, %v2021
        %v3061 = vpop.permute.xlu0 %3060
        %3063 = vset.pattern.permute.xlu0 12
        %3064 = vperm.xlu0 %3063, %v2024
        %v3065 = vpop.permute.xlu0 %3064
        %3067 = vset.pattern.permute.xlu0 12
        %3068 = vperm.xlu0 %3067, %v2029
        %v3069 = vpop.permute.xlu0 %3068
        %3071 = vset.pattern.permute.xlu0 12
        %3072 = vperm.xlu0 %3071, %v2032
        %v3073 = vpop.permute.xlu0 %3072
        %3075 = vset.pattern.permute.xlu0 12
        %3076 = vperm.xlu0 %3075, %v2037
        %v3077 = vpop.permute.xlu0 %3076
        %3079 = vset.pattern.permute.xlu0 12
        %3080 = vperm.xlu0 %3079, %v2040
        %v3081 = vpop.permute.xlu0 %3080
        %3083 = vset.pattern.permute.xlu0 12
        %3084 = vperm.xlu0 %3083, %v2045
        %v3085 = vpop.permute.xlu0 %3084
        %3087 = vset.pattern.permute.xlu0 12
        %3088 = vperm.xlu0 %3087, %v2048
        %v3089 = vpop.permute.xlu0 %3088
        %3091 = vset.pattern.permute.xlu0 12
        %3092 = vperm.xlu0 %3091, %v2053
        %v3093 = vpop.permute.xlu0 %3092
        %3095 = vset.pattern.permute.xlu0 12
        %3096 = vperm.xlu0 %3095, %v2056
        %v3097 = vpop.permute.xlu0 %3096
        %3099 = vset.pattern.permute.xlu0 12
        %3100 = vperm.xlu0 %3099, %v2061
        %v3101 = vpop.permute.xlu0 %3100
        %3103 = vset.pattern.permute.xlu0 12
        %3104 = vperm.xlu0 %3103, %v2064
        %v3105 = vpop.permute.xlu0 %3104
        %3107 = vset.pattern.permute.xlu0 12
        %3108 = vperm.xlu0 %3107, %v2069
        %v3109 = vpop.permute.xlu0 %3108
        %3111 = vset.pattern.permute.xlu0 12
        %3112 = vperm.xlu0 %3111, %v2072
        %v3113 = vpop.permute.xlu0 %3112
        %v3115 = vmul.f32 %v1635, %v3053
        %v3116 = vmul.f32 %v1639, %v3057
        %v3117 = vmul.f32 %v1645, %v3061
        %v3118 = vmul.f32 %v1649, %v3065
        %v3119 = vmul.f32 %v1655, %v3069
        %v3120 = vmul.f32 %v1659, %v3073
        %v3121 = vmul.f32 %v1665, %v3077
        %v3122 = vmul.f32 %v1669, %v3081
        %v3123 = vmul.f32 %v1675, %v3085
        %v3124 = vmul.f32 %v1679, %v3089
        %v3125 = vmul.f32 %v1685, %v3093
        %v3126 = vmul.f32 %v1689, %v3097
        %v3127 = vmul.f32 %v1695, %v3101
        %v3128 = vmul.f32 %v1699, %v3105
        %v3129 = vmul.f32 %v1705, %v3109
        %v3130 = vmul.f32 %v1709, %v3113
        %3131 = vset.pattern.permute.xlu0 13
        %3132 = vperm.xlu0 %3131, %v2013
        %v3133 = vpop.permute.xlu0 %3132
        %3135 = vset.pattern.permute.xlu0 13
        %3136 = vperm.xlu0 %3135, %v2016
        %v3137 = vpop.permute.xlu0 %3136
        %3139 = vset.pattern.permute.xlu0 13
        %3140 = vperm.xlu0 %3139, %v2021
        %v3141 = vpop.permute.xlu0 %3140
        %3143 = vset.pattern.permute.xlu0 13
        %3144 = vperm.xlu0 %3143, %v2024
        %v3145 = vpop.permute.xlu0 %3144
        %3147 = vset.pattern.permute.xlu0 13
        %3148 = vperm.xlu0 %3147, %v2029
        %v3149 = vpop.permute.xlu0 %3148
        %3151 = vset.pattern.permute.xlu0 13
        %3152 = vperm.xlu0 %3151, %v2032
        %v3153 = vpop.permute.xlu0 %3152
        %3155 = vset.pattern.permute.xlu0 13
        %3156 = vperm.xlu0 %3155, %v2037
        %v3157 = vpop.permute.xlu0 %3156
        %3159 = vset.pattern.permute.xlu0 13
        %3160 = vperm.xlu0 %3159, %v2040
        %v3161 = vpop.permute.xlu0 %3160
        %3163 = vset.pattern.permute.xlu0 13
        %3164 = vperm.xlu0 %3163, %v2045
        %v3165 = vpop.permute.xlu0 %3164
        %3167 = vset.pattern.permute.xlu0 13
        %3168 = vperm.xlu0 %3167, %v2048
        %v3169 = vpop.permute.xlu0 %3168
        %3171 = vset.pattern.permute.xlu0 13
        %3172 = vperm.xlu0 %3171, %v2053
        %v3173 = vpop.permute.xlu0 %3172
        %3175 = vset.pattern.permute.xlu0 13
        %3176 = vperm.xlu0 %3175, %v2056
        %v3177 = vpop.permute.xlu0 %3176
        %3179 = vset.pattern.permute.xlu0 13
        %3180 = vperm.xlu0 %3179, %v2061
        %v3181 = vpop.permute.xlu0 %3180
        %3183 = vset.pattern.permute.xlu0 13
        %3184 = vperm.xlu0 %3183, %v2064
        %v3185 = vpop.permute.xlu0 %3184
        %3187 = vset.pattern.permute.xlu0 13
        %3188 = vperm.xlu0 %3187, %v2069
        %v3189 = vpop.permute.xlu0 %3188
        %3191 = vset.pattern.permute.xlu0 13
        %3192 = vperm.xlu0 %3191, %v2072
        %v3193 = vpop.permute.xlu0 %3192
        %v3195 = vmul.f32 %v1637, %v3133
        %v3196 = vmul.f32 %v1641, %v3137
        %v3197 = vmul.f32 %v1647, %v3141
        %v3198 = vmul.f32 %v1651, %v3145
        %v3199 = vmul.f32 %v1657, %v3149
        %v3200 = vmul.f32 %v1661, %v3153
        %v3201 = vmul.f32 %v1667, %v3157
        %v3202 = vmul.f32 %v1671, %v3161
        %v3203 = vmul.f32 %v1677, %v3165
        %v3204 = vmul.f32 %v1681, %v3169
        %v3205 = vmul.f32 %v1687, %v3173
        %v3206 = vmul.f32 %v1691, %v3177
        %v3207 = vmul.f32 %v1697, %v3181
        %v3208 = vmul.f32 %v1701, %v3185
        %v3209 = vmul.f32 %v1707, %v3189
        %v3210 = vmul.f32 %v1711, %v3193
        %3211 = vset.pattern.permute.xlu0 14
        %3212 = vperm.xlu0 %3211, %v2013
        %v3213 = vpop.permute.xlu0 %3212
        %3215 = vset.pattern.permute.xlu0 14
        %3216 = vperm.xlu0 %3215, %v2016
        %v3217 = vpop.permute.xlu0 %3216
        %3219 = vset.pattern.permute.xlu0 14
        %3220 = vperm.xlu0 %3219, %v2021
        %v3221 = vpop.permute.xlu0 %3220
        %3223 = vset.pattern.permute.xlu0 14
        %3224 = vperm.xlu0 %3223, %v2024
        %v3225 = vpop.permute.xlu0 %3224
        %3227 = vset.pattern.permute.xlu0 14
        %3228 = vperm.xlu0 %3227, %v2029
        %v3229 = vpop.permute.xlu0 %3228
        %3231 = vset.pattern.permute.xlu0 14
        %3232 = vperm.xlu0 %3231, %v2032
        %v3233 = vpop.permute.xlu0 %3232
        %3235 = vset.pattern.permute.xlu0 14
        %3236 = vperm.xlu0 %3235, %v2037
        %v3237 = vpop.permute.xlu0 %3236
        %3239 = vset.pattern.permute.xlu0 14
        %3240 = vperm.xlu0 %3239, %v2040
        %v3241 = vpop.permute.xlu0 %3240
        %3243 = vset.pattern.permute.xlu0 14
        %3244 = vperm.xlu0 %3243, %v2045
        %v3245 = vpop.permute.xlu0 %3244
        %3247 = vset.pattern.permute.xlu0 14
        %3248 = vperm.xlu0 %3247, %v2048
        %v3249 = vpop.permute.xlu0 %3248
        %3251 = vset.pattern.permute.xlu0 14
        %3252 = vperm.xlu0 %3251, %v2053
        %v3253 = vpop.permute.xlu0 %3252
        %3255 = vset.pattern.permute.xlu0 14
        %3256 = vperm.xlu0 %3255, %v2056
        %v3257 = vpop.permute.xlu0 %3256
        %3259 = vset.pattern.permute.xlu0 14
        %3260 = vperm.xlu0 %3259, %v2061
        %v3261 = vpop.permute.xlu0 %3260
        %3263 = vset.pattern.permute.xlu0 14
        %3264 = vperm.xlu0 %3263, %v2064
        %v3265 = vpop.permute.xlu0 %3264
        %3267 = vset.pattern.permute.xlu0 14
        %3268 = vperm.xlu0 %3267, %v2069
        %v3269 = vpop.permute.xlu0 %3268
        %3271 = vset.pattern.permute.xlu0 14
        %3272 = vperm.xlu0 %3271, %v2072
        %v3273 = vpop.permute.xlu0 %3272
        %v3275 = vmul.f32 %v1748, %v3213
        %v3276 = vmul.f32 %v1752, %v3217
        %v3277 = vmul.f32 %v1758, %v3221
        %v3278 = vmul.f32 %v1762, %v3225
        %v3279 = vmul.f32 %v1768, %v3229
        %v3280 = vmul.f32 %v1772, %v3233
        %v3281 = vmul.f32 %v1778, %v3237
        %v3282 = vmul.f32 %v1782, %v3241
        %v3283 = vmul.f32 %v1788, %v3245
        %v3284 = vmul.f32 %v1792, %v3249
        %v3285 = vmul.f32 %v1798, %v3253
        %v3286 = vmul.f32 %v1802, %v3257
        %v3287 = vmul.f32 %v1808, %v3261
        %v3288 = vmul.f32 %v1812, %v3265
        %v3289 = vmul.f32 %v1818, %v3269
        %v3290 = vmul.f32 %v1822, %v3273
        %3291 = vset.pattern.permute.xlu0 15
        %3292 = vperm.xlu0 %3291, %v2013
        %v3293 = vpop.permute.xlu0 %3292
        %3295 = vset.pattern.permute.xlu0 15
        %3296 = vperm.xlu0 %3295, %v2016
        %v3297 = vpop.permute.xlu0 %3296
        %3299 = vset.pattern.permute.xlu0 15
        %3300 = vperm.xlu0 %3299, %v2021
        %v3301 = vpop.permute.xlu0 %3300
        %3303 = vset.pattern.permute.xlu0 15
        %3304 = vperm.xlu0 %3303, %v2024
        %v3305 = vpop.permute.xlu0 %3304
        %3307 = vset.pattern.permute.xlu0 15
        %3308 = vperm.xlu0 %3307, %v2029
        %v3309 = vpop.permute.xlu0 %3308
        %3311 = vset.pattern.permute.xlu0 15
        %3312 = vperm.xlu0 %3311, %v2032
        %v3313 = vpop.permute.xlu0 %3312
        %3315 = vset.pattern.permute.xlu0 15
        %3316 = vperm.xlu0 %3315, %v2037
        %v3317 = vpop.permute.xlu0 %3316
        %3319 = vset.pattern.permute.xlu0 15
        %3320 = vperm.xlu0 %3319, %v2040
        %v3321 = vpop.permute.xlu0 %3320
        %3323 = vset.pattern.permute.xlu0 15
        %3324 = vperm.xlu0 %3323, %v2045
        %v3325 = vpop.permute.xlu0 %3324
        %3327 = vset.pattern.permute.xlu0 15
        %3328 = vperm.xlu0 %3327, %v2048
        %v3329 = vpop.permute.xlu0 %3328
        %3331 = vset.pattern.permute.xlu0 15
        %3332 = vperm.xlu0 %3331, %v2053
        %v3333 = vpop.permute.xlu0 %3332
        %3335 = vset.pattern.permute.xlu0 15
        %3336 = vperm.xlu0 %3335, %v2056
        %v3337 = vpop.permute.xlu0 %3336
        %3339 = vset.pattern.permute.xlu0 15
        %3340 = vperm.xlu0 %3339, %v2061
        %v3341 = vpop.permute.xlu0 %3340
        %3343 = vset.pattern.permute.xlu0 15
        %3344 = vperm.xlu0 %3343, %v2064
        %v3345 = vpop.permute.xlu0 %3344
        %3347 = vset.pattern.permute.xlu0 15
        %3348 = vperm.xlu0 %3347, %v2069
        %v3349 = vpop.permute.xlu0 %3348
        %3351 = vset.pattern.permute.xlu0 15
        %3352 = vperm.xlu0 %3351, %v2072
        %v3353 = vpop.permute.xlu0 %3352
        %v3355 = vmul.f32 %v1750, %v3293
        %v3356 = vmul.f32 %v1754, %v3297
        %v3357 = vmul.f32 %v1760, %v3301
        %v3358 = vmul.f32 %v1764, %v3305
        %v3359 = vmul.f32 %v1770, %v3309
        %v3360 = vmul.f32 %v1774, %v3313
        %v3361 = vmul.f32 %v1780, %v3317
        %v3362 = vmul.f32 %v1784, %v3321
        %v3363 = vmul.f32 %v1790, %v3325
        %v3364 = vmul.f32 %v1794, %v3329
        %v3365 = vmul.f32 %v1800, %v3333
        %v3366 = vmul.f32 %v1804, %v3337
        %v3367 = vmul.f32 %v1810, %v3341
        %v3368 = vmul.f32 %v1814, %v3345
        %v3369 = vmul.f32 %v1820, %v3349
        %v3370 = vmul.f32 %v1824, %v3353
        %v3371 = vadd.f32 %v2155, %v2235
        %v3372 = vadd.f32 %v2156, %v2236
        %v3373 = vadd.f32 %v2157, %v2237
        %v3374 = vadd.f32 %v2158, %v2238
        %v3375 = vadd.f32 %v2159, %v2239
        %v3376 = vadd.f32 %v2160, %v2240
        %v3377 = vadd.f32 %v2161, %v2241
        %v3378 = vadd.f32 %v2162, %v2242
        %v3379 = vadd.f32 %v2163, %v2243
        %v3380 = vadd.f32 %v2164, %v2244
        %v3381 = vadd.f32 %v2165, %v2245
        %v3382 = vadd.f32 %v2166, %v2246
        %v3383 = vadd.f32 %v2167, %v2247
        %v3384 = vadd.f32 %v2168, %v2248
        %v3385 = vadd.f32 %v2169, %v2249
        %v3386 = vadd.f32 %v2170, %v2250
        %v3387 = vadd.f32 %v2315, %v2395
        %v3388 = vadd.f32 %v2316, %v2396
        %v3389 = vadd.f32 %v2317, %v2397
        %v3390 = vadd.f32 %v2318, %v2398
        %v3391 = vadd.f32 %v2319, %v2399
        %v3392 = vadd.f32 %v2320, %v2400
        %v3393 = vadd.f32 %v2321, %v2401
        %v3394 = vadd.f32 %v2322, %v2402
        %v3395 = vadd.f32 %v2323, %v2403
        %v3396 = vadd.f32 %v2324, %v2404
        %v3397 = vadd.f32 %v2325, %v2405
        %v3398 = vadd.f32 %v2326, %v2406
        %v3399 = vadd.f32 %v2327, %v2407
        %v3400 = vadd.f32 %v2328, %v2408
        %v3401 = vadd.f32 %v2329, %v2409
        %v3402 = vadd.f32 %v2330, %v2410
        %v3403 = vadd.f32 %v2475, %v2555
        %v3404 = vadd.f32 %v2476, %v2556
        %v3405 = vadd.f32 %v2477, %v2557
        %v3406 = vadd.f32 %v2478, %v2558
        %v3407 = vadd.f32 %v2479, %v2559
        %v3408 = vadd.f32 %v2480, %v2560
        %v3409 = vadd.f32 %v2481, %v2561
        %v3410 = vadd.f32 %v2482, %v2562
        %v3411 = vadd.f32 %v2483, %v2563
        %v3412 = vadd.f32 %v2484, %v2564
        %v3413 = vadd.f32 %v2485, %v2565
        %v3414 = vadd.f32 %v2486, %v2566
        %v3415 = vadd.f32 %v2487, %v2567
        %v3416 = vadd.f32 %v2488, %v2568
        %v3417 = vadd.f32 %v2489, %v2569
        %v3418 = vadd.f32 %v2490, %v2570
        %v3419 = vadd.f32 %v2635, %v2715
        %v3420 = vadd.f32 %v2636, %v2716
        %v3421 = vadd.f32 %v2637, %v2717
        %v3422 = vadd.f32 %v2638, %v2718
        %v3423 = vadd.f32 %v2639, %v2719
        %v3424 = vadd.f32 %v2640, %v2720
        %v3425 = vadd.f32 %v2641, %v2721
        %v3426 = vadd.f32 %v2642, %v2722
        %v3427 = vadd.f32 %v2643, %v2723
        %v3428 = vadd.f32 %v2644, %v2724
        %v3429 = vadd.f32 %v2645, %v2725
        %v3430 = vadd.f32 %v2646, %v2726
        %v3431 = vadd.f32 %v2647, %v2727
        %v3432 = vadd.f32 %v2648, %v2728
        %v3433 = vadd.f32 %v2649, %v2729
        %v3434 = vadd.f32 %v2650, %v2730
        %v3435 = vadd.f32 %v2795, %v2875
        %v3436 = vadd.f32 %v2796, %v2876
        %v3437 = vadd.f32 %v2797, %v2877
        %v3438 = vadd.f32 %v2798, %v2878
        %v3439 = vadd.f32 %v2799, %v2879
        %v3440 = vadd.f32 %v2800, %v2880
        %v3441 = vadd.f32 %v2801, %v2881
        %v3442 = vadd.f32 %v2802, %v2882
        %v3443 = vadd.f32 %v2803, %v2883
        %v3444 = vadd.f32 %v2804, %v2884
        %v3445 = vadd.f32 %v2805, %v2885
        %v3446 = vadd.f32 %v2806, %v2886
        %v3447 = vadd.f32 %v2807, %v2887
        %v3448 = vadd.f32 %v2808, %v2888
        %v3449 = vadd.f32 %v2809, %v2889
        %v3450 = vadd.f32 %v2810, %v2890
        %v3451 = vadd.f32 %v2955, %v3035
        %v3452 = vadd.f32 %v2956, %v3036
        %v3453 = vadd.f32 %v2957, %v3037
        %v3454 = vadd.f32 %v2958, %v3038
        %v3455 = vadd.f32 %v2959, %v3039
        %v3456 = vadd.f32 %v2960, %v3040
        %v3457 = vadd.f32 %v2961, %v3041
        %v3458 = vadd.f32 %v2962, %v3042
        %v3459 = vadd.f32 %v2963, %v3043
        %v3460 = vadd.f32 %v2964, %v3044
        %v3461 = vadd.f32 %v2965, %v3045
        %v3462 = vadd.f32 %v2966, %v3046
        %v3463 = vadd.f32 %v2967, %v3047
        %v3464 = vadd.f32 %v2968, %v3048
        %v3465 = vadd.f32 %v2969, %v3049
        %v3466 = vadd.f32 %v2970, %v3050
        %v3467 = vadd.f32 %v3115, %v3195
        %v3468 = vadd.f32 %v3116, %v3196
        %v3469 = vadd.f32 %v3117, %v3197
        %v3470 = vadd.f32 %v3118, %v3198
        %v3471 = vadd.f32 %v3119, %v3199
        %v3472 = vadd.f32 %v3120, %v3200
        %v3473 = vadd.f32 %v3121, %v3201
        %v3474 = vadd.f32 %v3122, %v3202
        %v3475 = vadd.f32 %v3123, %v3203
        %v3476 = vadd.f32 %v3124, %v3204
        %v3477 = vadd.f32 %v3125, %v3205
        %v3478 = vadd.f32 %v3126, %v3206
        %v3479 = vadd.f32 %v3127, %v3207
        %v3480 = vadd.f32 %v3128, %v3208
        %v3481 = vadd.f32 %v3129, %v3209
        %v3482 = vadd.f32 %v3130, %v3210
        %v3483 = vadd.f32 %v3275, %v3355
        %v3484 = vadd.f32 %v3276, %v3356
        %v3485 = vadd.f32 %v3277, %v3357
        %v3486 = vadd.f32 %v3278, %v3358
        %v3487 = vadd.f32 %v3279, %v3359
        %v3488 = vadd.f32 %v3280, %v3360
        %v3489 = vadd.f32 %v3281, %v3361
        %v3490 = vadd.f32 %v3282, %v3362
        %v3491 = vadd.f32 %v3283, %v3363
        %v3492 = vadd.f32 %v3284, %v3364
        %v3493 = vadd.f32 %v3285, %v3365
        %v3494 = vadd.f32 %v3286, %v3366
        %v3495 = vadd.f32 %v3287, %v3367
        %v3496 = vadd.f32 %v3288, %v3368
        %v3497 = vadd.f32 %v3289, %v3369
        %v3498 = vadd.f32 %v3290, %v3370
        %v3499 = vadd.f32 %v3371, %v3387
        %v3500 = vadd.f32 %v3372, %v3388
        %v3501 = vadd.f32 %v3373, %v3389
        %v3502 = vadd.f32 %v3374, %v3390
        %v3503 = vadd.f32 %v3375, %v3391
        %v3504 = vadd.f32 %v3376, %v3392
        %v3505 = vadd.f32 %v3377, %v3393
        %v3506 = vadd.f32 %v3378, %v3394
        %v3507 = vadd.f32 %v3379, %v3395
        %v3508 = vadd.f32 %v3380, %v3396
        %v3509 = vadd.f32 %v3381, %v3397
        %v3510 = vadd.f32 %v3382, %v3398
        %v3511 = vadd.f32 %v3383, %v3399
        %v3512 = vadd.f32 %v3384, %v3400
        %v3513 = vadd.f32 %v3385, %v3401
        %v3514 = vadd.f32 %v3386, %v3402
        %v3515 = vadd.f32 %v3403, %v3419
        %v3516 = vadd.f32 %v3404, %v3420
        %v3517 = vadd.f32 %v3405, %v3421
        %v3518 = vadd.f32 %v3406, %v3422
        %v3519 = vadd.f32 %v3407, %v3423
        %v3520 = vadd.f32 %v3408, %v3424
        %v3521 = vadd.f32 %v3409, %v3425
        %v3522 = vadd.f32 %v3410, %v3426
        %v3523 = vadd.f32 %v3411, %v3427
        %v3524 = vadd.f32 %v3412, %v3428
        %v3525 = vadd.f32 %v3413, %v3429
        %v3526 = vadd.f32 %v3414, %v3430
        %v3527 = vadd.f32 %v3415, %v3431
        %v3528 = vadd.f32 %v3416, %v3432
        %v3529 = vadd.f32 %v3417, %v3433
        %v3530 = vadd.f32 %v3418, %v3434
        %v3531 = vadd.f32 %v3435, %v3451
        %v3532 = vadd.f32 %v3436, %v3452
        %v3533 = vadd.f32 %v3437, %v3453
        %v3534 = vadd.f32 %v3438, %v3454
        %v3535 = vadd.f32 %v3439, %v3455
        %v3536 = vadd.f32 %v3440, %v3456
        %v3537 = vadd.f32 %v3441, %v3457
        %v3538 = vadd.f32 %v3442, %v3458
        %v3539 = vadd.f32 %v3443, %v3459
        %v3540 = vadd.f32 %v3444, %v3460
        %v3541 = vadd.f32 %v3445, %v3461
        %v3542 = vadd.f32 %v3446, %v3462
        %v3543 = vadd.f32 %v3447, %v3463
        %v3544 = vadd.f32 %v3448, %v3464
        %v3545 = vadd.f32 %v3449, %v3465
        %v3546 = vadd.f32 %v3450, %v3466
        %v3547 = vadd.f32 %v3467, %v3483
        %v3548 = vadd.f32 %v3468, %v3484
        %v3549 = vadd.f32 %v3469, %v3485
        %v3550 = vadd.f32 %v3470, %v3486
        %v3551 = vadd.f32 %v3471, %v3487
        %v3552 = vadd.f32 %v3472, %v3488
        %v3553 = vadd.f32 %v3473, %v3489
        %v3554 = vadd.f32 %v3474, %v3490
        %v3555 = vadd.f32 %v3475, %v3491
        %v3556 = vadd.f32 %v3476, %v3492
        %v3557 = vadd.f32 %v3477, %v3493
        %v3558 = vadd.f32 %v3478, %v3494
        %v3559 = vadd.f32 %v3479, %v3495
        %v3560 = vadd.f32 %v3480, %v3496
        %v3561 = vadd.f32 %v3481, %v3497
        %v3562 = vadd.f32 %v3482, %v3498
        %v3563 = vadd.f32 %v3499, %v3515
        %v3564 = vadd.f32 %v3500, %v3516
        %v3565 = vadd.f32 %v3501, %v3517
        %v3566 = vadd.f32 %v3502, %v3518
        %v3567 = vadd.f32 %v3503, %v3519
        %v3568 = vadd.f32 %v3504, %v3520
        %v3569 = vadd.f32 %v3505, %v3521
        %v3570 = vadd.f32 %v3506, %v3522
        %v3571 = vadd.f32 %v3507, %v3523
        %v3572 = vadd.f32 %v3508, %v3524
        %v3573 = vadd.f32 %v3509, %v3525
        %v3574 = vadd.f32 %v3510, %v3526
        %v3575 = vadd.f32 %v3511, %v3527
        %v3576 = vadd.f32 %v3512, %v3528
        %v3577 = vadd.f32 %v3513, %v3529
        %v3578 = vadd.f32 %v3514, %v3530
        %v3579 = vadd.f32 %v3531, %v3547
        %v3580 = vadd.f32 %v3532, %v3548
        %v3581 = vadd.f32 %v3533, %v3549
        %v3582 = vadd.f32 %v3534, %v3550
        %v3583 = vadd.f32 %v3535, %v3551
        %v3584 = vadd.f32 %v3536, %v3552
        %v3585 = vadd.f32 %v3537, %v3553
        %v3586 = vadd.f32 %v3538, %v3554
        %v3587 = vadd.f32 %v3539, %v3555
        %v3588 = vadd.f32 %v3540, %v3556
        %v3589 = vadd.f32 %v3541, %v3557
        %v3590 = vadd.f32 %v3542, %v3558
        %v3591 = vadd.f32 %v3543, %v3559
        %v3592 = vadd.f32 %v3544, %v3560
        %v3593 = vadd.f32 %v3545, %v3561
        %v3594 = vadd.f32 %v3546, %v3562
        %v3595 = vadd.f32 %v3563, %v3579
        %v3596 = vadd.f32 %v3564, %v3580
        %v3597 = vadd.f32 %v3565, %v3581
        %v3598 = vadd.f32 %v3566, %v3582
        %v3599 = vadd.f32 %v3567, %v3583
        %v3600 = vadd.f32 %v3568, %v3584
        %v3601 = vadd.f32 %v3569, %v3585
        %v3602 = vadd.f32 %v3570, %v3586
        %v3603 = vadd.f32 %v3571, %v3587
        %v3604 = vadd.f32 %v3572, %v3588
        %v3605 = vadd.f32 %v3573, %v3589
        %v3606 = vadd.f32 %v3574, %v3590
        %v3607 = vadd.f32 %v3575, %v3591
        %v3608 = vadd.f32 %v3576, %v3592
        %v3609 = vadd.f32 %v3577, %v3593
        %v3610 = vadd.f32 %v3578, %v3594
        %v3611 = vld [vmem:[%s487] sm:$0xf]
        %v3612 = vld [vmem:[%s487 + $0x4] sm:$0xf]
        %v3613 = vld [vmem:[%s487 + $0x8] sm:$0xf]
        %v3614 = vld [vmem:[%s487 + $0xc] sm:$0xf]
        %v3615 = vld [vmem:[%s487 + $0x10] sm:$0xf]
        %v3616 = vld [vmem:[%s487 + $0x14] sm:$0xf]
        %v3617 = vld [vmem:[%s487 + $0x18] sm:$0xf]
        %v3618 = vld [vmem:[%s487 + $0x1c] sm:$0xf]
        %v3619 = vld [vmem:[%s487 + $0x20] sm:$0xf]
        %v3620 = vld [vmem:[%s487 + $0x24] sm:$0xf]
        %v3621 = vld [vmem:[%s487 + $0x28] sm:$0xf]
        %v3622 = vld [vmem:[%s487 + $0x2c] sm:$0xf]
        %v3623 = vld [vmem:[%s487 + $0x30] sm:$0xf]
        %v3624 = vld [vmem:[%s487 + $0x34] sm:$0xf]
        %v3625 = vld [vmem:[%s487 + $0x38] sm:$0xf]
        %v3626 = vld [vmem:[%s487 + $0x3c] sm:$0xf]
        %v3627 = vld [vmem:[%s9] sm:$0x3]
        %v3644 = vunpack.c.l.b16 %v3611
        %v3645 = vunpack.c.l.b16 %v3612
        %v3646 = vunpack.c.l.b16 %v3613
        %v3647 = vunpack.c.l.b16 %v3614
        %v3648 = vunpack.c.l.b16 %v3615
        %v3649 = vunpack.c.l.b16 %v3616
        %v3650 = vunpack.c.l.b16 %v3617
        %v3651 = vunpack.c.l.b16 %v3618
        %v3652 = vunpack.c.l.b16 %v3619
        %v3653 = vunpack.c.l.b16 %v3620
        %v3654 = vunpack.c.l.b16 %v3621
        %v3655 = vunpack.c.l.b16 %v3622
        %v3656 = vunpack.c.l.b16 %v3623
        %v3657 = vunpack.c.l.b16 %v3624
        %v3658 = vunpack.c.l.b16 %v3625
        %v3659 = vunpack.c.l.b16 %v3626
        %v3660 = vpack.c.b16 %v3645, %v3644
        %v3661 = vpack.c.b16 %v3647, %v3646
        %v3662 = vpack.c.b16 %v3649, %v3648
        %v3663 = vpack.c.b16 %v3651, %v3650
        %v3664 = vpack.c.b16 %v3653, %v3652
        %v3665 = vpack.c.b16 %v3655, %v3654
        %v3666 = vpack.c.b16 %v3657, %v3656
        %v3667 = vpack.c.b16 %v3659, %v3658
        %vm3668 = vcmask 31744
        %v3670 = vsel %vm3668, %v3660, 0
        %v3673 = vsel %vm3668, %v3661, 0
        %v3676 = vsel %vm3668, %v3662, 0
        %v3679 = vsel %vm3668, %v3663, 0
        %v3682 = vsel %vm3668, %v3664, 0
        %v3685 = vsel %vm3668, %v3665, 0
        %v3688 = vsel %vm3668, %v3666, 0
        %v3691 = vsel %vm3668, %v3667, 0
        %vm3693 = vcmask 1041408
        %v3695 = vsel %vm3693, %v3627, 0
        %3697 = vmatprep.subr.bf16.mxu0 0
        %3698 = vmatpush1.bf16.msra.mxu0 0
        %3699 = vmatprep.subr.bf16.mxu0 0
        %3700 = vmatpush1.bf16.msra.mxu0 0
        %3701 = vmatprep.subr.bf16.mxu0 0
        %3702 = vmatpush1.bf16.msra.mxu0 0
        %3703 = vmatprep.subr.bf16.mxu0 0
        %3704 = vmatpush1.bf16.msra.mxu0 0
        %3705 = vmatprep.subr.bf16.mxu0 0
        %3706 = vmatpush1.bf16.msra.mxu0 0
        %3707 = vmatprep.subr.bf16.mxu0 0
        %3708 = vmatpush1.bf16.msra.mxu0 0
        %3709 = vmatprep.subr.bf16.mxu0 0
        %3710 = vmatpush1.bf16.msra.mxu0 0
        %3711 = vmatprep.subr.bf16.mxu0 0
        %3712 = vmatpush1.bf16.msra.mxu0 %v3695
        %3713 = vmatprep.subr.bf16.mxu0 0
        %3714 = vmatpush2.bf16.msra.mxu0 0
        %3715 = vmatprep.subr.bf16.mxu0 0
        %3716 = vmatpush2.bf16.msra.mxu0 0
        %3717 = vmatprep.subr.bf16.mxu0 0
        %3718 = vmatpush2.bf16.msra.mxu0 0
        %3719 = vmatprep.subr.bf16.mxu0 0
        %3720 = vmatpush2.bf16.msra.mxu0 0
        %3721 = vmatprep.subr.bf16.mxu0 0
        %3722 = vmatpush2.bf16.msra.mxu0 0
        %3723 = vmatprep.subr.bf16.mxu0 0
        %3724 = vmatpush2.bf16.msra.mxu0 0
        %3725 = vmatprep.subr.bf16.mxu0 0
        %3726 = vmatpush2.bf16.msra.mxu0 0
        %3727 = vmatprep.subr.bf16.mxu0 0
        %3728 = vmatpush2.bf16.msra.mxu0 0
        %3729 = vmatprep.mubr.bf16.mxu0 0
        %3730 = vmatmul.mubr.bf16.gmra.mxu0 %v3670
        %v3731 = vpop.f32.mrf.mxu0
        %v3732 = vadd.f32 0.0, %v3731
        %v3733 = vpop.f32.mrf.mxu0
        %v3734 = vpop.f32.mrf.mxu0
        %v3735 = vadd.f32 0.0, %v3734
        %v3736 = vpop.f32.mrf.mxu0
        %3737 = vmatprep.mubr.bf16.mxu0 0
        %3738 = vmatmul.mubr.bf16.gmra.mxu0 %v3673
        %v3739 = vpop.f32.mrf.mxu0
        %v3740 = vadd.f32 0.0, %v3739
        %v3741 = vpop.f32.mrf.mxu0
        %v3742 = vpop.f32.mrf.mxu0
        %v3743 = vadd.f32 0.0, %v3742
        %v3744 = vpop.f32.mrf.mxu0
        %3745 = vmatprep.mubr.bf16.mxu0 0
        %3746 = vmatmul.mubr.bf16.gmra.mxu0 %v3676
        %v3747 = vpop.f32.mrf.mxu0
        %v3748 = vadd.f32 0.0, %v3747
        %v3749 = vpop.f32.mrf.mxu0
        %v3750 = vpop.f32.mrf.mxu0
        %v3751 = vadd.f32 0.0, %v3750
        %v3752 = vpop.f32.mrf.mxu0
        %3753 = vmatprep.mubr.bf16.mxu0 0
        %3754 = vmatmul.mubr.bf16.gmra.mxu0 %v3679
        %v3755 = vpop.f32.mrf.mxu0
        %v3756 = vadd.f32 0.0, %v3755
        %v3757 = vpop.f32.mrf.mxu0
        %v3758 = vpop.f32.mrf.mxu0
        %v3759 = vadd.f32 0.0, %v3758
        %v3760 = vpop.f32.mrf.mxu0
        %3761 = vmatprep.mubr.bf16.mxu0 0
        %3762 = vmatmul.mubr.bf16.gmra.mxu0 %v3682
        %v3763 = vpop.f32.mrf.mxu0
        %v3764 = vadd.f32 0.0, %v3763
        %v3765 = vpop.f32.mrf.mxu0
        %v3766 = vpop.f32.mrf.mxu0
        %v3767 = vadd.f32 0.0, %v3766
        %v3768 = vpop.f32.mrf.mxu0
        %3769 = vmatprep.mubr.bf16.mxu0 0
        %3770 = vmatmul.mubr.bf16.gmra.mxu0 %v3685
        %v3771 = vpop.f32.mrf.mxu0
        %v3772 = vadd.f32 0.0, %v3771
        %v3773 = vpop.f32.mrf.mxu0
        %v3774 = vpop.f32.mrf.mxu0
        %v3775 = vadd.f32 0.0, %v3774
        %v3776 = vpop.f32.mrf.mxu0
        %3777 = vmatprep.mubr.bf16.mxu0 0
        %3778 = vmatmul.mubr.bf16.gmra.mxu0 %v3688
        %v3779 = vpop.f32.mrf.mxu0
        %v3780 = vadd.f32 0.0, %v3779
        %v3781 = vpop.f32.mrf.mxu0
        %v3782 = vpop.f32.mrf.mxu0
        %v3783 = vadd.f32 0.0, %v3782
        %v3784 = vpop.f32.mrf.mxu0
        %3785 = vmatprep.mubr.bf16.mxu0 0
        %3786 = vmatmul.mubr.bf16.gmra.mxu0 %v3691
        %v3787 = vpop.f32.mrf.mxu0
        %v3788 = vadd.f32 0.0, %v3787
        %v3789 = vpop.f32.mrf.mxu0
        %v3790 = vpop.f32.mrf.mxu0
        %v3791 = vadd.f32 0.0, %v3790
        %v3792 = vpop.f32.mrf.mxu0
        %3793 = vdwg.mxu0
        %v3794 = vmul.f32 %v3595, %v3732
        %v3795 = vmul.f32 %v3596, %v3735
        %v3796 = vmul.f32 %v3597, %v3740
        %v3797 = vmul.f32 %v3598, %v3743
        %v3798 = vmul.f32 %v3599, %v3748
        %v3799 = vmul.f32 %v3600, %v3751
        %v3800 = vmul.f32 %v3601, %v3756
        %v3801 = vmul.f32 %v3602, %v3759
        %v3802 = vmul.f32 %v3603, %v3764
        %v3803 = vmul.f32 %v3604, %v3767
        %v3804 = vmul.f32 %v3605, %v3772
        %v3805 = vmul.f32 %v3606, %v3775
        %v3806 = vmul.f32 %v3607, %v3780
        %v3807 = vmul.f32 %v3608, %v3783
        %v3808 = vmul.f32 %v3609, %v3788
        %v3809 = vmul.f32 %v3610, %v3791
        %v3810 = vpack.c.bf16 %v3795, %v3794
        %v3811 = vpack.c.bf16 %v3797, %v3796
        %v3812 = vpack.c.bf16 %v3799, %v3798
        %v3813 = vpack.c.bf16 %v3801, %v3800
        %v3814 = vpack.c.bf16 %v3803, %v3802
        %v3815 = vpack.c.bf16 %v3805, %v3804
        %v3816 = vpack.c.bf16 %v3807, %v3806
        %v3817 = vpack.c.bf16 %v3809, %v3808
        %v3818 = vld [vmem:[%s10] sm:$0xf]
        %v3819 = vld [vmem:[%s10 + $0x4] sm:$0xf]
        %v3820 = vld [vmem:[%s10 + $0x8] sm:$0xf]
        %v3821 = vld [vmem:[%s10 + $0xc] sm:$0xf]
        %v3822 = vld [vmem:[%s10 + $0x10] sm:$0xf]
        %v3823 = vld [vmem:[%s10 + $0x14] sm:$0xf]
        %v3824 = vld [vmem:[%s10 + $0x18] sm:$0xf]
        %v3825 = vld [vmem:[%s10 + $0x1c] sm:$0xf]
        %v3826 = vld [vmem:[%s10 + $0x20] sm:$0xf]
        %v3827 = vld [vmem:[%s10 + $0x24] sm:$0xf]
        %v3828 = vld [vmem:[%s10 + $0x28] sm:$0xf]
        %v3829 = vld [vmem:[%s10 + $0x2c] sm:$0xf]
        %v3830 = vld [vmem:[%s10 + $0x30] sm:$0xf]
        %v3831 = vld [vmem:[%s10 + $0x34] sm:$0xf]
        %v3832 = vld [vmem:[%s10 + $0x38] sm:$0xf]
        %v3833 = vld [vmem:[%s10 + $0x3c] sm:$0xf]
        %v3850 = vunpack.c.l.b16 %v3818
        %v3851 = vunpack.c.l.b16 %v3819
        %v3852 = vunpack.c.l.b16 %v3820
        %v3853 = vunpack.c.l.b16 %v3821
        %v3854 = vunpack.c.l.b16 %v3822
        %v3855 = vunpack.c.l.b16 %v3823
        %v3856 = vunpack.c.l.b16 %v3824
        %v3857 = vunpack.c.l.b16 %v3825
        %v3858 = vunpack.c.l.b16 %v3826
        %v3859 = vunpack.c.l.b16 %v3827
        %v3860 = vunpack.c.l.b16 %v3828
        %v3861 = vunpack.c.l.b16 %v3829
        %v3862 = vunpack.c.l.b16 %v3830
        %v3863 = vunpack.c.l.b16 %v3831
        %v3864 = vunpack.c.l.b16 %v3832
        %v3865 = vunpack.c.l.b16 %v3833
        %v3866 = vpack.c.b16 %v3851, %v3850
        %v3867 = vpack.c.b16 %v3853, %v3852
        %v3868 = vpack.c.b16 %v3855, %v3854
        %v3869 = vpack.c.b16 %v3857, %v3856
        %v3870 = vpack.c.b16 %v3859, %v3858
        %v3871 = vpack.c.b16 %v3861, %v3860
        %v3872 = vpack.c.b16 %v3863, %v3862
        %v3873 = vpack.c.b16 %v3865, %v3864
        %3882 = vmatprep.subr.bf16.mxu0 0
        %3883 = vmatpush1.bf16.msra.mxu0 %v3873
        %3884 = vmatprep.subr.bf16.mxu0 0
        %3885 = vmatpush1.bf16.msra.mxu0 %v3872
        %3886 = vmatprep.subr.bf16.mxu0 0
        %3887 = vmatpush1.bf16.msra.mxu0 %v3871
        %3888 = vmatprep.subr.bf16.mxu0 0
        %3889 = vmatpush1.bf16.msra.mxu0 %v3870
        %3890 = vmatprep.subr.bf16.mxu0 0
        %3891 = vmatpush1.bf16.msra.mxu0 %v3869
        %3892 = vmatprep.subr.bf16.mxu0 0
        %3893 = vmatpush1.bf16.msra.mxu0 %v3868
        %3894 = vmatprep.subr.bf16.mxu0 0
        %3895 = vmatpush1.bf16.msra.mxu0 %v3867
        %3896 = vmatprep.subr.bf16.mxu0 0
        %3897 = vmatpush1.bf16.msra.mxu0 %v3866
        %3898 = vmatprep.subr.bf16.mxu0 0
        %3899 = vmatpush2.bf16.msra.mxu0 0
        %3900 = vmatprep.subr.bf16.mxu0 0
        %3901 = vmatpush2.bf16.msra.mxu0 0
        %3902 = vmatprep.subr.bf16.mxu0 0
        %3903 = vmatpush2.bf16.msra.mxu0 0
        %3904 = vmatprep.subr.bf16.mxu0 0
        %3905 = vmatpush2.bf16.msra.mxu0 0
        %3906 = vmatprep.subr.bf16.mxu0 0
        %3907 = vmatpush2.bf16.msra.mxu0 0
        %3908 = vmatprep.subr.bf16.mxu0 0
        %3909 = vmatpush2.bf16.msra.mxu0 0
        %3910 = vmatprep.subr.bf16.mxu0 0
        %3911 = vmatpush2.bf16.msra.mxu0 0
        %3912 = vmatprep.subr.bf16.mxu0 0
        %3913 = vmatpush2.bf16.msra.mxu0 0
        %3914 = vmatprep.mubr.bf16.mxu0 0
        %3915 = vmatmul.mubr.bf16.gmra.mxu0 %v3810
        %v3916 = vpop.f32.mrf.mxu0
        %v3917 = vadd.f32 0.0, %v3916
        %v3918 = vpop.f32.mrf.mxu0
        %v3919 = vpop.f32.mrf.mxu0
        %v3920 = vadd.f32 0.0, %v3919
        %v3921 = vpop.f32.mrf.mxu0
        %3922 = vmatprep.mubr.bf16.mxu0 0
        %3923 = vmatmul.mubr.bf16.gmra.mxu0 %v3811
        %v3924 = vpop.f32.mrf.mxu0
        %v3925 = vadd.f32 0.0, %v3924
        %v3926 = vpop.f32.mrf.mxu0
        %v3927 = vpop.f32.mrf.mxu0
        %v3928 = vadd.f32 0.0, %v3927
        %v3929 = vpop.f32.mrf.mxu0
        %3930 = vmatprep.mubr.bf16.mxu0 0
        %3931 = vmatmul.mubr.bf16.gmra.mxu0 %v3812
        %v3932 = vpop.f32.mrf.mxu0
        %v3933 = vadd.f32 0.0, %v3932
        %v3934 = vpop.f32.mrf.mxu0
        %v3935 = vpop.f32.mrf.mxu0
        %v3936 = vadd.f32 0.0, %v3935
        %v3937 = vpop.f32.mrf.mxu0
        %3938 = vmatprep.mubr.bf16.mxu0 0
        %3939 = vmatmul.mubr.bf16.gmra.mxu0 %v3813
        %v3940 = vpop.f32.mrf.mxu0
        %v3941 = vadd.f32 0.0, %v3940
        %v3942 = vpop.f32.mrf.mxu0
        %v3943 = vpop.f32.mrf.mxu0
        %v3944 = vadd.f32 0.0, %v3943
        %v3945 = vpop.f32.mrf.mxu0
        %3946 = vmatprep.mubr.bf16.mxu0 0
        %3947 = vmatmul.mubr.bf16.gmra.mxu0 %v3814
        %v3948 = vpop.f32.mrf.mxu0
        %v3949 = vadd.f32 0.0, %v3948
        %v3950 = vpop.f32.mrf.mxu0
        %v3951 = vpop.f32.mrf.mxu0
        %v3952 = vadd.f32 0.0, %v3951
        %v3953 = vpop.f32.mrf.mxu0
        %3954 = vmatprep.mubr.bf16.mxu0 0
        %3955 = vmatmul.mubr.bf16.gmra.mxu0 %v3815
        %v3956 = vpop.f32.mrf.mxu0
        %v3957 = vadd.f32 0.0, %v3956
        %v3958 = vpop.f32.mrf.mxu0
        %v3959 = vpop.f32.mrf.mxu0
        %v3960 = vadd.f32 0.0, %v3959
        %v3961 = vpop.f32.mrf.mxu0
        %3962 = vmatprep.mubr.bf16.mxu0 0
        %3963 = vmatmul.mubr.bf16.gmra.mxu0 %v3816
        %v3964 = vpop.f32.mrf.mxu0
        %v3965 = vadd.f32 0.0, %v3964
        %v3966 = vpop.f32.mrf.mxu0
        %v3967 = vpop.f32.mrf.mxu0
        %v3968 = vadd.f32 0.0, %v3967
        %v3969 = vpop.f32.mrf.mxu0
        %3970 = vmatprep.mubr.bf16.mxu0 0
        %3971 = vmatmul.mubr.bf16.gmra.mxu0 %v3817
        %v3972 = vpop.f32.mrf.mxu0
        %v3973 = vadd.f32 0.0, %v3972
        %v3974 = vpop.f32.mrf.mxu0
        %v3975 = vpop.f32.mrf.mxu0
        %v3976 = vadd.f32 0.0, %v3975
        %v3977 = vpop.f32.mrf.mxu0
        %3978 = vdwg.mxu0
        %v3979 = vmul.f32 %v3917, 0.125
        %v3980 = vmul.f32 %v3920, 0.125
        %v3981 = vmul.f32 %v3925, 0.125
        %v3982 = vmul.f32 %v3928, 0.125
        %v3983 = vmul.f32 %v3933, 0.125
        %v3984 = vmul.f32 %v3936, 0.125
        %v3985 = vmul.f32 %v3941, 0.125
        %v3986 = vmul.f32 %v3944, 0.125
        %v3987 = vmul.f32 %v3949, 0.125
        %v3988 = vmul.f32 %v3952, 0.125
        %v3989 = vmul.f32 %v3957, 0.125
        %v3990 = vmul.f32 %v3960, 0.125
        %v3991 = vmul.f32 %v3965, 0.125
        %v3992 = vmul.f32 %v3968, 0.125
        %v3993 = vmul.f32 %v3973, 0.125
        %v3994 = vmul.f32 %v3976, 0.125
        %vm3995 = vcmp.eq.s32.totalorder %v1827, 127
        %v3996 = vsel %vm3995, 1.0, %v3979
        %v3997 = vsel %vm3995, 1.0, %v3980
        %v3998 = vsel %vm3995, 1.0, %v3981
        %v3999 = vsel %vm3995, 1.0, %v3982
        %v4000 = vsel %vm3995, 1.0, %v3983
        %v4001 = vsel %vm3995, 1.0, %v3984
        %v4002 = vsel %vm3995, 1.0, %v3985
        %v4003 = vsel %vm3995, 1.0, %v3986
        %v4004 = vsel %vm3995, 1.0, %v3987
        %v4005 = vsel %vm3995, 1.0, %v3988
        %v4006 = vsel %vm3995, 1.0, %v3989
        %v4007 = vsel %vm3995, 1.0, %v3990
        %v4008 = vsel %vm3995, 1.0, %v3991
        %v4009 = vsel %vm3995, 1.0, %v3992
        %v4010 = vsel %vm3995, 1.0, %v3993
        %v4011 = vsel %vm3995, 1.0, %v3994
        %v4012 = vld [vmem:[%s475] sm:$0xff]
        %v4013 = vld [vmem:[%s475 + $0x8] sm:$0xff]
        %v4014 = vld [vmem:[%s475 + $0x10] sm:$0xff]
        %v4015 = vld [vmem:[%s475 + $0x18] sm:$0xff]
        %v4016 = vld [vmem:[%s475 + $0x20] sm:$0xff]
        %v4017 = vld [vmem:[%s475 + $0x28] sm:$0xff]
        %v4018 = vld [vmem:[%s475 + $0x30] sm:$0xff]
        %v4019 = vld [vmem:[%s475 + $0x38] sm:$0xff]
        %v4020 = vld [vmem:[%s475 + $0x40] sm:$0xff]
        %v4021 = vld [vmem:[%s475 + $0x48] sm:$0xff]
        %v4022 = vld [vmem:[%s475 + $0x50] sm:$0xff]
        %v4023 = vld [vmem:[%s475 + $0x58] sm:$0xff]
        %v4024 = vld [vmem:[%s475 + $0x60] sm:$0xff]
        %v4025 = vld [vmem:[%s475 + $0x68] sm:$0xff]
        %v4026 = vld [vmem:[%s475 + $0x70] sm:$0xff]
        %v4027 = vld [vmem:[%s475 + $0x78] sm:$0xff]
        %4028 = vset.pattern.permute.xlu0 0
        %4029 = vperm.xlu0 %4028, %v4012
        %v4030 = vpop.permute.xlu0 %4029
        %4031 = vset.pattern.permute.xlu0 0
        %4032 = vperm.xlu0 %4031, %v4013
        %v4033 = vpop.permute.xlu0 %4032
        %4034 = vset.pattern.permute.xlu0 0
        %4035 = vperm.xlu0 %4034, %v4014
        %v4036 = vpop.permute.xlu0 %4035
        %4037 = vset.pattern.permute.xlu0 0
        %4038 = vperm.xlu0 %4037, %v4015
        %v4039 = vpop.permute.xlu0 %4038
        %4040 = vset.pattern.permute.xlu0 0
        %4041 = vperm.xlu0 %4040, %v4016
        %v4042 = vpop.permute.xlu0 %4041
        %4043 = vset.pattern.permute.xlu0 0
        %4044 = vperm.xlu0 %4043, %v4017
        %v4045 = vpop.permute.xlu0 %4044
        %4046 = vset.pattern.permute.xlu0 0
        %4047 = vperm.xlu0 %4046, %v4018
        %v4048 = vpop.permute.xlu0 %4047
        %4049 = vset.pattern.permute.xlu0 0
        %4050 = vperm.xlu0 %4049, %v4019
        %v4051 = vpop.permute.xlu0 %4050
        %4052 = vset.pattern.permute.xlu0 0
        %4053 = vperm.xlu0 %4052, %v4020
        %v4054 = vpop.permute.xlu0 %4053
        %4055 = vset.pattern.permute.xlu0 0
        %4056 = vperm.xlu0 %4055, %v4021
        %v4057 = vpop.permute.xlu0 %4056
        %4058 = vset.pattern.permute.xlu0 0
        %4059 = vperm.xlu0 %4058, %v4022
        %v4060 = vpop.permute.xlu0 %4059
        %4061 = vset.pattern.permute.xlu0 0
        %4062 = vperm.xlu0 %4061, %v4023
        %v4063 = vpop.permute.xlu0 %4062
        %4064 = vset.pattern.permute.xlu0 0
        %4065 = vperm.xlu0 %4064, %v4024
        %v4066 = vpop.permute.xlu0 %4065
        %4067 = vset.pattern.permute.xlu0 0
        %4068 = vperm.xlu0 %4067, %v4025
        %v4069 = vpop.permute.xlu0 %4068
        %4070 = vset.pattern.permute.xlu0 0
        %4071 = vperm.xlu0 %4070, %v4026
        %v4072 = vpop.permute.xlu0 %4071
        %4073 = vset.pattern.permute.xlu0 0
        %4074 = vperm.xlu0 %4073, %v4027
        %v4075 = vpop.permute.xlu0 %4074
        %vm4076 = vcmp.eq.s32.totalorder %v1827, %v4030
        %vm4077 = vcmp.eq.s32.totalorder %v1827, %v4033
        %vm4078 = vcmp.eq.s32.totalorder %v1827, %v4036
        %vm4079 = vcmp.eq.s32.totalorder %v1827, %v4039
        %vm4080 = vcmp.eq.s32.totalorder %v1827, %v4042
        %vm4081 = vcmp.eq.s32.totalorder %v1827, %v4045
        %vm4082 = vcmp.eq.s32.totalorder %v1827, %v4048
        %vm4083 = vcmp.eq.s32.totalorder %v1827, %v4051
        %vm4084 = vcmp.eq.s32.totalorder %v1827, %v4054
        %vm4085 = vcmp.eq.s32.totalorder %v1827, %v4057
        %vm4086 = vcmp.eq.s32.totalorder %v1827, %v4060
        %vm4087 = vcmp.eq.s32.totalorder %v1827, %v4063
        %vm4088 = vcmp.eq.s32.totalorder %v1827, %v4066
        %vm4089 = vcmp.eq.s32.totalorder %v1827, %v4069
        %vm4090 = vcmp.eq.s32.totalorder %v1827, %v4072
        %vm4091 = vcmp.eq.s32.totalorder %v1827, %v4075
        %v4092 = vsel %vm4076, 1, 0
        %v4093 = vsel %vm4077, 1, 0
        %v4094 = vsel %vm4078, 1, 0
        %v4095 = vsel %vm4079, 1, 0
        %v4096 = vsel %vm4080, 1, 0
        %v4097 = vsel %vm4081, 1, 0
        %v4098 = vsel %vm4082, 1, 0
        %v4099 = vsel %vm4083, 1, 0
        %v4100 = vsel %vm4084, 1, 0
        %v4101 = vsel %vm4085, 1, 0
        %v4102 = vsel %vm4086, 1, 0
        %v4103 = vsel %vm4087, 1, 0
        %v4104 = vsel %vm4088, 1, 0
        %v4105 = vsel %vm4089, 1, 0
        %v4106 = vsel %vm4090, 1, 0
        %v4107 = vsel %vm4091, 1, 0
        %v4108 = vcvt.s32.f32 %v4092
        %v4109 = vcvt.s32.f32 %v4093
        %v4110 = vcvt.s32.f32 %v4094
        %v4111 = vcvt.s32.f32 %v4095
        %v4112 = vcvt.s32.f32 %v4096
        %v4113 = vcvt.s32.f32 %v4097
        %v4114 = vcvt.s32.f32 %v4098
        %v4115 = vcvt.s32.f32 %v4099
        %v4116 = vcvt.s32.f32 %v4100
        %v4117 = vcvt.s32.f32 %v4101
        %v4118 = vcvt.s32.f32 %v4102
        %v4119 = vcvt.s32.f32 %v4103
        %v4120 = vcvt.s32.f32 %v4104
        %v4121 = vcvt.s32.f32 %v4105
        %v4122 = vcvt.s32.f32 %v4106
        %v4123 = vcvt.s32.f32 %v4107
        %v4124 = vpack.c.bf16 %v4109, %v4108
        %v4125 = vpack.c.bf16 %v4111, %v4110
        %v4126 = vpack.c.bf16 %v4113, %v4112
        %v4127 = vpack.c.bf16 %v4115, %v4114
        %v4128 = vpack.c.bf16 %v4117, %v4116
        %v4129 = vpack.c.bf16 %v4119, %v4118
        %v4130 = vpack.c.bf16 %v4121, %v4120
        %v4131 = vpack.c.bf16 %v4123, %v4122
        %v4132 = vld [vmem:[#allocation2] sm:$0xff]
        %v4133 = vpack.c.bf16 %v3997, %v3996
        %v4134 = vpack.c.bf16 %v3999, %v3998
        %v4135 = vpack.c.bf16 %v4001, %v4000
        %v4136 = vpack.c.bf16 %v4003, %v4002
        %v4137 = vpack.c.bf16 %v4005, %v4004
        %v4138 = vpack.c.bf16 %v4007, %v4006
        %v4139 = vpack.c.bf16 %v4009, %v4008
        %v4140 = vpack.c.bf16 %v4011, %v4010
        %4141 = vxpose.xlu0.c.b16.start [1/8] %v4124, 128
        %4142 = vxpose.xlu0.c.b16.cont [2/8] %v4125, 128
        %4143 = vxpose.xlu0.c.b16.cont [3/8] %v4126, 128
        %4144 = vxpose.xlu0.c.b16.cont [4/8] %v4127, 128
        %4145 = vxpose.xlu0.c.b16.cont [5/8] %v4128, 128
        %4146 = vxpose.xlu0.c.b16.cont [6/8] %v4129, 128
        %4147 = vxpose.xlu0.c.b16.cont [7/8] %v4130, 128
        %4148 = vxpose.xlu0.c.b16.end [8/8] %v4131, 128
        %v4149 = vpop.trf.xlu0
        %v4150 = vpop.trf.xlu0
        %v4151 = vpop.trf.xlu0
        %v4152 = vpop.trf.xlu0
        %v4153 = vpop.trf.xlu0
        %v4154 = vpop.trf.xlu0
        %v4155 = vpop.trf.xlu0
        %v4156 = vpop.trf.xlu0
        %4157 = vmatprep.subr.bf16.mxu0 0
        %4158 = vmatpush1.bf16.msra.mxu0 %v4140
        %4159 = vmatprep.subr.bf16.mxu0 0
        %4160 = vmatpush1.bf16.msra.mxu0 %v4139
        %4161 = vmatprep.subr.bf16.mxu0 0
        %4162 = vmatpush1.bf16.msra.mxu0 %v4138
        %4163 = vmatprep.subr.bf16.mxu0 0
        %4164 = vmatpush1.bf16.msra.mxu0 %v4137
        %4165 = vmatprep.subr.bf16.mxu0 0
        %4166 = vmatpush1.bf16.msra.mxu0 %v4136
        %4167 = vmatprep.subr.bf16.mxu0 0
        %4168 = vmatpush1.bf16.msra.mxu0 %v4135
        %4169 = vmatprep.subr.bf16.mxu0 0
        %4170 = vmatpush1.bf16.msra.mxu0 %v4134
        %4171 = vmatprep.subr.bf16.mxu0 0
        %4172 = vmatpush1.bf16.msra.mxu0 %v4133
        %4173 = vmatprep.subr.bf16.mxu0 0
        %4174 = vmatpush2.bf16.msra.mxu0 0
        %4175 = vmatprep.subr.bf16.mxu0 0
        %4176 = vmatpush2.bf16.msra.mxu0 0
        %4177 = vmatprep.subr.bf16.mxu0 0
        %4178 = vmatpush2.bf16.msra.mxu0 0
        %4179 = vmatprep.subr.bf16.mxu0 0
        %4180 = vmatpush2.bf16.msra.mxu0 0
        %4181 = vmatprep.subr.bf16.mxu0 0
        %4182 = vmatpush2.bf16.msra.mxu0 0
        %4183 = vmatprep.subr.bf16.mxu0 0
        %4184 = vmatpush2.bf16.msra.mxu0 0
        %4185 = vmatprep.subr.bf16.mxu0 0
        %4186 = vmatpush2.bf16.msra.mxu0 0
        %4187 = vmatprep.subr.bf16.mxu0 0
        %4188 = vmatpush2.bf16.msra.mxu0 0
        %4189 = vmatprep.mubr.bf16.mxu0 0
        %4190 = vmatmul.mubr.bf16.gmra.mxu0 %v4149
        %v4191 = vpop.f32.mrf.mxu0
        %v4192 = vadd.f32 0.0, %v4191
        %v4193 = vpop.f32.mrf.mxu0
        %v4194 = vpop.f32.mrf.mxu0
        %v4195 = vpop.f32.mrf.mxu0
        %4196 = vdwg.mxu0
        %v4197 = vadd.f32 %v4132, %v4192
        %4198 = vst [vmem:[#allocation2] sm:$0xff] %v4197
        %p4199 = scmp.eq.s32.totalorder %s25, 2
        // Predicated region
        $region77: #{tpu_custom_call.1} parent=71 // pred_check
          %p4200 = pneg %p4199
        $region78: #{tpu_custom_call.1} parent=71 // pred_check_branch
          %4202 = sbr.rel (%p4200) target = $region80
        $region79: #{tpu_custom_call.1} parent=71 // pred_region
          %v4203 = vld [vmem:[#allocation2] sm:$0xff]
          %v4204 = vmax.f32 %v4203, 1.0
          %v4205 = vrcp.pop %v4204
          %4207 = vset.pattern.permute.xlu0 127
          %4208 = vperm.xlu0 %4207, %v4205
          %v4209 = vpop.permute.xlu0 %4208
          %v4211 = vmul.f32 %v4203, %v4209
          %v4212 = vld [vmem:[%s4] sm:$0xf]
          %v4213 = vunpack.c.l.bf16 %v4212
          %v4214 = vadd.f32 %v4211, %v4213
          %v4215 = vrot.slane %v4214, 4
          %v4216 = vadd.f32 %v4214, %v4215
          %v4217 = vrot.slane %v4216, 2
          %v4218 = vadd.f32 %v4216, %v4217
          %v4219 = vrot.slane %v4218, 1
          %v4220 = vadd.f32 %v4218, %v4219
          %v4221 = vrcp.pop 8.0
          %v4222 = vmul.f32 %v4220, %v4221
          %v4223 = vsub.f32 %v4214, %v4222
          %v4224 = vmul.f32 %v4223, %v4223
          %v4225 = vrot.slane %v4224, 4
          %v4226 = vadd.f32 %v4224, %v4225
          %v4227 = vrot.slane %v4226, 2
          %v4228 = vadd.f32 %v4226, %v4227
          %v4229 = vrot.slane %v4228, 1
          %v4230 = vadd.f32 %v4228, %v4229
          %v4231 = vmul.f32 %v4230, %v4221
          %v4232 = vadd.f32 %v4231, 1e-05
          %v4233 = vrsqrt.pop %v4232
          %v4234 = vmul.f32 %v4223, %v4233
          %v4235 = vld [vmem:[%s11] sm:$0x1]
          %v4237 = vlaneseq
          %v4238 = vshrl.u32 %v4237, 7
          %v4239 = vsub.s32 0, %v4238
          %v4240 = vrot.slane %v4235, %v4239
          %v4242 = vmul.f32 %v4234, %v4240
          %v4243 = vld [vmem:[%s12] sm:$0x1]
          %v4245 = vlaneseq
          %v4246 = vshrl.u32 %v4245, 7
          %v4247 = vsub.s32 0, %v4246
          %v4248 = vrot.slane %v4243, %v4247
          %v4250 = vadd.f32 %v4242, %v4248
          %4251 = vst [vmem:[#allocation2] sm:$0xff] %v4250
        $region80: #{tpu_custom_call.1} parent=71 // pred_fallthru
          _
        // Predicated region
        $region81: #{tpu_custom_call.1} parent=71 // pred_check
          %p4252 = pneg %p331
        $region82: #{tpu_custom_call.1} parent=71 // pred_check_branch
          %4254 = sbr.rel (%p4252) target = $region84
        $region83: #{tpu_custom_call.1} parent=71 // pred_region
          %s4256 = ssub.s32 128, 128
          %4257 = vsyncadd [#allocation3], %s4256
          %s4259 = sshll.u32 [#allocation2], 4
          %s4260 = int_to_ptr.vmem [resolvable:$true] %s4259
          %4262 = dma.vmem_to_hbm [thread:$0]  %s4260, 128, %s13, [#allocation3]
        $region84: #{tpu_custom_call.1} parent=71 // pred_fallthru
          _
        // Predicated region
        $region85: #{tpu_custom_call.1} parent=71 // pred_check
          %p4263 = pneg %p331
        $region86: #{tpu_custom_call.1} parent=71 // pred_check_branch
          %4265 = sbr.rel (%p4263) target = $region88
        $region87: #{tpu_custom_call.1} parent=71 // pred_region
          %4266 = dma.done [#allocation3], 128
        $region88: #{tpu_custom_call.1} parent=71 // pred_fallthru
          _
      $region72: #{tpu_custom_call.1} parent=5 // pred_fallthru
        _
      %p4267 = scmp.le.s32.totalorder 2, %s20
      // Predicated region
      $region89: #{tpu_custom_call.1} parent=5 // pred_check
        %p4268 = pneg %p4267
      $region90: #{tpu_custom_call.1} parent=5 // pred_check_branch
        %4270 = sbr.rel (%p4268) target = $region92
      $region91: #{tpu_custom_call.1} parent=5 // pred_region
        %s4271 = ssub.s32 %s20, 2
      $region92: #{tpu_custom_call.1} parent=5 // pred_fallthru
        _
    $region6: #{tpu_custom_call.1} parent=1 // loop_footer
      %s24 = sadd.s32 1, %s20
    $region7: #{tpu_custom_call.1} parent=1 // loop_footer_branch
      %19 = sbr.rel target = $region3
    $region8: #{tpu_custom_call.1} parent=1 // loop_exit
      _
    %4272 = vsyncpa [#allocation3], 1
    %s4273 = scalar_lea.sflag [#allocation3], 1
    %4274 = vsyncpa %s4273, 1

</llo_original>
